<compile_context>
chip_gen: v5e
topology: v5e:2x2
jax: 0.10.0
libtpu: 0.0.40
codegen_flags: <defaults>
</compile_context>

<pallas_src>
import functools

import jax
import jax.numpy as jnp
from jax import lax
from jax.experimental import pallas as pl
from jax.experimental.pallas import tpu as pltpu

_LN_EPS = 1e-5


# --------------------------------------------------------------------------
# In-kernel math helpers (mul/add/div/rsqrt/exp only -> safe Mosaic lowering)
# --------------------------------------------------------------------------
def _erf_f32(x):
    # Eigen/XLA single-precision erf rational approximation.  Clipped to
    # [-4, 4]; outside that range erf is saturated so GELU error < 1e-6.
    x = jnp.clip(x, -4.0, 4.0)
    x2 = x * x
    p = jnp.float32(-2.72614225801306e-10)
    p = p * x2 + jnp.float32(2.77068142495902e-08)
    p = p * x2 + jnp.float32(-2.10102402082508e-06)
    p = p * x2 + jnp.float32(-5.69250639462346e-05)
    p = p * x2 + jnp.float32(-7.34990630326855e-04)
    p = p * x2 + jnp.float32(-2.95459980854025e-03)
    p = p * x2 + jnp.float32(-1.60960333262415e-02)
    p = p * x
    q = jnp.float32(-1.45660718464996e-05)
    q = q * x2 + jnp.float32(-2.13374055278905e-04)
    q = q * x2 + jnp.float32(-1.68282697438203e-03)
    q = q * x2 + jnp.float32(-7.37332916720468e-03)
    q = q * x2 + jnp.float32(-1.42647390514189e-02)
    return p / q


def _gelu(x):
    # Exact (erf-based) GELU == torch.nn.GELU() default.
    return 0.5 * x * (1.0 + _erf_f32(x * jnp.float32(0.7071067811865476)))


def _layernorm(x, gamma, beta):
    mu = jnp.mean(x, axis=-1, keepdims=True)
    var = jnp.mean(jnp.square(x - mu), axis=-1, keepdims=True)
    return (x - mu) * lax.rsqrt(var + _LN_EPS) * gamma + beta


# --------------------------------------------------------------------------
# Fused kernel: tube matmul+max -> pos-embed+ReLU -> transformer (depth
# unrolled in-kernel) -> seq-max + mlp_head.        grid = (B,).
# --------------------------------------------------------------------------
def _fused_kernel(tube_ref, xyzt_ref, wtube_ref, wpos_ref, bpos_ref,
                  g1_ref, be1_ref, wqkv_ref, wo_ref, bo_ref,
                  g2_ref, be2_ref, w1_ref, b1_ref, w2_ref, b2_ref,
                  hg_ref, hb_ref, hw1_ref, hb1_ref, hw2_ref, hb2_ref,
                  logits_ref, xyzts_out_ref, feats_out_ref,
                  *, depth, heads, dim_head, group_size, seq_len):
    bf16 = jnp.bfloat16
    inner = heads * dim_head

    # ---- tube embedding: one lane-dense matmul + static max over tk*k groups ----
    y = jnp.dot(tube_ref[...], wtube_ref[...],
                preferred_element_type=jnp.float32)                  # (G*S, D)
    feat = y[0:seq_len]
    for g in range(1, group_size):
        feat = jnp.maximum(feat, y[g * seq_len:(g + 1) * seq_len])   # (S, D)

    # ---- positional embedding (Conv1d 4->D, k=1) + add tube feats + ReLU ----
    xe = (jnp.dot(xyzt_ref[...], wpos_ref[...],
                  preferred_element_type=jnp.float32) + bpos_ref[...])
    xyzts_out_ref[...] = xe                                          # pos-embedded xyzts
    feats_out_ref[...] = feat                                        # tube features
    x = jnp.maximum(xe + feat, 0.0)                                  # emb_relu, (S, D)

    scale = jnp.float32(dim_head ** -0.5)

    # ---- transformer: depth statically unrolled, all weights VMEM-resident ----
    for d in range(depth):
        h = _layernorm(x, g1_ref[d], be1_ref[d])
        qkv = jnp.dot(h.astype(bf16), wqkv_ref[d],
                      preferred_element_type=jnp.float32)            # (S, 3*inner)
        head_outs = []
        for hd in range(heads):                                      # static unroll
            q = qkv[:, hd * dim_head:(hd + 1) * dim_head]
            k = qkv[:, inner + hd * dim_head:inner + (hd + 1) * dim_head]
            v = qkv[:, 2 * inner + hd * dim_head:2 * inner + (hd + 1) * dim_head]
            dots = jnp.einsum("sd,td->st", q.astype(bf16), k.astype(bf16),
                              preferred_element_type=jnp.float32) * scale
            dots = dots - jnp.max(dots, axis=-1, keepdims=True)
            e = jnp.exp(dots)
            attn = e * pl.reciprocal(jnp.sum(e, axis=-1, keepdims=True),
                                     approx=True)
            head_outs.append(jnp.dot(attn.astype(bf16), v.astype(bf16),
                                     preferred_element_type=jnp.float32))
        ho = jnp.concatenate(head_outs, axis=-1)                     # (S, inner)
        x = (jnp.dot(ho.astype(bf16), wo_ref[d],
                     preferred_element_type=jnp.float32) + bo_ref[d]) + x

        h2 = _layernorm(x, g2_ref[d], be2_ref[d])
        h2 = (jnp.dot(h2.astype(bf16), w1_ref[d],
                      preferred_element_type=jnp.float32) + b1_ref[d])
        h2 = _gelu(h2)
        x = (jnp.dot(h2.astype(bf16), w2_ref[d],
                     preferred_element_type=jnp.float32) + b2_ref[d]) + x

    # ---- sequence max + mlp_head (LN -> Linear -> GELU -> Linear, 128-lane out) ----
    m = jnp.max(x, axis=0, keepdims=True)                            # (1, D)
    hh = _layernorm(m, hg_ref[...], hb_ref[...])
    hh = (jnp.dot(hh.astype(bf16), hw1_ref[...],
                  preferred_element_type=jnp.float32) + hb1_ref[...])
    hh = _gelu(hh)
    logits_ref[...] = (jnp.dot(hh.astype(bf16), hw2_ref[...],
                               preferred_element_type=jnp.float32) + hb2_ref[...])


def fused_forward(tube_rows, xyzts_raw, params, cfg):
    """tube_rows: (B, G*S, 8)  xyzts_raw: (B, S, 4) -> (logits, xyzts_emb, feats)."""
    B, GS, cpack = tube_rows.shape
    S = xyzts_raw.shape[1]
    G = GS // S
    D, heads, dh = cfg["dim"], cfg["heads"], cfg["dim_head"]
    depth, H, C = cfg["depth"], cfg["mlp_dim"], cfg["num_classes"]
    inner = heads * dh
    C_pad = max(128, -(-C // 128) * 128)          # lane-dense logits store

    # Stack per-layer params over depth; keep lane-dense (D, 3*inner)/(inner, D).
    lp = {k: jnp.stack([l[k] for l in params["layers"]], axis=0)
          for k in params["layers"][0]}
    hp = params["head"]
    bf = lambda a: a.astype(jnp.bfloat16)
    hw2_pad = bf(jnp.pad(hp["w2"], ((0, 0), (0, C_pad - C))))
    hb2_pad = jnp.pad(hp["b2"], ((0, 0), (0, C_pad - C)))

    kernel = functools.partial(_fused_kernel, depth=depth, heads=heads,
                               dim_head=dh, group_size=G, seq_len=S)
    rep = lambda shape: pl.BlockSpec(shape, lambda b, _n=len(shape): (0,) * _n)
    per_b = lambda shape: pl.BlockSpec((None,) + shape, lambda b: (b, 0, 0))

    logits, xyzts_emb, feats = pl.pallas_call(
        kernel,
        out_shape=(jax.ShapeDtypeStruct((B, 1, C_pad), jnp.float32),
                   jax.ShapeDtypeStruct((B, S, D), jnp.float32),
                   jax.ShapeDtypeStruct((B, S, D), jnp.float32)),
        grid=(B,),
        in_specs=[
            per_b((GS, cpack)),                                 # tube rows
            per_b((S, 4)),                                      # xyzt anchors
            rep((cpack, D)), rep((4, D)), rep((1, D)),          # w_tube, w_pos, b_pos
            rep((depth, 1, D)), rep((depth, 1, D)),             # ln1 g/b
            rep((depth, D, 3 * inner)),                         # wqkv (lane-dense)
            rep((depth, inner, D)), rep((depth, 1, D)),         # wo, bo
            rep((depth, 1, D)), rep((depth, 1, D)),             # ln2 g/b
            rep((depth, D, H)), rep((depth, 1, H)),             # ff w1, b1
            rep((depth, H, D)), rep((depth, 1, D)),             # ff w2, b2
            rep((1, D)), rep((1, D)),                           # head ln g/b
            rep((D, H)), rep((1, H)),                           # head mlp w1, b1
            rep((H, C_pad)), rep((1, C_pad)),                   # head mlp w2, b2 (padded)
        ],
        out_specs=(per_b((1, C_pad)), per_b((S, D)), per_b((S, D))),
        compiler_params=pltpu.CompilerParams(
            dimension_semantics=("parallel",)),
    )(bf(tube_rows), bf(xyzts_raw), bf(params["w_tube"]), bf(params["w_pos"]),
      params["b_pos"],
      lp["ln1_g"], lp["ln1_b"], bf(lp["wqkv"]), bf(lp["wo"]), lp["bo"],
      lp["ln2_g"], lp["ln2_b"], bf(lp["w1"]), lp["b1"], bf(lp["w2"]), lp["b2"],
      hp["ln_g"], hp["ln_b"], bf(hp["w1"]), hp["b1"], hw2_pad, hb2_pad)
    return logits[:, 0, :C], xyzts_emb, feats


# --------------------------------------------------------------------------
# Plain-JAX glue: FPS / ball-query / grouping (data-dependent gathers)
# --------------------------------------------------------------------------
def farthest_point_sample(xyz, m):
    # xyz: (B, N, 3) -> (B, m) int32 (pointnet2 semantics: start at index 0,
    # points with |p|^2 <= 1e-3 are skipped).
    B, N, _ = xyz.shape
    valid = jnp.sum(xyz * xyz, axis=-1) > 1e-3

    def body(j, state):
        temp, old, idxs = state
        idxs = idxs.at[:, j].set(old)
        centroid = jax.vmap(lambda f, o: f[o])(xyz, old)          # (B, 3)
        d = jnp.sum(jnp.square(xyz - centroid[:, None, :]), axis=-1)
        temp = jnp.where(valid, jnp.minimum(temp, d), temp)
        cand = jnp.where(valid, temp, -jnp.inf)
        old = jnp.argmax(cand, axis=-1).astype(jnp.int32)
        return temp, old, idxs

    temp = jnp.full((B, N), 1e10, dtype=jnp.float32)
    old = jnp.zeros((B,), jnp.int32)
    idxs = jnp.zeros((B, m), jnp.int32)
    _, _, idxs = lax.fori_loop(0, m, body, (temp, old, idxs))
    return idxs


def ball_query(radius, nsample, xyz, new_xyz):
    # xyz: (B, N, 3) candidates; new_xyz: (B, M, 3) anchors -> (B, M, nsample).
    # pointnet2 semantics: first nsample in-radius indices (in order); empty
    # slots take the first in-radius index; all zeros if none in radius.
    d2 = jnp.sum(jnp.square(new_xyz[:, :, None, :] - xyz[:, None, :, :]), axis=-1)
    mask = d2 < radius * radius
    csum = jnp.cumsum(mask.astype(jnp.int32), axis=-1)
    rank = csum - 1
    first_idx = jnp.argmax(mask, axis=-1).astype(jnp.int32)
    slots = jnp.arange(nsample, dtype=jnp.int32)
    match = mask[:, :, None, :] & (rank[:, :, None, :] == slots[None, None, :, None])
    slot_idx = jnp.argmax(match, axis=-1).astype(jnp.int32)
    has = jnp.any(match, axis=-1)
    return jnp.where(has, slot_idx, first_idx[:, :, None])


def group_points(points, idx):
    # points: (B, N, C), idx: (B, M, K) -> (B, M, K, C)
    return jax.vmap(lambda p, i: p[i])(points, idx)


def tube_preprocess(xyzs, feats, cfg):
    """Build grouped tube rows (B, G*S, 8) and raw xyzt anchors (B, S, 4)."""
    B, T, N, _ = xyzs.shape
    cin = feats.shape[2]
    radius, k = cfg["radius"], cfg["nsamples"]
    tk, tstride, sstride = (cfg["temporal_kernel_size"], cfg["temporal_stride"],
                            cfg["spatial_stride"])
    tr = tk // 2
    assert tk % 2 == 1 and (T + 1 - tk) % tstride == 0 and 4 + cin <= 8

    # temporal padding [1, 0], replicate mode
    xyzs_p = jnp.concatenate([xyzs[:, :1], xyzs], axis=1)          # (B, T+1, N, 3)
    feats_p = jnp.concatenate([feats[:, :1], feats], axis=1)       # (B, T+1, Cin, N)
    feats_p = jnp.transpose(feats_p, (0, 1, 3, 2))                 # channels-last
    n_anchor = N // sstride

    ts = jnp.arange(tr, (T + 1) - tr, tstride, dtype=jnp.int32)    # anchor frames
    L = int(ts.shape[0])
    offs = jnp.arange(-tr, tr + 1, dtype=jnp.int32)                # window offsets

    # FPS over all (B, L) anchor frames at once
    anchor_frames = xyzs_p[:, ts].reshape(B * L, N, 3)
    fps_idx = farthest_point_sample(anchor_frames, n_anchor)       # (B*L, n)
    anchors = jnp.take_along_axis(anchor_frames, fps_idx[..., None], axis=1)
    new_xyzs = anchors.reshape(B, L, n_anchor, 3)

    # ball-query + gather over all (B, L, tk) window frames at once
    win_t = ts[:, None] + offs[None, :]                            # (L, tk)
    win_xyz = xyzs_p[:, win_t].reshape(B * L * tk, N, 3)
    win_feat = feats_p[:, win_t].reshape(B * L * tk, N, cin)
    anc_rep = jnp.broadcast_to(new_xyzs[:, :, None],
                               (B, L, tk, n_anchor, 3)).reshape(B * L * tk, n_anchor, 3)

    idx = ball_query(radius, k, win_xyz, anc_rep)                  # (B*L*tk, n, k)
    g_xyz = group_points(win_xyz, idx)                             # (B*L*tk, n, k, 3)
    g_feat = group_points(win_feat, idx)                           # (B*L*tk, n, k, cin)
    disp = (g_xyz - anc_rep[:, :, None, :]).reshape(B, L, tk, n_anchor, k, 3)
    g_feat = g_feat.reshape(B, L, tk, n_anchor, k, cin)
    dt = jnp.broadcast_to(offs.astype(jnp.float32)[None, None, :, None, None, None],
                          (B, L, tk, n_anchor, k, 1))
    pad = jnp.zeros((B, L, tk, n_anchor, k, 8 - 4 - cin), jnp.float32)
    rows = jnp.concatenate([disp, dt, g_feat, pad], axis=-1)       # (B, L, tk, n, k, 8)
    # -> (B, tk, k, L, n, 8) -> (B, G*S, 8); row index = g*S + s with
    # g = (tk_i, k_j) and s = (l, n_i)  (matches the anchor/sequence ordering).
    tube_rows = jnp.transpose(rows, (0, 2, 4, 1, 3, 5)).reshape(
        B, tk * k * L * n_anchor, 8)

    # xyzs_to_xyzts: append time channel (t + 1)
    tchan = jnp.broadcast_to(
        jnp.arange(1, L + 1, dtype=jnp.float32)[None, :, None, None],
        (B, L, n_anchor, 1))
    xyzts_raw = jnp.concatenate([new_xyzs, tchan], axis=-1).reshape(B, L * n_anchor, 4)
    return tube_rows, xyzts_raw


# --------------------------------------------------------------------------
# Full forward (mirrors RadarP4Transformer.forward)
# --------------------------------------------------------------------------
def radar_p4_forward(params, xyzs, old_features, cfg):
    tube_rows, xyzts_raw = tube_preprocess(xyzs, old_features, cfg)
    logits, xyzts_emb, feats = fused_forward(tube_rows, xyzts_raw, params, cfg)
    return logits, xyzts_emb, feats


def init_params(key, cfg):
    dim, heads, dh = cfg["dim"], cfg["heads"], cfg["dim_head"]
    inner, mlp_dim, nc, cin = heads * dh, cfg["mlp_dim"], cfg["num_classes"], cfg["in_planes"]
    ks = iter(jax.random.split(key, 64))

    def nrm(shape, scale=0.1):
        return (scale * jax.random.normal(next(ks), shape)).astype(jnp.float32)

    # conv_d (4->dim) and conv_f (cin->dim), bias-free 1x1 convs, stacked +
    # zero-padded along the input-channel axis to 8 lanes.
    w_tube = jnp.concatenate(
        [nrm((4, dim)), nrm((cin, dim)), jnp.zeros((8 - 4 - cin, dim), jnp.float32)], axis=0)
    params = {
        "w_tube": w_tube,
        "w_pos": nrm((4, dim)), "b_pos": nrm((1, dim)),
        "layers": [],
        "head": {"ln_g": jnp.ones((1, dim), jnp.float32),
                 "ln_b": jnp.zeros((1, dim), jnp.float32),
                 "w1": nrm((dim, mlp_dim)), "b1": nrm((1, mlp_dim)),
                 "w2": nrm((mlp_dim, nc)), "b2": nrm((1, nc))},
    }
    for _ in range(cfg["depth"]):
        params["layers"].append({
            "ln1_g": jnp.ones((1, dim), jnp.float32),
            "ln1_b": jnp.zeros((1, dim), jnp.float32),
            "wqkv": nrm((dim, 3 * inner)),
            "wo": nrm((inner, dim)), "bo": nrm((1, dim)),
            "ln2_g": jnp.ones((1, dim), jnp.float32),
            "ln2_b": jnp.zeros((1, dim), jnp.float32),
            "w1": nrm((dim, mlp_dim)), "b1": nrm((1, mlp_dim)),
            "w2": nrm((mlp_dim, dim)), "b2": nrm((1, dim)),
        })
    return params


CFG = dict(radius=1.2, nsamples=4, spatial_stride=2, temporal_kernel_size=3,
           temporal_stride=2, emb_relu=True, dim=32, depth=2, heads=2,
           dim_head=16, mlp_dim=64, num_classes=5, in_planes=2)


if __name__ == "__main__":
    key = jax.random.PRNGKey(0)
    kp, kx, kf = jax.random.split(key, 3)
    B, T, N = 2, 8, 16
    xyzs = jax.random.normal(kx, (B, T, N, 3), jnp.float32)
    old_features = jax.random.normal(kf, (B, T, CFG["in_planes"], N), jnp.float32)
    params = init_params(kp, CFG)

    fwd = jax.jit(lambda p, a, b: radar_p4_forward(p, a, b, CFG))
    logits, xyzts, features = fwd(params, xyzs, old_features)
    jax.block_until_ready((logits, xyzts, features))

    L = len(range(1, T + 1 - 1, CFG["temporal_stride"]))
    S = L * (N // CFG["spatial_stride"])
    assert logits.shape == (B, CFG["num_classes"])
    assert xyzts.shape == (B, S, CFG["dim"])
    assert features.shape == (B, S, CFG["dim"])
    assert bool(jnp.all(jnp.isfinite(logits)))
    assert bool(jnp.all(jnp.isfinite(xyzts)))
    assert bool(jnp.all(jnp.isfinite(features)))
    print("KERNEL_OK")
</pallas_src>

<mosaic_0001>
module attributes {stable_mosaic.version = 11 : i64} {
  func.func @_fused_kernel(%arg0: i32, %arg1: memref<1x384x8xbf16, #tpu.memory_space<vmem>>, %arg2: memref<1x32x4xbf16, #tpu.memory_space<vmem>>, %arg3: memref<8x32xbf16, #tpu.memory_space<vmem>>, %arg4: memref<4x32xbf16, #tpu.memory_space<vmem>>, %arg5: memref<1x32xf32, #tpu.memory_space<vmem>>, %arg6: memref<2x1x32xf32, #tpu.memory_space<vmem>>, %arg7: memref<2x1x32xf32, #tpu.memory_space<vmem>>, %arg8: memref<2x32x96xbf16, #tpu.memory_space<vmem>>, %arg9: memref<2x32x32xbf16, #tpu.memory_space<vmem>>, %arg10: memref<2x1x32xf32, #tpu.memory_space<vmem>>, %arg11: memref<2x1x32xf32, #tpu.memory_space<vmem>>, %arg12: memref<2x1x32xf32, #tpu.memory_space<vmem>>, %arg13: memref<2x32x64xbf16, #tpu.memory_space<vmem>>, %arg14: memref<2x1x64xf32, #tpu.memory_space<vmem>>, %arg15: memref<2x64x32xbf16, #tpu.memory_space<vmem>>, %arg16: memref<2x1x32xf32, #tpu.memory_space<vmem>>, %arg17: memref<1x32xf32, #tpu.memory_space<vmem>>, %arg18: memref<1x32xf32, #tpu.memory_space<vmem>>, %arg19: memref<32x64xbf16, #tpu.memory_space<vmem>>, %arg20: memref<1x64xf32, #tpu.memory_space<vmem>>, %arg21: memref<64x128xbf16, #tpu.memory_space<vmem>>, %arg22: memref<1x128xf32, #tpu.memory_space<vmem>>, %arg23: memref<1x1x128xf32, #tpu.memory_space<vmem>>, %arg24: memref<1x32x32xf32, #tpu.memory_space<vmem>>, %arg25: memref<1x32x32xf32, #tpu.memory_space<vmem>>) attributes {dimension_semantics = [#tpu.dimension_semantics<parallel>], iteration_bounds = array<i64: 2>, scalar_prefetch = 0 : i64, scratch_operands = 0 : i64, tpu.core_type = #tpu.core_type<tc>, window_params = [{transform_indices = @transform_0, window_bounds = array<i64: 1, 384, 8>}, {transform_indices = @transform_1, window_bounds = array<i64: 1, 32, 4>}, {pipeline_mode = #tpu.pipeline_mode<synchronous>, transform_indices = @transform_2, window_bounds = array<i64: 8, 32>}, {pipeline_mode = #tpu.pipeline_mode<synchronous>, transform_indices = @transform_3, window_bounds = array<i64: 4, 32>}, {pipeline_mode = #tpu.pipeline_mode<synchronous>, transform_indices = @transform_4, window_bounds = array<i64: 1, 32>}, {pipeline_mode = #tpu.pipeline_mode<synchronous>, transform_indices = @transform_5, window_bounds = array<i64: 2, 1, 32>}, {pipeline_mode = #tpu.pipeline_mode<synchronous>, transform_indices = @transform_6, window_bounds = array<i64: 2, 1, 32>}, {pipeline_mode = #tpu.pipeline_mode<synchronous>, transform_indices = @transform_7, window_bounds = array<i64: 2, 32, 96>}, {pipeline_mode = #tpu.pipeline_mode<synchronous>, transform_indices = @transform_8, window_bounds = array<i64: 2, 32, 32>}, {pipeline_mode = #tpu.pipeline_mode<synchronous>, transform_indices = @transform_9, window_bounds = array<i64: 2, 1, 32>}, {pipeline_mode = #tpu.pipeline_mode<synchronous>, transform_indices = @transform_10, window_bounds = array<i64: 2, 1, 32>}, {pipeline_mode = #tpu.pipeline_mode<synchronous>, transform_indices = @transform_11, window_bounds = array<i64: 2, 1, 32>}, {pipeline_mode = #tpu.pipeline_mode<synchronous>, transform_indices = @transform_12, window_bounds = array<i64: 2, 32, 64>}, {pipeline_mode = #tpu.pipeline_mode<synchronous>, transform_indices = @transform_13, window_bounds = array<i64: 2, 1, 64>}, {pipeline_mode = #tpu.pipeline_mode<synchronous>, transform_indices = @transform_14, window_bounds = array<i64: 2, 64, 32>}, {pipeline_mode = #tpu.pipeline_mode<synchronous>, transform_indices = @transform_15, window_bounds = array<i64: 2, 1, 32>}, {pipeline_mode = #tpu.pipeline_mode<synchronous>, transform_indices = @transform_16, window_bounds = array<i64: 1, 32>}, {pipeline_mode = #tpu.pipeline_mode<synchronous>, transform_indices = @transform_17, window_bounds = array<i64: 1, 32>}, {pipeline_mode = #tpu.pipeline_mode<synchronous>, transform_indices = @transform_18, window_bounds = array<i64: 32, 64>}, {pipeline_mode = #tpu.pipeline_mode<synchronous>, transform_indices = @transform_19, window_bounds = array<i64: 1, 64>}, {pipeline_mode = #tpu.pipeline_mode<synchronous>, transform_indices = @transform_20, window_bounds = array<i64: 64, 128>}, {pipeline_mode = #tpu.pipeline_mode<synchronous>, transform_indices = @transform_21, window_bounds = array<i64: 1, 128>}, {transform_indices = @transform_22, window_bounds = array<i64: 1, 1, 128>}, {transform_indices = @transform_23, window_bounds = array<i64: 1, 32, 32>}, {transform_indices = @transform_24, window_bounds = array<i64: 1, 32, 32>}]} {
    %c0 = arith.constant 0 : index
    %c0_0 = arith.constant 0 : index
    %c0_1 = arith.constant 0 : index
    %0 = vector.load %arg1[%c0, %c0_0, %c0_1] : memref<1x384x8xbf16, #tpu.memory_space<vmem>>, vector<1x384x8xbf16>
    %1 = vector.shape_cast %0 : vector<1x384x8xbf16> to vector<384x8xbf16>
    %c0_2 = arith.constant 0 : index
    %c0_3 = arith.constant 0 : index
    %2 = vector.load %arg3[%c0_2, %c0_3] : memref<8x32xbf16, #tpu.memory_space<vmem>>, vector<8x32xbf16>
    %cst = arith.constant dense<0.000000e+00> : vector<384x32xf32>
    %3 = tpu.matmul %1, %2, %cst {dimension_numbers = #tpu.dot_dimension_numbers<[1], [0], [0], [1], [0, 0, 1, 1], [], []>} : vector<384x8xbf16>, vector<8x32xbf16>, vector<384x32xf32> -> vector<384x32xf32>
    %4 = vector.extract_strided_slice %3 {offsets = [0, 0], sizes = [32, 32], strides = [1, 1]} : vector<384x32xf32> to vector<32x32xf32>
    %5 = vector.extract_strided_slice %3 {offsets = [32, 0], sizes = [32, 32], strides = [1, 1]} : vector<384x32xf32> to vector<32x32xf32>
    %6 = arith.maximumf %4, %5 : vector<32x32xf32>
    %7 = vector.extract_strided_slice %3 {offsets = [64, 0], sizes = [32, 32], strides = [1, 1]} : vector<384x32xf32> to vector<32x32xf32>
    %8 = arith.maximumf %6, %7 : vector<32x32xf32>
    %9 = vector.extract_strided_slice %3 {offsets = [96, 0], sizes = [32, 32], strides = [1, 1]} : vector<384x32xf32> to vector<32x32xf32>
    %10 = arith.maximumf %8, %9 : vector<32x32xf32>
    %11 = vector.extract_strided_slice %3 {offsets = [128, 0], sizes = [32, 32], strides = [1, 1]} : vector<384x32xf32> to vector<32x32xf32>
    %12 = arith.maximumf %10, %11 : vector<32x32xf32>
    %13 = vector.extract_strided_slice %3 {offsets = [160, 0], sizes = [32, 32], strides = [1, 1]} : vector<384x32xf32> to vector<32x32xf32>
    %14 = arith.maximumf %12, %13 : vector<32x32xf32>
    %15 = vector.extract_strided_slice %3 {offsets = [192, 0], sizes = [32, 32], strides = [1, 1]} : vector<384x32xf32> to vector<32x32xf32>
    %16 = arith.maximumf %14, %15 : vector<32x32xf32>
    %17 = vector.extract_strided_slice %3 {offsets = [224, 0], sizes = [32, 32], strides = [1, 1]} : vector<384x32xf32> to vector<32x32xf32>
    %18 = arith.maximumf %16, %17 : vector<32x32xf32>
    %19 = vector.extract_strided_slice %3 {offsets = [256, 0], sizes = [32, 32], strides = [1, 1]} : vector<384x32xf32> to vector<32x32xf32>
    %20 = arith.maximumf %18, %19 : vector<32x32xf32>
    %21 = vector.extract_strided_slice %3 {offsets = [288, 0], sizes = [32, 32], strides = [1, 1]} : vector<384x32xf32> to vector<32x32xf32>
    %22 = arith.maximumf %20, %21 : vector<32x32xf32>
    %23 = vector.extract_strided_slice %3 {offsets = [320, 0], sizes = [32, 32], strides = [1, 1]} : vector<384x32xf32> to vector<32x32xf32>
    %24 = arith.maximumf %22, %23 : vector<32x32xf32>
    %25 = vector.extract_strided_slice %3 {offsets = [352, 0], sizes = [32, 32], strides = [1, 1]} : vector<384x32xf32> to vector<32x32xf32>
    %26 = arith.maximumf %24, %25 : vector<32x32xf32>
    %c0_4 = arith.constant 0 : index
    %c0_5 = arith.constant 0 : index
    %c0_6 = arith.constant 0 : index
    %27 = vector.load %arg2[%c0_4, %c0_5, %c0_6] : memref<1x32x4xbf16, #tpu.memory_space<vmem>>, vector<1x32x4xbf16>
    %28 = vector.shape_cast %27 : vector<1x32x4xbf16> to vector<32x4xbf16>
    %c0_7 = arith.constant 0 : index
    %c0_8 = arith.constant 0 : index
    %29 = vector.load %arg4[%c0_7, %c0_8] : memref<4x32xbf16, #tpu.memory_space<vmem>>, vector<4x32xbf16>
    %cst_9 = arith.constant dense<0.000000e+00> : vector<32x32xf32>
    %30 = tpu.matmul %28, %29, %cst_9 {dimension_numbers = #tpu.dot_dimension_numbers<[1], [0], [0], [1], [0, 0, 1, 1], [], []>} : vector<32x4xbf16>, vector<4x32xbf16>, vector<32x32xf32> -> vector<32x32xf32>
    %c0_10 = arith.constant 0 : index
    %c0_11 = arith.constant 0 : index
    %31 = vector.load %arg5[%c0_10, %c0_11] : memref<1x32xf32, #tpu.memory_space<vmem>>, vector<1x32xf32>
    %32 = vector.broadcast %31 : vector<1x32xf32> to vector<32x32xf32>
    %33 = arith.addf %30, %32 : vector<32x32xf32>
    %c0_12 = arith.constant 0 : index
    %c0_13 = arith.constant 0 : index
    %c0_14 = arith.constant 0 : index
    %34 = vector.load %arg24[%c0_12, %c0_13, %c0_14] : memref<1x32x32xf32, #tpu.memory_space<vmem>>, vector<1x32x32xf32>
    %35 = vector.shape_cast %34 : vector<1x32x32xf32> to vector<32x32xf32>
    %36 = vector.shape_cast %33 : vector<32x32xf32> to vector<1x32x32xf32>
    tpu.vector_store %arg24[%c0_12, %c0_13, %c0_14], %36 {strides = array<i32>} : memref<1x32x32xf32, #tpu.memory_space<vmem>>, vector<1x32x32xf32>,
    %c0_15 = arith.constant 0 : index
    %c0_16 = arith.constant 0 : index
    %c0_17 = arith.constant 0 : index
    %37 = vector.load %arg25[%c0_15, %c0_16, %c0_17] : memref<1x32x32xf32, #tpu.memory_space<vmem>>, vector<1x32x32xf32>
    %38 = vector.shape_cast %37 : vector<1x32x32xf32> to vector<32x32xf32>
    %39 = vector.shape_cast %26 : vector<32x32xf32> to vector<1x32x32xf32>
    tpu.vector_store %arg25[%c0_15, %c0_16, %c0_17], %39 {strides = array<i32>} : memref<1x32x32xf32, #tpu.memory_space<vmem>>, vector<1x32x32xf32>,
    %40 = arith.addf %33, %26 : vector<32x32xf32>
    %cst_18 = arith.constant 0.000000e+00 : f32
    %41 = vector.broadcast %cst_18 : f32 to vector<32x32xf32>
    %42 = arith.maximumf %40, %41 : vector<32x32xf32>
    %c0_19 = arith.constant 0 : index
    %c0_20 = arith.constant 0 : index
    %c0_21 = arith.constant 0 : index
    %43 = vector.load %arg6[%c0_19, %c0_20, %c0_21] : memref<2x1x32xf32, #tpu.memory_space<vmem>>, vector<1x1x32xf32>
    %44 = vector.shape_cast %43 : vector<1x1x32xf32> to vector<1x32xf32>
    %c0_22 = arith.constant 0 : index
    %c0_23 = arith.constant 0 : index
    %c0_24 = arith.constant 0 : index
    %45 = vector.load %arg7[%c0_22, %c0_23, %c0_24] : memref<2x1x32xf32, #tpu.memory_space<vmem>>, vector<1x1x32xf32>
    %46 = vector.shape_cast %45 : vector<1x1x32xf32> to vector<1x32xf32>
    %cst_25 = arith.constant dense<0.000000e+00> : vector<32xf32>
    %47 = vector.multi_reduction <add>, %42, %cst_25 [1] : vector<32x32xf32> to vector<32xf32>
    %48 = vector.shape_cast %47 : vector<32xf32> to vector<32x1xf32>
    %cst_26 = arith.constant 3.200000e+01 : f32
    %49 = vector.broadcast %cst_26 : f32 to vector<32x1xf32>
    %50 = arith.divf %48, %49 : vector<32x1xf32>
    %51 = vector.broadcast %50 : vector<32x1xf32> to vector<32x32xf32>
    %52 = arith.subf %42, %51 : vector<32x32xf32>
    %53 = arith.mulf %52, %52 : vector<32x32xf32>
    %cst_27 = arith.constant dense<0.000000e+00> : vector<32xf32>
    %54 = vector.multi_reduction <add>, %53, %cst_27 [1] : vector<32x32xf32> to vector<32xf32>
    %55 = vector.shape_cast %54 : vector<32xf32> to vector<32x1xf32>
    %cst_28 = arith.constant 3.200000e+01 : f32
    %56 = vector.broadcast %cst_28 : f32 to vector<32x1xf32>
    %57 = arith.divf %55, %56 : vector<32x1xf32>
    %58 = vector.broadcast %50 : vector<32x1xf32> to vector<32x32xf32>
    %59 = arith.subf %42, %58 : vector<32x32xf32>
    %cst_29 = arith.constant 9.99999974E-6 : f32
    %60 = vector.broadcast %cst_29 : f32 to vector<32x1xf32>
    %61 = arith.addf %57, %60 : vector<32x1xf32>
    %62 = math.rsqrt %61 : vector<32x1xf32>
    %63 = vector.broadcast %62 : vector<32x1xf32> to vector<32x32xf32>
    %64 = arith.mulf %59, %63 : vector<32x32xf32>
    %65 = vector.broadcast %44 : vector<1x32xf32> to vector<32x32xf32>
    %66 = arith.mulf %64, %65 : vector<32x32xf32>
    %67 = vector.broadcast %46 : vector<1x32xf32> to vector<32x32xf32>
    %68 = arith.addf %66, %67 : vector<32x32xf32>
    %69 = arith.truncf %68 : vector<32x32xf32> to vector<32x32xbf16>
    %c0_30 = arith.constant 0 : index
    %c0_31 = arith.constant 0 : index
    %c0_32 = arith.constant 0 : index
    %70 = vector.load %arg8[%c0_30, %c0_31, %c0_32] : memref<2x32x96xbf16, #tpu.memory_space<vmem>>, vector<1x32x96xbf16>
    %71 = vector.shape_cast %70 : vector<1x32x96xbf16> to vector<32x96xbf16>
    %cst_33 = arith.constant dense<0.000000e+00> : vector<32x96xf32>
    %72 = tpu.matmul %69, %71, %cst_33 {dimension_numbers = #tpu.dot_dimension_numbers<[1], [0], [0], [1], [0, 0, 1, 1], [], []>} : vector<32x32xbf16>, vector<32x96xbf16>, vector<32x96xf32> -> vector<32x96xf32>
    %73 = vector.extract_strided_slice %72 {offsets = [0, 0], sizes = [32, 16], strides = [1, 1]} : vector<32x96xf32> to vector<32x16xf32>
    %74 = vector.extract_strided_slice %72 {offsets = [0, 32], sizes = [32, 16], strides = [1, 1]} : vector<32x96xf32> to vector<32x16xf32>
    %75 = vector.extract_strided_slice %72 {offsets = [0, 64], sizes = [32, 16], strides = [1, 1]} : vector<32x96xf32> to vector<32x16xf32>
    %76 = arith.truncf %73 : vector<32x16xf32> to vector<32x16xbf16>
    %77 = arith.truncf %74 : vector<32x16xf32> to vector<32x16xbf16>
    "tpu.trace_start"() <{level = 10 : i32, message = "sd,td->st"}> : () -> ()
    %cst_34 = arith.constant dense<0.000000e+00> : vector<32x32xf32>
    %78 = tpu.matmul %76, %77, %cst_34 {dimension_numbers = #tpu.dot_dimension_numbers<[1], [1], [0], [0], [0, 0, 1, 0], [], []>} : vector<32x16xbf16>, vector<32x16xbf16>, vector<32x32xf32> -> vector<32x32xf32>
    "tpu.trace_stop"() : () -> ()
    %cst_35 = arith.constant 2.500000e-01 : f32
    %79 = vector.broadcast %cst_35 : f32 to vector<32x32xf32>
    %80 = arith.mulf %78, %79 : vector<32x32xf32>
    %cst_36 = arith.constant dense<0xFF800000> : vector<32xf32>
    %81 = vector.multi_reduction <maximumf>, %80, %cst_36 [1] : vector<32x32xf32> to vector<32xf32>
    %82 = vector.shape_cast %81 : vector<32xf32> to vector<32x1xf32>
    %83 = vector.broadcast %82 : vector<32x1xf32> to vector<32x32xf32>
    %84 = arith.subf %80, %83 : vector<32x32xf32>
    %85 = math.exp %84 : vector<32x32xf32>
    %cst_37 = arith.constant dense<0.000000e+00> : vector<32xf32>
    %86 = vector.multi_reduction <add>, %85, %cst_37 [1] : vector<32x32xf32> to vector<32xf32>
    %87 = vector.shape_cast %86 : vector<32xf32> to vector<32x1xf32>
    %88 = tpu.reciprocal %87 {approx = true} : vector<32x1xf32> -> vector<32x1xf32>
    %89 = vector.broadcast %88 : vector<32x1xf32> to vector<32x32xf32>
    %90 = arith.mulf %85, %89 : vector<32x32xf32>
    %91 = arith.truncf %90 : vector<32x32xf32> to vector<32x32xbf16>
    %92 = arith.truncf %75 : vector<32x16xf32> to vector<32x16xbf16>
    %cst_38 = arith.constant dense<0.000000e+00> : vector<32x16xf32>
    %93 = tpu.matmul %91, %92, %cst_38 {dimension_numbers = #tpu.dot_dimension_numbers<[1], [0], [0], [1], [0, 0, 1, 1], [], []>} : vector<32x32xbf16>, vector<32x16xbf16>, vector<32x16xf32> -> vector<32x16xf32>
    %94 = vector.extract_strided_slice %72 {offsets = [0, 16], sizes = [32, 16], strides = [1, 1]} : vector<32x96xf32> to vector<32x16xf32>
    %95 = vector.extract_strided_slice %72 {offsets = [0, 48], sizes = [32, 16], strides = [1, 1]} : vector<32x96xf32> to vector<32x16xf32>
    %96 = vector.extract_strided_slice %72 {offsets = [0, 80], sizes = [32, 16], strides = [1, 1]} : vector<32x96xf32> to vector<32x16xf32>
    %97 = arith.truncf %94 : vector<32x16xf32> to vector<32x16xbf16>
    %98 = arith.truncf %95 : vector<32x16xf32> to vector<32x16xbf16>
    "tpu.trace_start"() <{level = 10 : i32, message = "sd,td->st"}> : () -> ()
    %cst_39 = arith.constant dense<0.000000e+00> : vector<32x32xf32>
    %99 = tpu.matmul %97, %98, %cst_39 {dimension_numbers = #tpu.dot_dimension_numbers<[1], [1], [0], [0], [0, 0, 1, 0], [], []>} : vector<32x16xbf16>, vector<32x16xbf16>, vector<32x32xf32> -> vector<32x32xf32>
    "tpu.trace_stop"() : () -> ()
    %cst_40 = arith.constant 2.500000e-01 : f32
    %100 = vector.broadcast %cst_40 : f32 to vector<32x32xf32>
    %101 = arith.mulf %99, %100 : vector<32x32xf32>
    %cst_41 = arith.constant dense<0xFF800000> : vector<32xf32>
    %102 = vector.multi_reduction <maximumf>, %101, %cst_41 [1] : vector<32x32xf32> to vector<32xf32>
    %103 = vector.shape_cast %102 : vector<32xf32> to vector<32x1xf32>
    %104 = vector.broadcast %103 : vector<32x1xf32> to vector<32x32xf32>
    %105 = arith.subf %101, %104 : vector<32x32xf32>
    %106 = math.exp %105 : vector<32x32xf32>
    %cst_42 = arith.constant dense<0.000000e+00> : vector<32xf32>
    %107 = vector.multi_reduction <add>, %106, %cst_42 [1] : vector<32x32xf32> to vector<32xf32>
    %108 = vector.shape_cast %107 : vector<32xf32> to vector<32x1xf32>
    %109 = tpu.reciprocal %108 {approx = true} : vector<32x1xf32> -> vector<32x1xf32>
    %110 = vector.broadcast %109 : vector<32x1xf32> to vector<32x32xf32>
    %111 = arith.mulf %106, %110 : vector<32x32xf32>
    %112 = arith.truncf %111 : vector<32x32xf32> to vector<32x32xbf16>
    %113 = arith.truncf %96 : vector<32x16xf32> to vector<32x16xbf16>
    %cst_43 = arith.constant dense<0.000000e+00> : vector<32x16xf32>
    %114 = tpu.matmul %112, %113, %cst_43 {dimension_numbers = #tpu.dot_dimension_numbers<[1], [0], [0], [1], [0, 0, 1, 1], [], []>} : vector<32x32xbf16>, vector<32x16xbf16>, vector<32x16xf32> -> vector<32x16xf32>
    %115 = tpu.concatenate %93, %114 in 1 : vector<32x16xf32>, vector<32x16xf32> -> vector<32x32xf32>
    %116 = arith.truncf %115 : vector<32x32xf32> to vector<32x32xbf16>
    %c0_44 = arith.constant 0 : index
    %c0_45 = arith.constant 0 : index
    %c0_46 = arith.constant 0 : index
    %117 = vector.load %arg9[%c0_44, %c0_45, %c0_46] : memref<2x32x32xbf16, #tpu.memory_space<vmem>>, vector<1x32x32xbf16>
    %118 = vector.shape_cast %117 : vector<1x32x32xbf16> to vector<32x32xbf16>
    %cst_47 = arith.constant dense<0.000000e+00> : vector<32x32xf32>
    %119 = tpu.matmul %116, %118, %cst_47 {dimension_numbers = #tpu.dot_dimension_numbers<[1], [0], [0], [1], [0, 0, 1, 1], [], []>} : vector<32x32xbf16>, vector<32x32xbf16>, vector<32x32xf32> -> vector<32x32xf32>
    %c0_48 = arith.constant 0 : index
    %c0_49 = arith.constant 0 : index
    %c0_50 = arith.constant 0 : index
    %120 = vector.load %arg10[%c0_48, %c0_49, %c0_50] : memref<2x1x32xf32, #tpu.memory_space<vmem>>, vector<1x1x32xf32>
    %121 = vector.shape_cast %120 : vector<1x1x32xf32> to vector<1x32xf32>
    %122 = vector.broadcast %121 : vector<1x32xf32> to vector<32x32xf32>
    %123 = arith.addf %119, %122 : vector<32x32xf32>
    %124 = arith.addf %123, %42 : vector<32x32xf32>
    %c0_51 = arith.constant 0 : index
    %c0_52 = arith.constant 0 : index
    %c0_53 = arith.constant 0 : index
    %125 = vector.load %arg11[%c0_51, %c0_52, %c0_53] : memref<2x1x32xf32, #tpu.memory_space<vmem>>, vector<1x1x32xf32>
    %126 = vector.shape_cast %125 : vector<1x1x32xf32> to vector<1x32xf32>
    %c0_54 = arith.constant 0 : index
    %c0_55 = arith.constant 0 : index
    %c0_56 = arith.constant 0 : index
    %127 = vector.load %arg12[%c0_54, %c0_55, %c0_56] : memref<2x1x32xf32, #tpu.memory_space<vmem>>, vector<1x1x32xf32>
    %128 = vector.shape_cast %127 : vector<1x1x32xf32> to vector<1x32xf32>
    %cst_57 = arith.constant dense<0.000000e+00> : vector<32xf32>
    %129 = vector.multi_reduction <add>, %124, %cst_57 [1] : vector<32x32xf32> to vector<32xf32>
    %130 = vector.shape_cast %129 : vector<32xf32> to vector<32x1xf32>
    %cst_58 = arith.constant 3.200000e+01 : f32
    %131 = vector.broadcast %cst_58 : f32 to vector<32x1xf32>
    %132 = arith.divf %130, %131 : vector<32x1xf32>
    %133 = vector.broadcast %132 : vector<32x1xf32> to vector<32x32xf32>
    %134 = arith.subf %124, %133 : vector<32x32xf32>
    %135 = arith.mulf %134, %134 : vector<32x32xf32>
    %cst_59 = arith.constant dense<0.000000e+00> : vector<32xf32>
    %136 = vector.multi_reduction <add>, %135, %cst_59 [1] : vector<32x32xf32> to vector<32xf32>
    %137 = vector.shape_cast %136 : vector<32xf32> to vector<32x1xf32>
    %cst_60 = arith.constant 3.200000e+01 : f32
    %138 = vector.broadcast %cst_60 : f32 to vector<32x1xf32>
    %139 = arith.divf %137, %138 : vector<32x1xf32>
    %140 = vector.broadcast %132 : vector<32x1xf32> to vector<32x32xf32>
    %141 = arith.subf %124, %140 : vector<32x32xf32>
    %cst_61 = arith.constant 9.99999974E-6 : f32
    %142 = vector.broadcast %cst_61 : f32 to vector<32x1xf32>
    %143 = arith.addf %139, %142 : vector<32x1xf32>
    %144 = math.rsqrt %143 : vector<32x1xf32>
    %145 = vector.broadcast %144 : vector<32x1xf32> to vector<32x32xf32>
    %146 = arith.mulf %141, %145 : vector<32x32xf32>
    %147 = vector.broadcast %126 : vector<1x32xf32> to vector<32x32xf32>
    %148 = arith.mulf %146, %147 : vector<32x32xf32>
    %149 = vector.broadcast %128 : vector<1x32xf32> to vector<32x32xf32>
    %150 = arith.addf %148, %149 : vector<32x32xf32>
    %151 = arith.truncf %150 : vector<32x32xf32> to vector<32x32xbf16>
    %c0_62 = arith.constant 0 : index
    %c0_63 = arith.constant 0 : index
    %c0_64 = arith.constant 0 : index
    %152 = vector.load %arg13[%c0_62, %c0_63, %c0_64] : memref<2x32x64xbf16, #tpu.memory_space<vmem>>, vector<1x32x64xbf16>
    %153 = vector.shape_cast %152 : vector<1x32x64xbf16> to vector<32x64xbf16>
    %cst_65 = arith.constant dense<0.000000e+00> : vector<32x64xf32>
    %154 = tpu.matmul %151, %153, %cst_65 {dimension_numbers = #tpu.dot_dimension_numbers<[1], [0], [0], [1], [0, 0, 1, 1], [], []>} : vector<32x32xbf16>, vector<32x64xbf16>, vector<32x64xf32> -> vector<32x64xf32>
    %c0_66 = arith.constant 0 : index
    %c0_67 = arith.constant 0 : index
    %c0_68 = arith.constant 0 : index
    %155 = vector.load %arg14[%c0_66, %c0_67, %c0_68] : memref<2x1x64xf32, #tpu.memory_space<vmem>>, vector<1x1x64xf32>
    %156 = vector.shape_cast %155 : vector<1x1x64xf32> to vector<1x64xf32>
    %157 = vector.broadcast %156 : vector<1x64xf32> to vector<32x64xf32>
    %158 = arith.addf %154, %157 : vector<32x64xf32>
    %cst_69 = arith.constant 5.000000e-01 : f32
    %159 = vector.broadcast %cst_69 : f32 to vector<32x64xf32>
    %160 = arith.mulf %159, %158 : vector<32x64xf32>
    %cst_70 = arith.constant 0.707106769 : f32
    %161 = vector.broadcast %cst_70 : f32 to vector<32x64xf32>
    %162 = arith.mulf %158, %161 : vector<32x64xf32>
    %cst_71 = arith.constant -4.000000e+00 : f32
    %cst_72 = arith.constant 4.000000e+00 : f32
    %163 = vector.broadcast %cst_71 : f32 to vector<32x64xf32>
    %164 = arith.maximumf %163, %162 : vector<32x64xf32>
    %165 = vector.broadcast %cst_72 : f32 to vector<32x64xf32>
    %166 = arith.minimumf %165, %164 : vector<32x64xf32>
    %167 = arith.mulf %166, %166 : vector<32x64xf32>
    %cst_73 = arith.constant -2.72614237E-10 : f32
    %168 = vector.broadcast %cst_73 : f32 to vector<32x64xf32>
    %169 = arith.mulf %168, %167 : vector<32x64xf32>
    %cst_74 = arith.constant 2.77068146E-8 : f32
    %170 = vector.broadcast %cst_74 : f32 to vector<32x64xf32>
    %171 = arith.addf %169, %170 : vector<32x64xf32>
    %172 = arith.mulf %171, %167 : vector<32x64xf32>
    %cst_75 = arith.constant -2.10102394E-6 : f32
    %173 = vector.broadcast %cst_75 : f32 to vector<32x64xf32>
    %174 = arith.addf %172, %173 : vector<32x64xf32>
    %175 = arith.mulf %174, %167 : vector<32x64xf32>
    %cst_76 = arith.constant -5.69250624E-5 : f32
    %176 = vector.broadcast %cst_76 : f32 to vector<32x64xf32>
    %177 = arith.addf %175, %176 : vector<32x64xf32>
    %178 = arith.mulf %177, %167 : vector<32x64xf32>
    %cst_77 = arith.constant -7.34990637E-4 : f32
    %179 = vector.broadcast %cst_77 : f32 to vector<32x64xf32>
    %180 = arith.addf %178, %179 : vector<32x64xf32>
    %181 = arith.mulf %180, %167 : vector<32x64xf32>
    %cst_78 = arith.constant -2.954600e-03 : f32
    %182 = vector.broadcast %cst_78 : f32 to vector<32x64xf32>
    %183 = arith.addf %181, %182 : vector<32x64xf32>
    %184 = arith.mulf %183, %167 : vector<32x64xf32>
    %cst_79 = arith.constant -0.0160960332 : f32
    %185 = vector.broadcast %cst_79 : f32 to vector<32x64xf32>
    %186 = arith.addf %184, %185 : vector<32x64xf32>
    %187 = arith.mulf %186, %166 : vector<32x64xf32>
    %cst_80 = arith.constant -1.45660715E-5 : f32
    %188 = vector.broadcast %cst_80 : f32 to vector<32x64xf32>
    %189 = arith.mulf %188, %167 : vector<32x64xf32>
    %cst_81 = arith.constant -2.13374049E-4 : f32
    %190 = vector.broadcast %cst_81 : f32 to vector<32x64xf32>
    %191 = arith.addf %189, %190 : vector<32x64xf32>
    %192 = arith.mulf %191, %167 : vector<32x64xf32>
    %cst_82 = arith.constant -0.00168282702 : f32
    %193 = vector.broadcast %cst_82 : f32 to vector<32x64xf32>
    %194 = arith.addf %192, %193 : vector<32x64xf32>
    %195 = arith.mulf %194, %167 : vector<32x64xf32>
    %cst_83 = arith.constant -0.00737332925 : f32
    %196 = vector.broadcast %cst_83 : f32 to vector<32x64xf32>
    %197 = arith.addf %195, %196 : vector<32x64xf32>
    %198 = arith.mulf %197, %167 : vector<32x64xf32>
    %cst_84 = arith.constant -0.0142647391 : f32
    %199 = vector.broadcast %cst_84 : f32 to vector<32x64xf32>
    %200 = arith.addf %198, %199 : vector<32x64xf32>
    %201 = arith.divf %187, %200 : vector<32x64xf32>
    %cst_85 = arith.constant 1.000000e+00 : f32
    %202 = vector.broadcast %cst_85 : f32 to vector<32x64xf32>
    %203 = arith.addf %202, %201 : vector<32x64xf32>
    %204 = arith.mulf %160, %203 : vector<32x64xf32>
    %205 = arith.truncf %204 : vector<32x64xf32> to vector<32x64xbf16>
    %c0_86 = arith.constant 0 : index
    %c0_87 = arith.constant 0 : index
    %c0_88 = arith.constant 0 : index
    %206 = vector.load %arg15[%c0_86, %c0_87, %c0_88] : memref<2x64x32xbf16, #tpu.memory_space<vmem>>, vector<1x64x32xbf16>
    %207 = vector.shape_cast %206 : vector<1x64x32xbf16> to vector<64x32xbf16>
    %cst_89 = arith.constant dense<0.000000e+00> : vector<32x32xf32>
    %208 = tpu.matmul %205, %207, %cst_89 {dimension_numbers = #tpu.dot_dimension_numbers<[1], [0], [0], [1], [0, 0, 1, 1], [], []>} : vector<32x64xbf16>, vector<64x32xbf16>, vector<32x32xf32> -> vector<32x32xf32>
    %c0_90 = arith.constant 0 : index
    %c0_91 = arith.constant 0 : index
    %c0_92 = arith.constant 0 : index
    %209 = vector.load %arg16[%c0_90, %c0_91, %c0_92] : memref<2x1x32xf32, #tpu.memory_space<vmem>>, vector<1x1x32xf32>
    %210 = vector.shape_cast %209 : vector<1x1x32xf32> to vector<1x32xf32>
    %211 = vector.broadcast %210 : vector<1x32xf32> to vector<32x32xf32>
    %212 = arith.addf %208, %211 : vector<32x32xf32>
    %213 = arith.addf %212, %124 : vector<32x32xf32>
    %c1 = arith.constant 1 : index
    %c0_93 = arith.constant 0 : index
    %c0_94 = arith.constant 0 : index
    %214 = vector.load %arg6[%c1, %c0_93, %c0_94] : memref<2x1x32xf32, #tpu.memory_space<vmem>>, vector<1x1x32xf32>
    %215 = vector.shape_cast %214 : vector<1x1x32xf32> to vector<1x32xf32>
    %c1_95 = arith.constant 1 : index
    %c0_96 = arith.constant 0 : index
    %c0_97 = arith.constant 0 : index
    %216 = vector.load %arg7[%c1_95, %c0_96, %c0_97] : memref<2x1x32xf32, #tpu.memory_space<vmem>>, vector<1x1x32xf32>
    %217 = vector.shape_cast %216 : vector<1x1x32xf32> to vector<1x32xf32>
    %cst_98 = arith.constant dense<0.000000e+00> : vector<32xf32>
    %218 = vector.multi_reduction <add>, %213, %cst_98 [1] : vector<32x32xf32> to vector<32xf32>
    %219 = vector.shape_cast %218 : vector<32xf32> to vector<32x1xf32>
    %cst_99 = arith.constant 3.200000e+01 : f32
    %220 = vector.broadcast %cst_99 : f32 to vector<32x1xf32>
    %221 = arith.divf %219, %220 : vector<32x1xf32>
    %222 = vector.broadcast %221 : vector<32x1xf32> to vector<32x32xf32>
    %223 = arith.subf %213, %222 : vector<32x32xf32>
    %224 = arith.mulf %223, %223 : vector<32x32xf32>
    %cst_100 = arith.constant dense<0.000000e+00> : vector<32xf32>
    %225 = vector.multi_reduction <add>, %224, %cst_100 [1] : vector<32x32xf32> to vector<32xf32>
    %226 = vector.shape_cast %225 : vector<32xf32> to vector<32x1xf32>
    %cst_101 = arith.constant 3.200000e+01 : f32
    %227 = vector.broadcast %cst_101 : f32 to vector<32x1xf32>
    %228 = arith.divf %226, %227 : vector<32x1xf32>
    %229 = vector.broadcast %221 : vector<32x1xf32> to vector<32x32xf32>
    %230 = arith.subf %213, %229 : vector<32x32xf32>
    %cst_102 = arith.constant 9.99999974E-6 : f32
    %231 = vector.broadcast %cst_102 : f32 to vector<32x1xf32>
    %232 = arith.addf %228, %231 : vector<32x1xf32>
    %233 = math.rsqrt %232 : vector<32x1xf32>
    %234 = vector.broadcast %233 : vector<32x1xf32> to vector<32x32xf32>
    %235 = arith.mulf %230, %234 : vector<32x32xf32>
    %236 = vector.broadcast %215 : vector<1x32xf32> to vector<32x32xf32>
    %237 = arith.mulf %235, %236 : vector<32x32xf32>
    %238 = vector.broadcast %217 : vector<1x32xf32> to vector<32x32xf32>
    %239 = arith.addf %237, %238 : vector<32x32xf32>
    %240 = arith.truncf %239 : vector<32x32xf32> to vector<32x32xbf16>
    %c1_103 = arith.constant 1 : index
    %c0_104 = arith.constant 0 : index
    %c0_105 = arith.constant 0 : index
    %241 = vector.load %arg8[%c1_103, %c0_104, %c0_105] : memref<2x32x96xbf16, #tpu.memory_space<vmem>>, vector<1x32x96xbf16>
    %242 = vector.shape_cast %241 : vector<1x32x96xbf16> to vector<32x96xbf16>
    %cst_106 = arith.constant dense<0.000000e+00> : vector<32x96xf32>
    %243 = tpu.matmul %240, %242, %cst_106 {dimension_numbers = #tpu.dot_dimension_numbers<[1], [0], [0], [1], [0, 0, 1, 1], [], []>} : vector<32x32xbf16>, vector<32x96xbf16>, vector<32x96xf32> -> vector<32x96xf32>
    %244 = vector.extract_strided_slice %243 {offsets = [0, 0], sizes = [32, 16], strides = [1, 1]} : vector<32x96xf32> to vector<32x16xf32>
    %245 = vector.extract_strided_slice %243 {offsets = [0, 32], sizes = [32, 16], strides = [1, 1]} : vector<32x96xf32> to vector<32x16xf32>
    %246 = vector.extract_strided_slice %243 {offsets = [0, 64], sizes = [32, 16], strides = [1, 1]} : vector<32x96xf32> to vector<32x16xf32>
    %247 = arith.truncf %244 : vector<32x16xf32> to vector<32x16xbf16>
    %248 = arith.truncf %245 : vector<32x16xf32> to vector<32x16xbf16>
    "tpu.trace_start"() <{level = 10 : i32, message = "sd,td->st"}> : () -> ()
    %cst_107 = arith.constant dense<0.000000e+00> : vector<32x32xf32>
    %249 = tpu.matmul %247, %248, %cst_107 {dimension_numbers = #tpu.dot_dimension_numbers<[1], [1], [0], [0], [0, 0, 1, 0], [], []>} : vector<32x16xbf16>, vector<32x16xbf16>, vector<32x32xf32> -> vector<32x32xf32>
    "tpu.trace_stop"() : () -> ()
    %cst_108 = arith.constant 2.500000e-01 : f32
    %250 = vector.broadcast %cst_108 : f32 to vector<32x32xf32>
    %251 = arith.mulf %249, %250 : vector<32x32xf32>
    %cst_109 = arith.constant dense<0xFF800000> : vector<32xf32>
    %252 = vector.multi_reduction <maximumf>, %251, %cst_109 [1] : vector<32x32xf32> to vector<32xf32>
    %253 = vector.shape_cast %252 : vector<32xf32> to vector<32x1xf32>
    %254 = vector.broadcast %253 : vector<32x1xf32> to vector<32x32xf32>
    %255 = arith.subf %251, %254 : vector<32x32xf32>
    %256 = math.exp %255 : vector<32x32xf32>
    %cst_110 = arith.constant dense<0.000000e+00> : vector<32xf32>
    %257 = vector.multi_reduction <add>, %256, %cst_110 [1] : vector<32x32xf32> to vector<32xf32>
    %258 = vector.shape_cast %257 : vector<32xf32> to vector<32x1xf32>
    %259 = tpu.reciprocal %258 {approx = true} : vector<32x1xf32> -> vector<32x1xf32>
    %260 = vector.broadcast %259 : vector<32x1xf32> to vector<32x32xf32>
    %261 = arith.mulf %256, %260 : vector<32x32xf32>
    %262 = arith.truncf %261 : vector<32x32xf32> to vector<32x32xbf16>
    %263 = arith.truncf %246 : vector<32x16xf32> to vector<32x16xbf16>
    %cst_111 = arith.constant dense<0.000000e+00> : vector<32x16xf32>
    %264 = tpu.matmul %262, %263, %cst_111 {dimension_numbers = #tpu.dot_dimension_numbers<[1], [0], [0], [1], [0, 0, 1, 1], [], []>} : vector<32x32xbf16>, vector<32x16xbf16>, vector<32x16xf32> -> vector<32x16xf32>
    %265 = vector.extract_strided_slice %243 {offsets = [0, 16], sizes = [32, 16], strides = [1, 1]} : vector<32x96xf32> to vector<32x16xf32>
    %266 = vector.extract_strided_slice %243 {offsets = [0, 48], sizes = [32, 16], strides = [1, 1]} : vector<32x96xf32> to vector<32x16xf32>
    %267 = vector.extract_strided_slice %243 {offsets = [0, 80], sizes = [32, 16], strides = [1, 1]} : vector<32x96xf32> to vector<32x16xf32>
    %268 = arith.truncf %265 : vector<32x16xf32> to vector<32x16xbf16>
    %269 = arith.truncf %266 : vector<32x16xf32> to vector<32x16xbf16>
    "tpu.trace_start"() <{level = 10 : i32, message = "sd,td->st"}> : () -> ()
    %cst_112 = arith.constant dense<0.000000e+00> : vector<32x32xf32>
    %270 = tpu.matmul %268, %269, %cst_112 {dimension_numbers = #tpu.dot_dimension_numbers<[1], [1], [0], [0], [0, 0, 1, 0], [], []>} : vector<32x16xbf16>, vector<32x16xbf16>, vector<32x32xf32> -> vector<32x32xf32>
    "tpu.trace_stop"() : () -> ()
    %cst_113 = arith.constant 2.500000e-01 : f32
    %271 = vector.broadcast %cst_113 : f32 to vector<32x32xf32>
    %272 = arith.mulf %270, %271 : vector<32x32xf32>
    %cst_114 = arith.constant dense<0xFF800000> : vector<32xf32>
    %273 = vector.multi_reduction <maximumf>, %272, %cst_114 [1] : vector<32x32xf32> to vector<32xf32>
    %274 = vector.shape_cast %273 : vector<32xf32> to vector<32x1xf32>
    %275 = vector.broadcast %274 : vector<32x1xf32> to vector<32x32xf32>
    %276 = arith.subf %272, %275 : vector<32x32xf32>
    %277 = math.exp %276 : vector<32x32xf32>
    %cst_115 = arith.constant dense<0.000000e+00> : vector<32xf32>
    %278 = vector.multi_reduction <add>, %277, %cst_115 [1] : vector<32x32xf32> to vector<32xf32>
    %279 = vector.shape_cast %278 : vector<32xf32> to vector<32x1xf32>
    %280 = tpu.reciprocal %279 {approx = true} : vector<32x1xf32> -> vector<32x1xf32>
    %281 = vector.broadcast %280 : vector<32x1xf32> to vector<32x32xf32>
    %282 = arith.mulf %277, %281 : vector<32x32xf32>
    %283 = arith.truncf %282 : vector<32x32xf32> to vector<32x32xbf16>
    %284 = arith.truncf %267 : vector<32x16xf32> to vector<32x16xbf16>
    %cst_116 = arith.constant dense<0.000000e+00> : vector<32x16xf32>
    %285 = tpu.matmul %283, %284, %cst_116 {dimension_numbers = #tpu.dot_dimension_numbers<[1], [0], [0], [1], [0, 0, 1, 1], [], []>} : vector<32x32xbf16>, vector<32x16xbf16>, vector<32x16xf32> -> vector<32x16xf32>
    %286 = tpu.concatenate %264, %285 in 1 : vector<32x16xf32>, vector<32x16xf32> -> vector<32x32xf32>
    %287 = arith.truncf %286 : vector<32x32xf32> to vector<32x32xbf16>
    %c1_117 = arith.constant 1 : index
    %c0_118 = arith.constant 0 : index
    %c0_119 = arith.constant 0 : index
    %288 = vector.load %arg9[%c1_117, %c0_118, %c0_119] : memref<2x32x32xbf16, #tpu.memory_space<vmem>>, vector<1x32x32xbf16>
    %289 = vector.shape_cast %288 : vector<1x32x32xbf16> to vector<32x32xbf16>
    %cst_120 = arith.constant dense<0.000000e+00> : vector<32x32xf32>
    %290 = tpu.matmul %287, %289, %cst_120 {dimension_numbers = #tpu.dot_dimension_numbers<[1], [0], [0], [1], [0, 0, 1, 1], [], []>} : vector<32x32xbf16>, vector<32x32xbf16>, vector<32x32xf32> -> vector<32x32xf32>
    %c1_121 = arith.constant 1 : index
    %c0_122 = arith.constant 0 : index
    %c0_123 = arith.constant 0 : index
    %291 = vector.load %arg10[%c1_121, %c0_122, %c0_123] : memref<2x1x32xf32, #tpu.memory_space<vmem>>, vector<1x1x32xf32>
    %292 = vector.shape_cast %291 : vector<1x1x32xf32> to vector<1x32xf32>
    %293 = vector.broadcast %292 : vector<1x32xf32> to vector<32x32xf32>
    %294 = arith.addf %290, %293 : vector<32x32xf32>
    %295 = arith.addf %294, %213 : vector<32x32xf32>
    %c1_124 = arith.constant 1 : index
    %c0_125 = arith.constant 0 : index
    %c0_126 = arith.constant 0 : index
    %296 = vector.load %arg11[%c1_124, %c0_125, %c0_126] : memref<2x1x32xf32, #tpu.memory_space<vmem>>, vector<1x1x32xf32>
    %297 = vector.shape_cast %296 : vector<1x1x32xf32> to vector<1x32xf32>
    %c1_127 = arith.constant 1 : index
    %c0_128 = arith.constant 0 : index
    %c0_129 = arith.constant 0 : index
    %298 = vector.load %arg12[%c1_127, %c0_128, %c0_129] : memref<2x1x32xf32, #tpu.memory_space<vmem>>, vector<1x1x32xf32>
    %299 = vector.shape_cast %298 : vector<1x1x32xf32> to vector<1x32xf32>
    %cst_130 = arith.constant dense<0.000000e+00> : vector<32xf32>
    %300 = vector.multi_reduction <add>, %295, %cst_130 [1] : vector<32x32xf32> to vector<32xf32>
    %301 = vector.shape_cast %300 : vector<32xf32> to vector<32x1xf32>
    %cst_131 = arith.constant 3.200000e+01 : f32
    %302 = vector.broadcast %cst_131 : f32 to vector<32x1xf32>
    %303 = arith.divf %301, %302 : vector<32x1xf32>
    %304 = vector.broadcast %303 : vector<32x1xf32> to vector<32x32xf32>
    %305 = arith.subf %295, %304 : vector<32x32xf32>
    %306 = arith.mulf %305, %305 : vector<32x32xf32>
    %cst_132 = arith.constant dense<0.000000e+00> : vector<32xf32>
    %307 = vector.multi_reduction <add>, %306, %cst_132 [1] : vector<32x32xf32> to vector<32xf32>
    %308 = vector.shape_cast %307 : vector<32xf32> to vector<32x1xf32>
    %cst_133 = arith.constant 3.200000e+01 : f32
    %309 = vector.broadcast %cst_133 : f32 to vector<32x1xf32>
    %310 = arith.divf %308, %309 : vector<32x1xf32>
    %311 = vector.broadcast %303 : vector<32x1xf32> to vector<32x32xf32>
    %312 = arith.subf %295, %311 : vector<32x32xf32>
    %cst_134 = arith.constant 9.99999974E-6 : f32
    %313 = vector.broadcast %cst_134 : f32 to vector<32x1xf32>
    %314 = arith.addf %310, %313 : vector<32x1xf32>
    %315 = math.rsqrt %314 : vector<32x1xf32>
    %316 = vector.broadcast %315 : vector<32x1xf32> to vector<32x32xf32>
    %317 = arith.mulf %312, %316 : vector<32x32xf32>
    %318 = vector.broadcast %297 : vector<1x32xf32> to vector<32x32xf32>
    %319 = arith.mulf %317, %318 : vector<32x32xf32>
    %320 = vector.broadcast %299 : vector<1x32xf32> to vector<32x32xf32>
    %321 = arith.addf %319, %320 : vector<32x32xf32>
    %322 = arith.truncf %321 : vector<32x32xf32> to vector<32x32xbf16>
    %c1_135 = arith.constant 1 : index
    %c0_136 = arith.constant 0 : index
    %c0_137 = arith.constant 0 : index
    %323 = vector.load %arg13[%c1_135, %c0_136, %c0_137] : memref<2x32x64xbf16, #tpu.memory_space<vmem>>, vector<1x32x64xbf16>
    %324 = vector.shape_cast %323 : vector<1x32x64xbf16> to vector<32x64xbf16>
    %cst_138 = arith.constant dense<0.000000e+00> : vector<32x64xf32>
    %325 = tpu.matmul %322, %324, %cst_138 {dimension_numbers = #tpu.dot_dimension_numbers<[1], [0], [0], [1], [0, 0, 1, 1], [], []>} : vector<32x32xbf16>, vector<32x64xbf16>, vector<32x64xf32> -> vector<32x64xf32>
    %c1_139 = arith.constant 1 : index
    %c0_140 = arith.constant 0 : index
    %c0_141 = arith.constant 0 : index
    %326 = vector.load %arg14[%c1_139, %c0_140, %c0_141] : memref<2x1x64xf32, #tpu.memory_space<vmem>>, vector<1x1x64xf32>
    %327 = vector.shape_cast %326 : vector<1x1x64xf32> to vector<1x64xf32>
    %328 = vector.broadcast %327 : vector<1x64xf32> to vector<32x64xf32>
    %329 = arith.addf %325, %328 : vector<32x64xf32>
    %cst_142 = arith.constant 5.000000e-01 : f32
    %330 = vector.broadcast %cst_142 : f32 to vector<32x64xf32>
    %331 = arith.mulf %330, %329 : vector<32x64xf32>
    %cst_143 = arith.constant 0.707106769 : f32
    %332 = vector.broadcast %cst_143 : f32 to vector<32x64xf32>
    %333 = arith.mulf %329, %332 : vector<32x64xf32>
    %cst_144 = arith.constant -4.000000e+00 : f32
    %cst_145 = arith.constant 4.000000e+00 : f32
    %334 = vector.broadcast %cst_144 : f32 to vector<32x64xf32>
    %335 = arith.maximumf %334, %333 : vector<32x64xf32>
    %336 = vector.broadcast %cst_145 : f32 to vector<32x64xf32>
    %337 = arith.minimumf %336, %335 : vector<32x64xf32>
    %338 = arith.mulf %337, %337 : vector<32x64xf32>
    %cst_146 = arith.constant -2.72614237E-10 : f32
    %339 = vector.broadcast %cst_146 : f32 to vector<32x64xf32>
    %340 = arith.mulf %339, %338 : vector<32x64xf32>
    %cst_147 = arith.constant 2.77068146E-8 : f32
    %341 = vector.broadcast %cst_147 : f32 to vector<32x64xf32>
    %342 = arith.addf %340, %341 : vector<32x64xf32>
    %343 = arith.mulf %342, %338 : vector<32x64xf32>
    %cst_148 = arith.constant -2.10102394E-6 : f32
    %344 = vector.broadcast %cst_148 : f32 to vector<32x64xf32>
    %345 = arith.addf %343, %344 : vector<32x64xf32>
    %346 = arith.mulf %345, %338 : vector<32x64xf32>
    %cst_149 = arith.constant -5.69250624E-5 : f32
    %347 = vector.broadcast %cst_149 : f32 to vector<32x64xf32>
    %348 = arith.addf %346, %347 : vector<32x64xf32>
    %349 = arith.mulf %348, %338 : vector<32x64xf32>
    %cst_150 = arith.constant -7.34990637E-4 : f32
    %350 = vector.broadcast %cst_150 : f32 to vector<32x64xf32>
    %351 = arith.addf %349, %350 : vector<32x64xf32>
    %352 = arith.mulf %351, %338 : vector<32x64xf32>
    %cst_151 = arith.constant -2.954600e-03 : f32
    %353 = vector.broadcast %cst_151 : f32 to vector<32x64xf32>
    %354 = arith.addf %352, %353 : vector<32x64xf32>
    %355 = arith.mulf %354, %338 : vector<32x64xf32>
    %cst_152 = arith.constant -0.0160960332 : f32
    %356 = vector.broadcast %cst_152 : f32 to vector<32x64xf32>
    %357 = arith.addf %355, %356 : vector<32x64xf32>
    %358 = arith.mulf %357, %337 : vector<32x64xf32>
    %cst_153 = arith.constant -1.45660715E-5 : f32
    %359 = vector.broadcast %cst_153 : f32 to vector<32x64xf32>
    %360 = arith.mulf %359, %338 : vector<32x64xf32>
    %cst_154 = arith.constant -2.13374049E-4 : f32
    %361 = vector.broadcast %cst_154 : f32 to vector<32x64xf32>
    %362 = arith.addf %360, %361 : vector<32x64xf32>
    %363 = arith.mulf %362, %338 : vector<32x64xf32>
    %cst_155 = arith.constant -0.00168282702 : f32
    %364 = vector.broadcast %cst_155 : f32 to vector<32x64xf32>
    %365 = arith.addf %363, %364 : vector<32x64xf32>
    %366 = arith.mulf %365, %338 : vector<32x64xf32>
    %cst_156 = arith.constant -0.00737332925 : f32
    %367 = vector.broadcast %cst_156 : f32 to vector<32x64xf32>
    %368 = arith.addf %366, %367 : vector<32x64xf32>
    %369 = arith.mulf %368, %338 : vector<32x64xf32>
    %cst_157 = arith.constant -0.0142647391 : f32
    %370 = vector.broadcast %cst_157 : f32 to vector<32x64xf32>
    %371 = arith.addf %369, %370 : vector<32x64xf32>
    %372 = arith.divf %358, %371 : vector<32x64xf32>
    %cst_158 = arith.constant 1.000000e+00 : f32
    %373 = vector.broadcast %cst_158 : f32 to vector<32x64xf32>
    %374 = arith.addf %373, %372 : vector<32x64xf32>
    %375 = arith.mulf %331, %374 : vector<32x64xf32>
    %376 = arith.truncf %375 : vector<32x64xf32> to vector<32x64xbf16>
    %c1_159 = arith.constant 1 : index
    %c0_160 = arith.constant 0 : index
    %c0_161 = arith.constant 0 : index
    %377 = vector.load %arg15[%c1_159, %c0_160, %c0_161] : memref<2x64x32xbf16, #tpu.memory_space<vmem>>, vector<1x64x32xbf16>
    %378 = vector.shape_cast %377 : vector<1x64x32xbf16> to vector<64x32xbf16>
    %cst_162 = arith.constant dense<0.000000e+00> : vector<32x32xf32>
    %379 = tpu.matmul %376, %378, %cst_162 {dimension_numbers = #tpu.dot_dimension_numbers<[1], [0], [0], [1], [0, 0, 1, 1], [], []>} : vector<32x64xbf16>, vector<64x32xbf16>, vector<32x32xf32> -> vector<32x32xf32>
    %c1_163 = arith.constant 1 : index
    %c0_164 = arith.constant 0 : index
    %c0_165 = arith.constant 0 : index
    %380 = vector.load %arg16[%c1_163, %c0_164, %c0_165] : memref<2x1x32xf32, #tpu.memory_space<vmem>>, vector<1x1x32xf32>
    %381 = vector.shape_cast %380 : vector<1x1x32xf32> to vector<1x32xf32>
    %382 = vector.broadcast %381 : vector<1x32xf32> to vector<32x32xf32>
    %383 = arith.addf %379, %382 : vector<32x32xf32>
    %384 = arith.addf %383, %295 : vector<32x32xf32>
    %cst_166 = arith.constant dense<0xFF800000> : vector<32xf32>
    %385 = vector.multi_reduction <maximumf>, %384, %cst_166 [0] : vector<32x32xf32> to vector<32xf32>
    %386 = vector.shape_cast %385 : vector<32xf32> to vector<1x32xf32>
    %c0_167 = arith.constant 0 : index
    %c0_168 = arith.constant 0 : index
    %387 = vector.load %arg17[%c0_167, %c0_168] : memref<1x32xf32, #tpu.memory_space<vmem>>, vector<1x32xf32>
    %c0_169 = arith.constant 0 : index
    %c0_170 = arith.constant 0 : index
    %388 = vector.load %arg18[%c0_169, %c0_170] : memref<1x32xf32, #tpu.memory_space<vmem>>, vector<1x32xf32>
    %cst_171 = arith.constant dense<0.000000e+00> : vector<1xf32>
    %389 = vector.multi_reduction <add>, %386, %cst_171 [1] : vector<1x32xf32> to vector<1xf32>
    %390 = vector.shape_cast %389 : vector<1xf32> to vector<1x1xf32>
    %cst_172 = arith.constant 3.200000e+01 : f32
    %391 = vector.broadcast %cst_172 : f32 to vector<1x1xf32>
    %392 = arith.divf %390, %391 : vector<1x1xf32>
    %393 = vector.broadcast %392 : vector<1x1xf32> to vector<1x32xf32>
    %394 = arith.subf %386, %393 : vector<1x32xf32>
    %395 = arith.mulf %394, %394 : vector<1x32xf32>
    %cst_173 = arith.constant dense<0.000000e+00> : vector<1xf32>
    %396 = vector.multi_reduction <add>, %395, %cst_173 [1] : vector<1x32xf32> to vector<1xf32>
    %397 = vector.shape_cast %396 : vector<1xf32> to vector<1x1xf32>
    %cst_174 = arith.constant 3.200000e+01 : f32
    %398 = vector.broadcast %cst_174 : f32 to vector<1x1xf32>
    %399 = arith.divf %397, %398 : vector<1x1xf32>
    %400 = vector.broadcast %392 : vector<1x1xf32> to vector<1x32xf32>
    %401 = arith.subf %386, %400 : vector<1x32xf32>
    %cst_175 = arith.constant 9.99999974E-6 : f32
    %402 = vector.broadcast %cst_175 : f32 to vector<1x1xf32>
    %403 = arith.addf %399, %402 : vector<1x1xf32>
    %404 = math.rsqrt %403 : vector<1x1xf32>
    %405 = vector.broadcast %404 : vector<1x1xf32> to vector<1x32xf32>
    %406 = arith.mulf %401, %405 : vector<1x32xf32>
    %407 = arith.mulf %406, %387 : vector<1x32xf32>
    %408 = arith.addf %407, %388 : vector<1x32xf32>
    %409 = arith.truncf %408 : vector<1x32xf32> to vector<1x32xbf16>
    %c0_176 = arith.constant 0 : index
    %c0_177 = arith.constant 0 : index
    %410 = vector.load %arg19[%c0_176, %c0_177] : memref<32x64xbf16, #tpu.memory_space<vmem>>, vector<32x64xbf16>
    %cst_178 = arith.constant dense<0.000000e+00> : vector<1x64xf32>
    %411 = tpu.matmul %409, %410, %cst_178 {dimension_numbers = #tpu.dot_dimension_numbers<[1], [0], [0], [1], [0, 0, 1, 1], [], []>} : vector<1x32xbf16>, vector<32x64xbf16>, vector<1x64xf32> -> vector<1x64xf32>
    %c0_179 = arith.constant 0 : index
    %c0_180 = arith.constant 0 : index
    %412 = vector.load %arg20[%c0_179, %c0_180] : memref<1x64xf32, #tpu.memory_space<vmem>>, vector<1x64xf32>
    %413 = arith.addf %411, %412 : vector<1x64xf32>
    %cst_181 = arith.constant 5.000000e-01 : f32
    %414 = vector.broadcast %cst_181 : f32 to vector<1x64xf32>
    %415 = arith.mulf %414, %413 : vector<1x64xf32>
    %cst_182 = arith.constant 0.707106769 : f32
    %416 = vector.broadcast %cst_182 : f32 to vector<1x64xf32>
    %417 = arith.mulf %413, %416 : vector<1x64xf32>
    %cst_183 = arith.constant -4.000000e+00 : f32
    %cst_184 = arith.constant 4.000000e+00 : f32
    %418 = vector.broadcast %cst_183 : f32 to vector<1x64xf32>
    %419 = arith.maximumf %418, %417 : vector<1x64xf32>
    %420 = vector.broadcast %cst_184 : f32 to vector<1x64xf32>
    %421 = arith.minimumf %420, %419 : vector<1x64xf32>
    %422 = arith.mulf %421, %421 : vector<1x64xf32>
    %cst_185 = arith.constant -2.72614237E-10 : f32
    %423 = vector.broadcast %cst_185 : f32 to vector<1x64xf32>
    %424 = arith.mulf %423, %422 : vector<1x64xf32>
    %cst_186 = arith.constant 2.77068146E-8 : f32
    %425 = vector.broadcast %cst_186 : f32 to vector<1x64xf32>
    %426 = arith.addf %424, %425 : vector<1x64xf32>
    %427 = arith.mulf %426, %422 : vector<1x64xf32>
    %cst_187 = arith.constant -2.10102394E-6 : f32
    %428 = vector.broadcast %cst_187 : f32 to vector<1x64xf32>
    %429 = arith.addf %427, %428 : vector<1x64xf32>
    %430 = arith.mulf %429, %422 : vector<1x64xf32>
    %cst_188 = arith.constant -5.69250624E-5 : f32
    %431 = vector.broadcast %cst_188 : f32 to vector<1x64xf32>
    %432 = arith.addf %430, %431 : vector<1x64xf32>
    %433 = arith.mulf %432, %422 : vector<1x64xf32>
    %cst_189 = arith.constant -7.34990637E-4 : f32
    %434 = vector.broadcast %cst_189 : f32 to vector<1x64xf32>
    %435 = arith.addf %433, %434 : vector<1x64xf32>
    %436 = arith.mulf %435, %422 : vector<1x64xf32>
    %cst_190 = arith.constant -2.954600e-03 : f32
    %437 = vector.broadcast %cst_190 : f32 to vector<1x64xf32>
    %438 = arith.addf %436, %437 : vector<1x64xf32>
    %439 = arith.mulf %438, %422 : vector<1x64xf32>
    %cst_191 = arith.constant -0.0160960332 : f32
    %440 = vector.broadcast %cst_191 : f32 to vector<1x64xf32>
    %441 = arith.addf %439, %440 : vector<1x64xf32>
    %442 = arith.mulf %441, %421 : vector<1x64xf32>
    %cst_192 = arith.constant -1.45660715E-5 : f32
    %443 = vector.broadcast %cst_192 : f32 to vector<1x64xf32>
    %444 = arith.mulf %443, %422 : vector<1x64xf32>
    %cst_193 = arith.constant -2.13374049E-4 : f32
    %445 = vector.broadcast %cst_193 : f32 to vector<1x64xf32>
    %446 = arith.addf %444, %445 : vector<1x64xf32>
    %447 = arith.mulf %446, %422 : vector<1x64xf32>
    %cst_194 = arith.constant -0.00168282702 : f32
    %448 = vector.broadcast %cst_194 : f32 to vector<1x64xf32>
    %449 = arith.addf %447, %448 : vector<1x64xf32>
    %450 = arith.mulf %449, %422 : vector<1x64xf32>
    %cst_195 = arith.constant -0.00737332925 : f32
    %451 = vector.broadcast %cst_195 : f32 to vector<1x64xf32>
    %452 = arith.addf %450, %451 : vector<1x64xf32>
    %453 = arith.mulf %452, %422 : vector<1x64xf32>
    %cst_196 = arith.constant -0.0142647391 : f32
    %454 = vector.broadcast %cst_196 : f32 to vector<1x64xf32>
    %455 = arith.addf %453, %454 : vector<1x64xf32>
    %456 = arith.divf %442, %455 : vector<1x64xf32>
    %cst_197 = arith.constant 1.000000e+00 : f32
    %457 = vector.broadcast %cst_197 : f32 to vector<1x64xf32>
    %458 = arith.addf %457, %456 : vector<1x64xf32>
    %459 = arith.mulf %415, %458 : vector<1x64xf32>
    %460 = arith.truncf %459 : vector<1x64xf32> to vector<1x64xbf16>
    %c0_198 = arith.constant 0 : index
    %c0_199 = arith.constant 0 : index
    %461 = vector.load %arg21[%c0_198, %c0_199] : memref<64x128xbf16, #tpu.memory_space<vmem>>, vector<64x128xbf16>
    %cst_200 = arith.constant dense<0.000000e+00> : vector<1x128xf32>
    %462 = tpu.matmul %460, %461, %cst_200 {dimension_numbers = #tpu.dot_dimension_numbers<[1], [0], [0], [1], [0, 0, 1, 1], [], []>} : vector<1x64xbf16>, vector<64x128xbf16>, vector<1x128xf32> -> vector<1x128xf32>
    %c0_201 = arith.constant 0 : index
    %c0_202 = arith.constant 0 : index
    %463 = vector.load %arg22[%c0_201, %c0_202] : memref<1x128xf32, #tpu.memory_space<vmem>>, vector<1x128xf32>
    %464 = arith.addf %462, %463 : vector<1x128xf32>
    %c0_203 = arith.constant 0 : index
    %c0_204 = arith.constant 0 : index
    %c0_205 = arith.constant 0 : index
    %465 = vector.load %arg23[%c0_203, %c0_204, %c0_205] : memref<1x1x128xf32, #tpu.memory_space<vmem>>, vector<1x1x128xf32>
    %466 = vector.shape_cast %465 : vector<1x1x128xf32> to vector<1x128xf32>
    %467 = vector.shape_cast %464 : vector<1x128xf32> to vector<1x1x128xf32>
    tpu.vector_store %arg23[%c0_203, %c0_204, %c0_205], %467 {strides = array<i32>} : memref<1x1x128xf32, #tpu.memory_space<vmem>>, vector<1x1x128xf32>,
    return
  }
  func.func @transform_0(%arg0: i32) -> (i32, i32, i32) {
    %c0_i32 = arith.constant 0 : i32
    %c0_i32_0 = arith.constant 0 : i32
    %c0_i32_1 = arith.constant 0 : i32
    return %arg0, %c0_i32, %c0_i32_0 : i32, i32, i32
  }
  func.func @transform_1(%arg0: i32) -> (i32, i32, i32) {
    %c0_i32 = arith.constant 0 : i32
    %c0_i32_0 = arith.constant 0 : i32
    %c0_i32_1 = arith.constant 0 : i32
    return %arg0, %c0_i32, %c0_i32_0 : i32, i32, i32
  }
  func.func @transform_2(%arg0: i32) -> (i32, i32) {
    %c0_i32 = arith.constant 0 : i32
    %c0_i32_0 = arith.constant 0 : i32
    %c0_i32_1 = arith.constant 0 : i32
    return %c0_i32, %c0_i32_0 : i32, i32
  }
  func.func @transform_3(%arg0: i32) -> (i32, i32) {
    %c0_i32 = arith.constant 0 : i32
    %c0_i32_0 = arith.constant 0 : i32
    %c0_i32_1 = arith.constant 0 : i32
    return %c0_i32, %c0_i32_0 : i32, i32
  }
  func.func @transform_4(%arg0: i32) -> (i32, i32) {
    %c0_i32 = arith.constant 0 : i32
    %c0_i32_0 = arith.constant 0 : i32
    %c0_i32_1 = arith.constant 0 : i32
    return %c0_i32, %c0_i32_0 : i32, i32
  }
  func.func @transform_5(%arg0: i32) -> (i32, i32, i32) {
    %c0_i32 = arith.constant 0 : i32
    %c0_i32_0 = arith.constant 0 : i32
    %c0_i32_1 = arith.constant 0 : i32
    %c0_i32_2 = arith.constant 0 : i32
    return %c0_i32, %c0_i32_0, %c0_i32_1 : i32, i32, i32
  }
  func.func @transform_6(%arg0: i32) -> (i32, i32, i32) {
    %c0_i32 = arith.constant 0 : i32
    %c0_i32_0 = arith.constant 0 : i32
    %c0_i32_1 = arith.constant 0 : i32
    %c0_i32_2 = arith.constant 0 : i32
    return %c0_i32, %c0_i32_0, %c0_i32_1 : i32, i32, i32
  }
  func.func @transform_7(%arg0: i32) -> (i32, i32, i32) {
    %c0_i32 = arith.constant 0 : i32
    %c0_i32_0 = arith.constant 0 : i32
    %c0_i32_1 = arith.constant 0 : i32
    %c0_i32_2 = arith.constant 0 : i32
    return %c0_i32, %c0_i32_0, %c0_i32_1 : i32, i32, i32
  }
  func.func @transform_8(%arg0: i32) -> (i32, i32, i32) {
    %c0_i32 = arith.constant 0 : i32
    %c0_i32_0 = arith.constant 0 : i32
    %c0_i32_1 = arith.constant 0 : i32
    %c0_i32_2 = arith.constant 0 : i32
    return %c0_i32, %c0_i32_0, %c0_i32_1 : i32, i32, i32
  }
  func.func @transform_9(%arg0: i32) -> (i32, i32, i32) {
    %c0_i32 = arith.constant 0 : i32
    %c0_i32_0 = arith.constant 0 : i32
    %c0_i32_1 = arith.constant 0 : i32
    %c0_i32_2 = arith.constant 0 : i32
    return %c0_i32, %c0_i32_0, %c0_i32_1 : i32, i32, i32
  }
  func.func @transform_10(%arg0: i32) -> (i32, i32, i32) {
    %c0_i32 = arith.constant 0 : i32
    %c0_i32_0 = arith.constant 0 : i32
    %c0_i32_1 = arith.constant 0 : i32
    %c0_i32_2 = arith.constant 0 : i32
    return %c0_i32, %c0_i32_0, %c0_i32_1 : i32, i32, i32
  }
  func.func @transform_11(%arg0: i32) -> (i32, i32, i32) {
    %c0_i32 = arith.constant 0 : i32
    %c0_i32_0 = arith.constant 0 : i32
    %c0_i32_1 = arith.constant 0 : i32
    %c0_i32_2 = arith.constant 0 : i32
    return %c0_i32, %c0_i32_0, %c0_i32_1 : i32, i32, i32
  }
  func.func @transform_12(%arg0: i32) -> (i32, i32, i32) {
    %c0_i32 = arith.constant 0 : i32
    %c0_i32_0 = arith.constant 0 : i32
    %c0_i32_1 = arith.constant 0 : i32
    %c0_i32_2 = arith.constant 0 : i32
    return %c0_i32, %c0_i32_0, %c0_i32_1 : i32, i32, i32
  }
  func.func @transform_13(%arg0: i32) -> (i32, i32, i32) {
    %c0_i32 = arith.constant 0 : i32
    %c0_i32_0 = arith.constant 0 : i32
    %c0_i32_1 = arith.constant 0 : i32
    %c0_i32_2 = arith.constant 0 : i32
    return %c0_i32, %c0_i32_0, %c0_i32_1 : i32, i32, i32
  }
  func.func @transform_14(%arg0: i32) -> (i32, i32, i32) {
    %c0_i32 = arith.constant 0 : i32
    %c0_i32_0 = arith.constant 0 : i32
    %c0_i32_1 = arith.constant 0 : i32
    %c0_i32_2 = arith.constant 0 : i32
    return %c0_i32, %c0_i32_0, %c0_i32_1 : i32, i32, i32
  }
  func.func @transform_15(%arg0: i32) -> (i32, i32, i32) {
    %c0_i32 = arith.constant 0 : i32
    %c0_i32_0 = arith.constant 0 : i32
    %c0_i32_1 = arith.constant 0 : i32
    %c0_i32_2 = arith.constant 0 : i32
    return %c0_i32, %c0_i32_0, %c0_i32_1 : i32, i32, i32
  }
  func.func @transform_16(%arg0: i32) -> (i32, i32) {
    %c0_i32 = arith.constant 0 : i32
    %c0_i32_0 = arith.constant 0 : i32
    %c0_i32_1 = arith.constant 0 : i32
    return %c0_i32, %c0_i32_0 : i32, i32
  }
  func.func @transform_17(%arg0: i32) -> (i32, i32) {
    %c0_i32 = arith.constant 0 : i32
    %c0_i32_0 = arith.constant 0 : i32
    %c0_i32_1 = arith.constant 0 : i32
    return %c0_i32, %c0_i32_0 : i32, i32
  }
  func.func @transform_18(%arg0: i32) -> (i32, i32) {
    %c0_i32 = arith.constant 0 : i32
    %c0_i32_0 = arith.constant 0 : i32
    %c0_i32_1 = arith.constant 0 : i32
    return %c0_i32, %c0_i32_0 : i32, i32
  }
  func.func @transform_19(%arg0: i32) -> (i32, i32) {
    %c0_i32 = arith.constant 0 : i32
    %c0_i32_0 = arith.constant 0 : i32
    %c0_i32_1 = arith.constant 0 : i32
    return %c0_i32, %c0_i32_0 : i32, i32
  }
  func.func @transform_20(%arg0: i32) -> (i32, i32) {
    %c0_i32 = arith.constant 0 : i32
    %c0_i32_0 = arith.constant 0 : i32
    %c0_i32_1 = arith.constant 0 : i32
    return %c0_i32, %c0_i32_0 : i32, i32
  }
  func.func @transform_21(%arg0: i32) -> (i32, i32) {
    %c0_i32 = arith.constant 0 : i32
    %c0_i32_0 = arith.constant 0 : i32
    %c0_i32_1 = arith.constant 0 : i32
    return %c0_i32, %c0_i32_0 : i32, i32
  }
  func.func @transform_22(%arg0: i32) -> (i32, i32, i32) {
    %c0_i32 = arith.constant 0 : i32
    %c0_i32_0 = arith.constant 0 : i32
    %c0_i32_1 = arith.constant 0 : i32
    return %arg0, %c0_i32, %c0_i32_0 : i32, i32, i32
  }
  func.func @transform_23(%arg0: i32) -> (i32, i32, i32) {
    %c0_i32 = arith.constant 0 : i32
    %c0_i32_0 = arith.constant 0 : i32
    %c0_i32_1 = arith.constant 0 : i32
    return %arg0, %c0_i32, %c0_i32_0 : i32, i32, i32
  }
  func.func @transform_24(%arg0: i32) -> (i32, i32, i32) {
    %c0_i32 = arith.constant 0 : i32
    %c0_i32_0 = arith.constant 0 : i32
    %c0_i32_1 = arith.constant 0 : i32
    return %arg0, %c0_i32, %c0_i32_0 : i32, i32, i32
  }
}

</mosaic_0001>

<llo_original>
// kernel: custom-call.8
$region0: #{custom-call.8}
  %s0 = inlined_call_operand.vmem [shape: f32[8,16], index: 0, kind: output, shape index: {}]

// kernel: sub.23
$region0: #{sub.23}
  %s0 = inlined_call_operand.vmem [shape: f32[2,4,3,8,3], index: 0, kind: input, shape index: {}]
  %s1 = inlined_call_operand.vmem [shape: f32[24,8,3], index: 1, kind: output, shape index: {}]
  $region1: #{sub.23} parent=0
    #allocation0 [shape = 'u8[98304]{0}', space=vmem, size = 0x18000, scoped, tag = 'scoped mem for input reshape']
    %s3 = ssub.s32 16, 1
    %s4 = scalar_lea.vmem %s0, 92
    %v5 = vld [vmem:[%s4] sm:%s3]
    %s6 = scalar_lea.vmem [#allocation0], 184
    %7 = vst [vmem:[%s6] sm:%s3] %v5
    %s8 = scalar_lea.vmem %s0, 88
    %v9 = vld [vmem:[%s8] sm:%s3]
    %s10 = scalar_lea.vmem [#allocation0], 176
    %11 = vst [vmem:[%s10] sm:%s3] %v9
    %s12 = scalar_lea.vmem %s0, 84
    %v13 = vld [vmem:[%s12] sm:%s3]
    %s14 = scalar_lea.vmem [#allocation0], 168
    %15 = vst [vmem:[%s14] sm:%s3] %v13
    %s16 = scalar_lea.vmem %s0, 80
    %v17 = vld [vmem:[%s16] sm:%s3]
    %s18 = scalar_lea.vmem [#allocation0], 160
    %19 = vst [vmem:[%s18] sm:%s3] %v17
    %s20 = scalar_lea.vmem %s0, 76
    %v21 = vld [vmem:[%s20] sm:%s3]
    %s22 = scalar_lea.vmem [#allocation0], 152
    %23 = vst [vmem:[%s22] sm:%s3] %v21
    %s24 = scalar_lea.vmem %s0, 72
    %v25 = vld [vmem:[%s24] sm:%s3]
    %s26 = scalar_lea.vmem [#allocation0], 144
    %27 = vst [vmem:[%s26] sm:%s3] %v25
    %s28 = scalar_lea.vmem %s0, 68
    %v29 = vld [vmem:[%s28] sm:%s3]
    %s30 = scalar_lea.vmem [#allocation0], 136
    %31 = vst [vmem:[%s30] sm:%s3] %v29
    %s32 = scalar_lea.vmem %s0, 64
    %v33 = vld [vmem:[%s32] sm:%s3]
    %s34 = scalar_lea.vmem [#allocation0], 128
    %35 = vst [vmem:[%s34] sm:%s3] %v33
    %s36 = scalar_lea.vmem %s0, 60
    %v37 = vld [vmem:[%s36] sm:%s3]
    %s38 = scalar_lea.vmem [#allocation0], 120
    %39 = vst [vmem:[%s38] sm:%s3] %v37
    %s40 = scalar_lea.vmem %s0, 56
    %v41 = vld [vmem:[%s40] sm:%s3]
    %s42 = scalar_lea.vmem [#allocation0], 112
    %43 = vst [vmem:[%s42] sm:%s3] %v41
    %s44 = scalar_lea.vmem %s0, 52
    %v45 = vld [vmem:[%s44] sm:%s3]
    %s46 = scalar_lea.vmem [#allocation0], 104
    %47 = vst [vmem:[%s46] sm:%s3] %v45
    %s48 = scalar_lea.vmem %s0, 48
    %v49 = vld [vmem:[%s48] sm:%s3]
    %s50 = scalar_lea.vmem [#allocation0], 96
    %51 = vst [vmem:[%s50] sm:%s3] %v49
    %s52 = scalar_lea.vmem %s0, 44
    %v53 = vld [vmem:[%s52] sm:%s3]
    %s54 = scalar_lea.vmem [#allocation0], 88
    %55 = vst [vmem:[%s54] sm:%s3] %v53
    %s56 = scalar_lea.vmem %s0, 40
    %v57 = vld [vmem:[%s56] sm:%s3]
    %s58 = scalar_lea.vmem [#allocation0], 80
    %59 = vst [vmem:[%s58] sm:%s3] %v57
    %s60 = scalar_lea.vmem %s0, 36
    %v61 = vld [vmem:[%s60] sm:%s3]
    %s62 = scalar_lea.vmem [#allocation0], 72
    %63 = vst [vmem:[%s62] sm:%s3] %v61
    %s64 = scalar_lea.vmem %s0, 32
    %v65 = vld [vmem:[%s64] sm:%s3]
    %s66 = scalar_lea.vmem [#allocation0], 64
    %67 = vst [vmem:[%s66] sm:%s3] %v65
    %s68 = scalar_lea.vmem %s0, 28
    %v69 = vld [vmem:[%s68] sm:%s3]
    %s70 = scalar_lea.vmem [#allocation0], 56
    %71 = vst [vmem:[%s70] sm:%s3] %v69
    %s72 = scalar_lea.vmem %s0, 24
    %v73 = vld [vmem:[%s72] sm:%s3]
    %s74 = scalar_lea.vmem [#allocation0], 48
    %75 = vst [vmem:[%s74] sm:%s3] %v73
    %s76 = scalar_lea.vmem %s0, 20
    %v77 = vld [vmem:[%s76] sm:%s3]
    %s78 = scalar_lea.vmem [#allocation0], 40
    %79 = vst [vmem:[%s78] sm:%s3] %v77
    %s80 = scalar_lea.vmem %s0, 16
    %v81 = vld [vmem:[%s80] sm:%s3]
    %s82 = scalar_lea.vmem [#allocation0], 32
    %83 = vst [vmem:[%s82] sm:%s3] %v81
    %s84 = scalar_lea.vmem %s0, 12
    %v85 = vld [vmem:[%s84] sm:%s3]
    %s86 = scalar_lea.vmem [#allocation0], 24
    %87 = vst [vmem:[%s86] sm:%s3] %v85
    %s88 = scalar_lea.vmem %s0, 8
    %v89 = vld [vmem:[%s88] sm:%s3]
    %s90 = scalar_lea.vmem [#allocation0], 16
    %91 = vst [vmem:[%s90] sm:%s3] %v89
    %s92 = scalar_lea.vmem %s0, 4
    %v93 = vld [vmem:[%s92] sm:%s3]
    %s94 = scalar_lea.vmem [#allocation0], 8
    %95 = vst [vmem:[%s94] sm:%s3] %v93
    %v96 = vld [vmem:[%s0] sm:%s3]
    %97 = vst [vmem:[#allocation0] sm:%s3] %v96
    %v98 = vld [vmem:[#allocation0] sm:$0x7]
    %vm99 = vcmask 64512
    %100 = vst.msk [vmem:[%s1] sm:$0x7] %vm99, %v98
    %s101 = scalar_lea.vmem [#allocation0], 8
    %v102 = vld [vmem:[%s101] sm:$0x7]
    %vm103 = vcmask 64512
    %s104 = scalar_lea.vmem %s1, 3
    %105 = vst.msk [vmem:[%s104] sm:$0x7] %vm103, %v102
    %s106 = scalar_lea.vmem [#allocation0], 16
    %v107 = vld [vmem:[%s106] sm:$0x7]
    %vm108 = vcmask 64512
    %s109 = scalar_lea.vmem %s1, 6
    %110 = vst.msk [vmem:[%s109] sm:$0x7] %vm108, %v107
    %s111 = scalar_lea.vmem [#allocation0], 24
    %v112 = vld [vmem:[%s111] sm:$0x7]
    %vm113 = vcmask 64512
    %s114 = scalar_lea.vmem %s1, 9
    %115 = vst.msk [vmem:[%s114] sm:$0x7] %vm113, %v112
    %s116 = scalar_lea.vmem [#allocation0], 32
    %v117 = vld [vmem:[%s116] sm:$0x7]
    %vm118 = vcmask 64512
    %s119 = scalar_lea.vmem %s1, 12
    %120 = vst.msk [vmem:[%s119] sm:$0x7] %vm118, %v117
    %s121 = scalar_lea.vmem [#allocation0], 40
    %v122 = vld [vmem:[%s121] sm:$0x7]
    %vm123 = vcmask 64512
    %s124 = scalar_lea.vmem %s1, 15
    %125 = vst.msk [vmem:[%s124] sm:$0x7] %vm123, %v122
    %s126 = scalar_lea.vmem [#allocation0], 48
    %v127 = vld [vmem:[%s126] sm:$0x7]
    %vm128 = vcmask 64512
    %s129 = scalar_lea.vmem %s1, 18
    %130 = vst.msk [vmem:[%s129] sm:$0x7] %vm128, %v127
    %s131 = scalar_lea.vmem [#allocation0], 56
    %v132 = vld [vmem:[%s131] sm:$0x7]
    %vm133 = vcmask 64512
    %s134 = scalar_lea.vmem %s1, 21
    %135 = vst.msk [vmem:[%s134] sm:$0x7] %vm133, %v132
    %s136 = scalar_lea.vmem [#allocation0], 64
    %v137 = vld [vmem:[%s136] sm:$0x7]
    %vm138 = vcmask 64512
    %s139 = scalar_lea.vmem %s1, 24
    %140 = vst.msk [vmem:[%s139] sm:$0x7] %vm138, %v137
    %s141 = scalar_lea.vmem [#allocation0], 72
    %v142 = vld [vmem:[%s141] sm:$0x7]
    %vm143 = vcmask 64512
    %s144 = scalar_lea.vmem %s1, 27
    %145 = vst.msk [vmem:[%s144] sm:$0x7] %vm143, %v142
    %s146 = scalar_lea.vmem [#allocation0], 80
    %v147 = vld [vmem:[%s146] sm:$0x7]
    %vm148 = vcmask 64512
    %s149 = scalar_lea.vmem %s1, 30
    %150 = vst.msk [vmem:[%s149] sm:$0x7] %vm148, %v147
    %s151 = scalar_lea.vmem [#allocation0], 88
    %v152 = vld [vmem:[%s151] sm:$0x7]
    %vm153 = vcmask 64512
    %s154 = scalar_lea.vmem %s1, 33
    %155 = vst.msk [vmem:[%s154] sm:$0x7] %vm153, %v152
    %s156 = scalar_lea.vmem [#allocation0], 96
    %v157 = vld [vmem:[%s156] sm:$0x7]
    %vm158 = vcmask 64512
    %s159 = scalar_lea.vmem %s1, 36
    %160 = vst.msk [vmem:[%s159] sm:$0x7] %vm158, %v157
    %s161 = scalar_lea.vmem [#allocation0], 104
    %v162 = vld [vmem:[%s161] sm:$0x7]
    %vm163 = vcmask 64512
    %s164 = scalar_lea.vmem %s1, 39
    %165 = vst.msk [vmem:[%s164] sm:$0x7] %vm163, %v162
    %s166 = scalar_lea.vmem [#allocation0], 112
    %v167 = vld [vmem:[%s166] sm:$0x7]
    %vm168 = vcmask 64512
    %s169 = scalar_lea.vmem %s1, 42
    %170 = vst.msk [vmem:[%s169] sm:$0x7] %vm168, %v167
    %s171 = scalar_lea.vmem [#allocation0], 120
    %v172 = vld [vmem:[%s171] sm:$0x7]
    %vm173 = vcmask 64512
    %s174 = scalar_lea.vmem %s1, 45
    %175 = vst.msk [vmem:[%s174] sm:$0x7] %vm173, %v172
    %s176 = scalar_lea.vmem [#allocation0], 128
    %v177 = vld [vmem:[%s176] sm:$0x7]
    %vm178 = vcmask 64512
    %s179 = scalar_lea.vmem %s1, 48
    %180 = vst.msk [vmem:[%s179] sm:$0x7] %vm178, %v177
    %s181 = scalar_lea.vmem [#allocation0], 136
    %v182 = vld [vmem:[%s181] sm:$0x7]
    %vm183 = vcmask 64512
    %s184 = scalar_lea.vmem %s1, 51
    %185 = vst.msk [vmem:[%s184] sm:$0x7] %vm183, %v182
    %s186 = scalar_lea.vmem [#allocation0], 144
    %v187 = vld [vmem:[%s186] sm:$0x7]
    %vm188 = vcmask 64512
    %s189 = scalar_lea.vmem %s1, 54
    %190 = vst.msk [vmem:[%s189] sm:$0x7] %vm188, %v187
    %s191 = scalar_lea.vmem [#allocation0], 152
    %v192 = vld [vmem:[%s191] sm:$0x7]
    %vm193 = vcmask 64512
    %s194 = scalar_lea.vmem %s1, 57
    %195 = vst.msk [vmem:[%s194] sm:$0x7] %vm193, %v192
    %s196 = scalar_lea.vmem [#allocation0], 160
    %v197 = vld [vmem:[%s196] sm:$0x7]
    %vm198 = vcmask 64512
    %s199 = scalar_lea.vmem %s1, 60
    %200 = vst.msk [vmem:[%s199] sm:$0x7] %vm198, %v197
    %s201 = scalar_lea.vmem [#allocation0], 168
    %v202 = vld [vmem:[%s201] sm:$0x7]
    %vm203 = vcmask 64512
    %s204 = scalar_lea.vmem %s1, 63
    %205 = vst.msk [vmem:[%s204] sm:$0x7] %vm203, %v202
    %s206 = scalar_lea.vmem [#allocation0], 176
    %v207 = vld [vmem:[%s206] sm:$0x7]
    %vm208 = vcmask 64512
    %s209 = scalar_lea.vmem %s1, 66
    %210 = vst.msk [vmem:[%s209] sm:$0x7] %vm208, %v207
    %s211 = scalar_lea.vmem [#allocation0], 184
    %v212 = vld [vmem:[%s211] sm:$0x7]
    %vm213 = vcmask 64512
    %s214 = scalar_lea.vmem %s1, 69
    %215 = vst.msk [vmem:[%s214] sm:$0x7] %vm213, %v212

// kernel: _lambda_.1
$region0: #{_lambda_.1}
  #allocation0 [shape = 'u32[]', space=smem, size = 0x4, offset = 0x4, fixed_abs, tag = 'smem constant byte address 0x4 - core index']
  #allocation1 [shape = 'u32[72,128]{1,0:T(1,128)}', space=vmem, size = 0x9000, scoped, tag = 'internal scratch']
  %s0 = inlined_call_operand.vmem [shape: bf16[2,384,8], index: 0, kind: input, shape index: {}]
  %s1 = inlined_call_operand.vmem [shape: bf16[2,32,4], index: 1, kind: input, shape index: {}]
  %s2 = inlined_call_operand.vmem [shape: bf16[8,32], index: 2, kind: input, shape index: {}]
  %s3 = inlined_call_operand.vmem [shape: bf16[4,32], index: 3, kind: input, shape index: {}]
  %s4 = inlined_call_operand.vmem [shape: f32[1,32], index: 4, kind: input, shape index: {}]
  %s5 = inlined_call_operand.vmem [shape: f32[2,1,32], index: 5, kind: input, shape index: {}]
  %s6 = inlined_call_operand.vmem [shape: f32[2,1,32], index: 6, kind: input, shape index: {}]
  %s7 = inlined_call_operand.vmem [shape: bf16[2,32,96], index: 7, kind: input, shape index: {}]
  %s8 = inlined_call_operand.vmem [shape: bf16[2,32,32], index: 8, kind: input, shape index: {}]
  %s9 = inlined_call_operand.vmem [shape: f32[2,1,32], index: 9, kind: input, shape index: {}]
  %s10 = inlined_call_operand.vmem [shape: f32[2,1,32], index: 10, kind: input, shape index: {}]
  %s11 = inlined_call_operand.vmem [shape: f32[2,1,32], index: 11, kind: input, shape index: {}]
  %s12 = inlined_call_operand.vmem [shape: bf16[2,32,64], index: 12, kind: input, shape index: {}]
  %s13 = inlined_call_operand.vmem [shape: f32[2,1,64], index: 13, kind: input, shape index: {}]
  %s14 = inlined_call_operand.vmem [shape: bf16[2,64,32], index: 14, kind: input, shape index: {}]
  %s15 = inlined_call_operand.vmem [shape: f32[2,1,32], index: 15, kind: input, shape index: {}]
  %s16 = inlined_call_operand.vmem [shape: f32[1,32], index: 16, kind: input, shape index: {}]
  %s17 = inlined_call_operand.vmem [shape: f32[1,32], index: 17, kind: input, shape index: {}]
  %s18 = inlined_call_operand.vmem [shape: bf16[32,64], index: 18, kind: input, shape index: {}]
  %s19 = inlined_call_operand.vmem [shape: f32[1,64], index: 19, kind: input, shape index: {}]
  %s20 = inlined_call_operand.vmem [shape: bf16[64,128], index: 20, kind: input, shape index: {}]
  %s21 = inlined_call_operand.vmem [shape: f32[1,128], index: 21, kind: input, shape index: {}]
  %s22 = inlined_call_operand.hbm [shape: f32[2,1,128], index: 22, kind: output, shape index: {0}]
  %s23 = inlined_call_operand.hbm [shape: f32[2,32,32], index: 23, kind: output, shape index: {1}]
  %s24 = inlined_call_operand.hbm [shape: f32[2,32,32], index: 24, kind: output, shape index: {2}]
  %25 = xla_tuple %s22, %s23, %s24
  %s26 = sld [smem:[#allocation0]]
  $region137: #{_lambda_.1} parent=0
    _
  %s28 = ssub.s32 1, %s26
  %s29 = scalar_select 0, %s28, %s26
  $region1: #{_lambda_.1} parent=0
    #allocation2 [shape = 'u8[1024]{0}', space=vmem, size = 0x400, scoped, tag = 'output window, operand 0']
    #allocation3 [shape = 's32[2]{0}', space=sflag, size = 0x8, scoped, tag = 'scoped memory for _lambda_.1']
    #allocation4 [shape = 'u8[32768]{0}', space=vmem, size = 0x8000, scoped, tag = 'output window, operand 1']
    #allocation5 [shape = 's32[2]{0}', space=sflag, size = 0x8, scoped, tag = 'scoped memory for _lambda_.1']
    #allocation6 [shape = 'u8[32768]{0}', space=vmem, size = 0x8000, scoped, tag = 'output window, operand 2']
    %30 = vsyncpa [#allocation3], 0
    %s31 = scalar_lea.sflag [#allocation3], 1
    %32 = vsyncpa %s31, 0
    %33 = vsyncpa [#allocation5], 0
    %s34 = scalar_lea.sflag [#allocation5], 1
    %35 = vsyncpa %s34, 0
    loop: start=0, step=1, limit=4
    $region2: #{_lambda_.1} parent=1 // loop_pre_header
      _
    $region3: #{_lambda_.1} parent=1 // loop_header
      %s37 = sphi 0, %s41
      %p38 = scmp.ge.s32.totalorder %s37, 4
      %s47 = sphi 0, %s49
      %s50 = sphi 0, %s47
      %s51 = sphi 0, %s50
      %s67 = sphi 0, %s51
      %s73 = sphi 0, %s75
      %s76 = sphi 0, %s73
      %s77 = sphi 0, %s76
      %s93 = sphi 0, %s77
      %s97 = sphi 0, %s97
      %s99 = sphi 0, %s97
      %s100 = sphi 0, %s99
      %s114 = sphi 0, %s100
      %s118 = sphi 0, %s118
      %s120 = sphi 0, %s118
      %s121 = sphi 0, %s120
      %s135 = sphi 0, %s121
      %s139 = sphi 0, %s139
      %s141 = sphi 0, %s139
      %s142 = sphi 0, %s141
      %s156 = sphi 0, %s142
      %s160 = sphi 0, %s160
      %s162 = sphi 0, %s160
      %s163 = sphi 0, %s162
      %s177 = sphi 0, %s163
      %s181 = sphi 0, %s181
      %s183 = sphi 0, %s181
      %s184 = sphi 0, %s183
      %s198 = sphi 0, %s184
      %s202 = sphi 0, %s202
      %s204 = sphi 0, %s202
      %s205 = sphi 0, %s204
      %s219 = sphi 0, %s205
      %s223 = sphi 0, %s223
      %s225 = sphi 0, %s223
      %s226 = sphi 0, %s225
      %s240 = sphi 0, %s226
      %s244 = sphi 0, %s244
      %s246 = sphi 0, %s244
      %s247 = sphi 0, %s246
      %s261 = sphi 0, %s247
      %s265 = sphi 0, %s265
      %s267 = sphi 0, %s265
      %s268 = sphi 0, %s267
      %s282 = sphi 0, %s268
      %s286 = sphi 0, %s286
      %s288 = sphi 0, %s286
      %s289 = sphi 0, %s288
      %s303 = sphi 0, %s289
      %s307 = sphi 0, %s307
      %s309 = sphi 0, %s307
      %s310 = sphi 0, %s309
      %s324 = sphi 0, %s310
      %s328 = sphi 0, %s328
      %s330 = sphi 0, %s328
      %s331 = sphi 0, %s330
      %s345 = sphi 0, %s331
      %s349 = sphi 0, %s349
      %s351 = sphi 0, %s349
      %s352 = sphi 0, %s351
      %s366 = sphi 0, %s352
      %s370 = sphi 0, %s370
      %s372 = sphi 0, %s370
      %s373 = sphi 0, %s372
      %s387 = sphi 0, %s373
      %s391 = sphi 0, %s391
      %s393 = sphi 0, %s391
      %s394 = sphi 0, %s393
      %s408 = sphi 0, %s394
      %s412 = sphi 0, %s412
      %s414 = sphi 0, %s412
      %s415 = sphi 0, %s414
      %s429 = sphi 0, %s415
      %s433 = sphi 0, %s433
      %s435 = sphi 0, %s433
      %s436 = sphi 0, %s435
      %s450 = sphi 0, %s436
      %s454 = sphi 0, %s454
      %s456 = sphi 0, %s454
      %s457 = sphi 0, %s456
      %s471 = sphi 0, %s457
      %s475 = sphi 0, %s475
      %s477 = sphi 0, %s475
      %s478 = sphi 0, %s477
      %s492 = sphi 0, %s478
      %s496 = sphi 0, %s496
      %s498 = sphi 0, %s496
      %s499 = sphi 0, %s498
      %s513 = sphi 0, %s499
      %s519 = sphi 0, %s521
      %s522 = sphi 0, %s519
      %s523 = sphi 0, %s522
      %s539 = sphi 0, %s523
      %s545 = sphi 0, %s547
      %s548 = sphi 0, %s545
      %s549 = sphi 0, %s548
      %s565 = sphi 0, %s549
      %s571 = sphi 0, %s573
      %s574 = sphi 0, %s571
      %s575 = sphi 0, %s574
      %s591 = sphi 0, %s575
    $region4: #{_lambda_.1} parent=1 // loop_header_branch
      %40 = sbr.rel (%p38) target = $region8
    $region5: #{_lambda_.1} parent=1 // loop_body
      %s42 = ssub.s32 %s37, 1
      %s43 = ssub.s32 %s37, 2
      %s44 = sadd.s32 %s37, 1
      %s45 = ssub.s32 %s37, %s44
      %p46 = scmp.eq.s32.totalorder %s45, 0
      %s48 = sadd.s32 %s47, 1
      %s49 = scalar_select %p46, %s47, %s48
      %p52 = pneg %p46
      %p53 = scmp.eq.s32.totalorder %s37, 1
      %p54 = por %p52, %p53
      %p55 = scmp.ne.s32.totalorder %s47, %s50
      %p56 = scmp.eq.s32.totalorder %s37, 0
      %p57 = por %p55, %p56
      %p58 = scmp.ne.s32.totalorder %s47, %s50
      %p59 = scmp.eq.s32.totalorder %s42, 1
      %p60 = por %p58, %p59
      %p61 = scmp.ne.s32.totalorder %s50, %s51
      %p62 = scmp.eq.s32.totalorder %s42, 0
      %p63 = por %p61, %p62
      %p64 = scmp.ne.s32.totalorder %s50, %s51
      %p65 = scmp.eq.s32.totalorder %s43, 1
      %p66 = por %p64, %p65
      %p68 = scmp.ne.s32.totalorder %s51, %s67
      %p69 = scmp.eq.s32.totalorder %s43, 0
      %p70 = por %p68, %p69
      %s71 = ssub.s32 %s37, %s44
      %p72 = scmp.eq.s32.totalorder %s71, 0
      %s74 = sadd.s32 %s73, 1
      %s75 = scalar_select %p72, %s73, %s74
      %p78 = pneg %p72
      %p79 = scmp.eq.s32.totalorder %s37, 1
      %p80 = por %p78, %p79
      %p81 = scmp.ne.s32.totalorder %s73, %s76
      %p82 = scmp.eq.s32.totalorder %s37, 0
      %p83 = por %p81, %p82
      %p84 = scmp.ne.s32.totalorder %s73, %s76
      %p85 = scmp.eq.s32.totalorder %s42, 1
      %p86 = por %p84, %p85
      %p87 = scmp.ne.s32.totalorder %s76, %s77
      %p88 = scmp.eq.s32.totalorder %s42, 0
      %p89 = por %p87, %p88
      %p90 = scmp.ne.s32.totalorder %s76, %s77
      %p91 = scmp.eq.s32.totalorder %s43, 1
      %p92 = por %p90, %p91
      %p94 = scmp.ne.s32.totalorder %s77, %s93
      %p95 = scmp.eq.s32.totalorder %s43, 0
      %p96 = por %p94, %p95
      %s98 = sadd.s32 %s97, 1
      %p101 = scmp.eq.s32.totalorder %s37, 1
      %p102 = scmp.ne.s32.totalorder %s97, %s99
      %p103 = scmp.eq.s32.totalorder %s37, 0
      %p104 = por %p102, %p103
      %p105 = scmp.ne.s32.totalorder %s97, %s99
      %p106 = scmp.eq.s32.totalorder %s42, 1
      %p107 = por %p105, %p106
      %p108 = scmp.ne.s32.totalorder %s99, %s100
      %p109 = scmp.eq.s32.totalorder %s42, 0
      %p110 = por %p108, %p109
      %p111 = scmp.ne.s32.totalorder %s99, %s100
      %p112 = scmp.eq.s32.totalorder %s43, 1
      %p113 = por %p111, %p112
      %p115 = scmp.ne.s32.totalorder %s100, %s114
      %p116 = scmp.eq.s32.totalorder %s43, 0
      %p117 = por %p115, %p116
      %s119 = sadd.s32 %s118, 1
      %p122 = scmp.eq.s32.totalorder %s37, 1
      %p123 = scmp.ne.s32.totalorder %s118, %s120
      %p124 = scmp.eq.s32.totalorder %s37, 0
      %p125 = por %p123, %p124
      %p126 = scmp.ne.s32.totalorder %s118, %s120
      %p127 = scmp.eq.s32.totalorder %s42, 1
      %p128 = por %p126, %p127
      %p129 = scmp.ne.s32.totalorder %s120, %s121
      %p130 = scmp.eq.s32.totalorder %s42, 0
      %p131 = por %p129, %p130
      %p132 = scmp.ne.s32.totalorder %s120, %s121
      %p133 = scmp.eq.s32.totalorder %s43, 1
      %p134 = por %p132, %p133
      %p136 = scmp.ne.s32.totalorder %s121, %s135
      %p137 = scmp.eq.s32.totalorder %s43, 0
      %p138 = por %p136, %p137
      %s140 = sadd.s32 %s139, 1
      %p143 = scmp.eq.s32.totalorder %s37, 1
      %p144 = scmp.ne.s32.totalorder %s139, %s141
      %p145 = scmp.eq.s32.totalorder %s37, 0
      %p146 = por %p144, %p145
      %p147 = scmp.ne.s32.totalorder %s139, %s141
      %p148 = scmp.eq.s32.totalorder %s42, 1
      %p149 = por %p147, %p148
      %p150 = scmp.ne.s32.totalorder %s141, %s142
      %p151 = scmp.eq.s32.totalorder %s42, 0
      %p152 = por %p150, %p151
      %p153 = scmp.ne.s32.totalorder %s141, %s142
      %p154 = scmp.eq.s32.totalorder %s43, 1
      %p155 = por %p153, %p154
      %p157 = scmp.ne.s32.totalorder %s142, %s156
      %p158 = scmp.eq.s32.totalorder %s43, 0
      %p159 = por %p157, %p158
      %s161 = sadd.s32 %s160, 1
      %p164 = scmp.eq.s32.totalorder %s37, 1
      %p165 = scmp.ne.s32.totalorder %s160, %s162
      %p166 = scmp.eq.s32.totalorder %s37, 0
      %p167 = por %p165, %p166
      %p168 = scmp.ne.s32.totalorder %s160, %s162
      %p169 = scmp.eq.s32.totalorder %s42, 1
      %p170 = por %p168, %p169
      %p171 = scmp.ne.s32.totalorder %s162, %s163
      %p172 = scmp.eq.s32.totalorder %s42, 0
      %p173 = por %p171, %p172
      %p174 = scmp.ne.s32.totalorder %s162, %s163
      %p175 = scmp.eq.s32.totalorder %s43, 1
      %p176 = por %p174, %p175
      %p178 = scmp.ne.s32.totalorder %s163, %s177
      %p179 = scmp.eq.s32.totalorder %s43, 0
      %p180 = por %p178, %p179
      %s182 = sadd.s32 %s181, 1
      %p185 = scmp.eq.s32.totalorder %s37, 1
      %p186 = scmp.ne.s32.totalorder %s181, %s183
      %p187 = scmp.eq.s32.totalorder %s37, 0
      %p188 = por %p186, %p187
      %p189 = scmp.ne.s32.totalorder %s181, %s183
      %p190 = scmp.eq.s32.totalorder %s42, 1
      %p191 = por %p189, %p190
      %p192 = scmp.ne.s32.totalorder %s183, %s184
      %p193 = scmp.eq.s32.totalorder %s42, 0
      %p194 = por %p192, %p193
      %p195 = scmp.ne.s32.totalorder %s183, %s184
      %p196 = scmp.eq.s32.totalorder %s43, 1
      %p197 = por %p195, %p196
      %p199 = scmp.ne.s32.totalorder %s184, %s198
      %p200 = scmp.eq.s32.totalorder %s43, 0
      %p201 = por %p199, %p200
      %s203 = sadd.s32 %s202, 1
      %p206 = scmp.eq.s32.totalorder %s37, 1
      %p207 = scmp.ne.s32.totalorder %s202, %s204
      %p208 = scmp.eq.s32.totalorder %s37, 0
      %p209 = por %p207, %p208
      %p210 = scmp.ne.s32.totalorder %s202, %s204
      %p211 = scmp.eq.s32.totalorder %s42, 1
      %p212 = por %p210, %p211
      %p213 = scmp.ne.s32.totalorder %s204, %s205
      %p214 = scmp.eq.s32.totalorder %s42, 0
      %p215 = por %p213, %p214
      %p216 = scmp.ne.s32.totalorder %s204, %s205
      %p217 = scmp.eq.s32.totalorder %s43, 1
      %p218 = por %p216, %p217
      %p220 = scmp.ne.s32.totalorder %s205, %s219
      %p221 = scmp.eq.s32.totalorder %s43, 0
      %p222 = por %p220, %p221
      %s224 = sadd.s32 %s223, 1
      %p227 = scmp.eq.s32.totalorder %s37, 1
      %p228 = scmp.ne.s32.totalorder %s223, %s225
      %p229 = scmp.eq.s32.totalorder %s37, 0
      %p230 = por %p228, %p229
      %p231 = scmp.ne.s32.totalorder %s223, %s225
      %p232 = scmp.eq.s32.totalorder %s42, 1
      %p233 = por %p231, %p232
      %p234 = scmp.ne.s32.totalorder %s225, %s226
      %p235 = scmp.eq.s32.totalorder %s42, 0
      %p236 = por %p234, %p235
      %p237 = scmp.ne.s32.totalorder %s225, %s226
      %p238 = scmp.eq.s32.totalorder %s43, 1
      %p239 = por %p237, %p238
      %p241 = scmp.ne.s32.totalorder %s226, %s240
      %p242 = scmp.eq.s32.totalorder %s43, 0
      %p243 = por %p241, %p242
      %s245 = sadd.s32 %s244, 1
      %p248 = scmp.eq.s32.totalorder %s37, 1
      %p249 = scmp.ne.s32.totalorder %s244, %s246
      %p250 = scmp.eq.s32.totalorder %s37, 0
      %p251 = por %p249, %p250
      %p252 = scmp.ne.s32.totalorder %s244, %s246
      %p253 = scmp.eq.s32.totalorder %s42, 1
      %p254 = por %p252, %p253
      %p255 = scmp.ne.s32.totalorder %s246, %s247
      %p256 = scmp.eq.s32.totalorder %s42, 0
      %p257 = por %p255, %p256
      %p258 = scmp.ne.s32.totalorder %s246, %s247
      %p259 = scmp.eq.s32.totalorder %s43, 1
      %p260 = por %p258, %p259
      %p262 = scmp.ne.s32.totalorder %s247, %s261
      %p263 = scmp.eq.s32.totalorder %s43, 0
      %p264 = por %p262, %p263
      %s266 = sadd.s32 %s265, 1
      %p269 = scmp.eq.s32.totalorder %s37, 1
      %p270 = scmp.ne.s32.totalorder %s265, %s267
      %p271 = scmp.eq.s32.totalorder %s37, 0
      %p272 = por %p270, %p271
      %p273 = scmp.ne.s32.totalorder %s265, %s267
      %p274 = scmp.eq.s32.totalorder %s42, 1
      %p275 = por %p273, %p274
      %p276 = scmp.ne.s32.totalorder %s267, %s268
      %p277 = scmp.eq.s32.totalorder %s42, 0
      %p278 = por %p276, %p277
      %p279 = scmp.ne.s32.totalorder %s267, %s268
      %p280 = scmp.eq.s32.totalorder %s43, 1
      %p281 = por %p279, %p280
      %p283 = scmp.ne.s32.totalorder %s268, %s282
      %p284 = scmp.eq.s32.totalorder %s43, 0
      %p285 = por %p283, %p284
      %s287 = sadd.s32 %s286, 1
      %p290 = scmp.eq.s32.totalorder %s37, 1
      %p291 = scmp.ne.s32.totalorder %s286, %s288
      %p292 = scmp.eq.s32.totalorder %s37, 0
      %p293 = por %p291, %p292
      %p294 = scmp.ne.s32.totalorder %s286, %s288
      %p295 = scmp.eq.s32.totalorder %s42, 1
      %p296 = por %p294, %p295
      %p297 = scmp.ne.s32.totalorder %s288, %s289
      %p298 = scmp.eq.s32.totalorder %s42, 0
      %p299 = por %p297, %p298
      %p300 = scmp.ne.s32.totalorder %s288, %s289
      %p301 = scmp.eq.s32.totalorder %s43, 1
      %p302 = por %p300, %p301
      %p304 = scmp.ne.s32.totalorder %s289, %s303
      %p305 = scmp.eq.s32.totalorder %s43, 0
      %p306 = por %p304, %p305
      %s308 = sadd.s32 %s307, 1
      %p311 = scmp.eq.s32.totalorder %s37, 1
      %p312 = scmp.ne.s32.totalorder %s307, %s309
      %p313 = scmp.eq.s32.totalorder %s37, 0
      %p314 = por %p312, %p313
      %p315 = scmp.ne.s32.totalorder %s307, %s309
      %p316 = scmp.eq.s32.totalorder %s42, 1
      %p317 = por %p315, %p316
      %p318 = scmp.ne.s32.totalorder %s309, %s310
      %p319 = scmp.eq.s32.totalorder %s42, 0
      %p320 = por %p318, %p319
      %p321 = scmp.ne.s32.totalorder %s309, %s310
      %p322 = scmp.eq.s32.totalorder %s43, 1
      %p323 = por %p321, %p322
      %p325 = scmp.ne.s32.totalorder %s310, %s324
      %p326 = scmp.eq.s32.totalorder %s43, 0
      %p327 = por %p325, %p326
      %s329 = sadd.s32 %s328, 1
      %p332 = scmp.eq.s32.totalorder %s37, 1
      %p333 = scmp.ne.s32.totalorder %s328, %s330
      %p334 = scmp.eq.s32.totalorder %s37, 0
      %p335 = por %p333, %p334
      %p336 = scmp.ne.s32.totalorder %s328, %s330
      %p337 = scmp.eq.s32.totalorder %s42, 1
      %p338 = por %p336, %p337
      %p339 = scmp.ne.s32.totalorder %s330, %s331
      %p340 = scmp.eq.s32.totalorder %s42, 0
      %p341 = por %p339, %p340
      %p342 = scmp.ne.s32.totalorder %s330, %s331
      %p343 = scmp.eq.s32.totalorder %s43, 1
      %p344 = por %p342, %p343
      %p346 = scmp.ne.s32.totalorder %s331, %s345
      %p347 = scmp.eq.s32.totalorder %s43, 0
      %p348 = por %p346, %p347
      %s350 = sadd.s32 %s349, 1
      %p353 = scmp.eq.s32.totalorder %s37, 1
      %p354 = scmp.ne.s32.totalorder %s349, %s351
      %p355 = scmp.eq.s32.totalorder %s37, 0
      %p356 = por %p354, %p355
      %p357 = scmp.ne.s32.totalorder %s349, %s351
      %p358 = scmp.eq.s32.totalorder %s42, 1
      %p359 = por %p357, %p358
      %p360 = scmp.ne.s32.totalorder %s351, %s352
      %p361 = scmp.eq.s32.totalorder %s42, 0
      %p362 = por %p360, %p361
      %p363 = scmp.ne.s32.totalorder %s351, %s352
      %p364 = scmp.eq.s32.totalorder %s43, 1
      %p365 = por %p363, %p364
      %p367 = scmp.ne.s32.totalorder %s352, %s366
      %p368 = scmp.eq.s32.totalorder %s43, 0
      %p369 = por %p367, %p368
      %s371 = sadd.s32 %s370, 1
      %p374 = scmp.eq.s32.totalorder %s37, 1
      %p375 = scmp.ne.s32.totalorder %s370, %s372
      %p376 = scmp.eq.s32.totalorder %s37, 0
      %p377 = por %p375, %p376
      %p378 = scmp.ne.s32.totalorder %s370, %s372
      %p379 = scmp.eq.s32.totalorder %s42, 1
      %p380 = por %p378, %p379
      %p381 = scmp.ne.s32.totalorder %s372, %s373
      %p382 = scmp.eq.s32.totalorder %s42, 0
      %p383 = por %p381, %p382
      %p384 = scmp.ne.s32.totalorder %s372, %s373
      %p385 = scmp.eq.s32.totalorder %s43, 1
      %p386 = por %p384, %p385
      %p388 = scmp.ne.s32.totalorder %s373, %s387
      %p389 = scmp.eq.s32.totalorder %s43, 0
      %p390 = por %p388, %p389
      %s392 = sadd.s32 %s391, 1
      %p395 = scmp.eq.s32.totalorder %s37, 1
      %p396 = scmp.ne.s32.totalorder %s391, %s393
      %p397 = scmp.eq.s32.totalorder %s37, 0
      %p398 = por %p396, %p397
      %p399 = scmp.ne.s32.totalorder %s391, %s393
      %p400 = scmp.eq.s32.totalorder %s42, 1
      %p401 = por %p399, %p400
      %p402 = scmp.ne.s32.totalorder %s393, %s394
      %p403 = scmp.eq.s32.totalorder %s42, 0
      %p404 = por %p402, %p403
      %p405 = scmp.ne.s32.totalorder %s393, %s394
      %p406 = scmp.eq.s32.totalorder %s43, 1
      %p407 = por %p405, %p406
      %p409 = scmp.ne.s32.totalorder %s394, %s408
      %p410 = scmp.eq.s32.totalorder %s43, 0
      %p411 = por %p409, %p410
      %s413 = sadd.s32 %s412, 1
      %p416 = scmp.eq.s32.totalorder %s37, 1
      %p417 = scmp.ne.s32.totalorder %s412, %s414
      %p418 = scmp.eq.s32.totalorder %s37, 0
      %p419 = por %p417, %p418
      %p420 = scmp.ne.s32.totalorder %s412, %s414
      %p421 = scmp.eq.s32.totalorder %s42, 1
      %p422 = por %p420, %p421
      %p423 = scmp.ne.s32.totalorder %s414, %s415
      %p424 = scmp.eq.s32.totalorder %s42, 0
      %p425 = por %p423, %p424
      %p426 = scmp.ne.s32.totalorder %s414, %s415
      %p427 = scmp.eq.s32.totalorder %s43, 1
      %p428 = por %p426, %p427
      %p430 = scmp.ne.s32.totalorder %s415, %s429
      %p431 = scmp.eq.s32.totalorder %s43, 0
      %p432 = por %p430, %p431
      %s434 = sadd.s32 %s433, 1
      %p437 = scmp.eq.s32.totalorder %s37, 1
      %p438 = scmp.ne.s32.totalorder %s433, %s435
      %p439 = scmp.eq.s32.totalorder %s37, 0
      %p440 = por %p438, %p439
      %p441 = scmp.ne.s32.totalorder %s433, %s435
      %p442 = scmp.eq.s32.totalorder %s42, 1
      %p443 = por %p441, %p442
      %p444 = scmp.ne.s32.totalorder %s435, %s436
      %p445 = scmp.eq.s32.totalorder %s42, 0
      %p446 = por %p444, %p445
      %p447 = scmp.ne.s32.totalorder %s435, %s436
      %p448 = scmp.eq.s32.totalorder %s43, 1
      %p449 = por %p447, %p448
      %p451 = scmp.ne.s32.totalorder %s436, %s450
      %p452 = scmp.eq.s32.totalorder %s43, 0
      %p453 = por %p451, %p452
      %s455 = sadd.s32 %s454, 1
      %p458 = scmp.eq.s32.totalorder %s37, 1
      %p459 = scmp.ne.s32.totalorder %s454, %s456
      %p460 = scmp.eq.s32.totalorder %s37, 0
      %p461 = por %p459, %p460
      %p462 = scmp.ne.s32.totalorder %s454, %s456
      %p463 = scmp.eq.s32.totalorder %s42, 1
      %p464 = por %p462, %p463
      %p465 = scmp.ne.s32.totalorder %s456, %s457
      %p466 = scmp.eq.s32.totalorder %s42, 0
      %p467 = por %p465, %p466
      %p468 = scmp.ne.s32.totalorder %s456, %s457
      %p469 = scmp.eq.s32.totalorder %s43, 1
      %p470 = por %p468, %p469
      %p472 = scmp.ne.s32.totalorder %s457, %s471
      %p473 = scmp.eq.s32.totalorder %s43, 0
      %p474 = por %p472, %p473
      %s476 = sadd.s32 %s475, 1
      %p479 = scmp.eq.s32.totalorder %s37, 1
      %p480 = scmp.ne.s32.totalorder %s475, %s477
      %p481 = scmp.eq.s32.totalorder %s37, 0
      %p482 = por %p480, %p481
      %p483 = scmp.ne.s32.totalorder %s475, %s477
      %p484 = scmp.eq.s32.totalorder %s42, 1
      %p485 = por %p483, %p484
      %p486 = scmp.ne.s32.totalorder %s477, %s478
      %p487 = scmp.eq.s32.totalorder %s42, 0
      %p488 = por %p486, %p487
      %p489 = scmp.ne.s32.totalorder %s477, %s478
      %p490 = scmp.eq.s32.totalorder %s43, 1
      %p491 = por %p489, %p490
      %p493 = scmp.ne.s32.totalorder %s478, %s492
      %p494 = scmp.eq.s32.totalorder %s43, 0
      %p495 = por %p493, %p494
      %s497 = sadd.s32 %s496, 1
      %p500 = scmp.eq.s32.totalorder %s37, 1
      %p501 = scmp.ne.s32.totalorder %s496, %s498
      %p502 = scmp.eq.s32.totalorder %s37, 0
      %p503 = por %p501, %p502
      %p504 = scmp.ne.s32.totalorder %s496, %s498
      %p505 = scmp.eq.s32.totalorder %s42, 1
      %p506 = por %p504, %p505
      %p507 = scmp.ne.s32.totalorder %s498, %s499
      %p508 = scmp.eq.s32.totalorder %s42, 0
      %p509 = por %p507, %p508
      %p510 = scmp.ne.s32.totalorder %s498, %s499
      %p511 = scmp.eq.s32.totalorder %s43, 1
      %p512 = por %p510, %p511
      %p514 = scmp.ne.s32.totalorder %s499, %s513
      %p515 = scmp.eq.s32.totalorder %s43, 0
      %p516 = por %p514, %p515
      %s517 = ssub.s32 %s37, %s44
      %p518 = scmp.eq.s32.totalorder %s517, 0
      %s520 = sadd.s32 %s519, 1
      %s521 = scalar_select %p518, %s519, %s520
      %p524 = pneg %p518
      %p525 = scmp.eq.s32.totalorder %s37, 1
      %p526 = por %p524, %p525
      %p527 = scmp.ne.s32.totalorder %s519, %s522
      %p528 = scmp.eq.s32.totalorder %s37, 0
      %p529 = por %p527, %p528
      %p530 = scmp.ne.s32.totalorder %s519, %s522
      %p531 = scmp.eq.s32.totalorder %s42, 1
      %p532 = por %p530, %p531
      %p533 = scmp.ne.s32.totalorder %s522, %s523
      %p534 = scmp.eq.s32.totalorder %s42, 0
      %p535 = por %p533, %p534
      %p536 = scmp.ne.s32.totalorder %s522, %s523
      %p537 = scmp.eq.s32.totalorder %s43, 1
      %p538 = por %p536, %p537
      %p540 = scmp.ne.s32.totalorder %s523, %s539
      %p541 = scmp.eq.s32.totalorder %s43, 0
      %p542 = por %p540, %p541
      %s543 = ssub.s32 %s37, %s44
      %p544 = scmp.eq.s32.totalorder %s543, 0
      %s546 = sadd.s32 %s545, 1
      %s547 = scalar_select %p544, %s545, %s546
      %p550 = pneg %p544
      %p551 = scmp.eq.s32.totalorder %s37, 1
      %p552 = por %p550, %p551
      %p553 = scmp.ne.s32.totalorder %s545, %s548
      %p554 = scmp.eq.s32.totalorder %s37, 0
      %p555 = por %p553, %p554
      %p556 = scmp.ne.s32.totalorder %s545, %s548
      %p557 = scmp.eq.s32.totalorder %s42, 1
      %p558 = por %p556, %p557
      %p559 = scmp.ne.s32.totalorder %s548, %s549
      %p560 = scmp.eq.s32.totalorder %s42, 0
      %p561 = por %p559, %p560
      %p562 = scmp.ne.s32.totalorder %s548, %s549
      %p563 = scmp.eq.s32.totalorder %s43, 1
      %p564 = por %p562, %p563
      %p566 = scmp.ne.s32.totalorder %s549, %s565
      %p567 = scmp.eq.s32.totalorder %s43, 0
      %p568 = por %p566, %p567
      %s569 = ssub.s32 %s37, %s44
      %p570 = scmp.eq.s32.totalorder %s569, 0
      %s572 = sadd.s32 %s571, 1
      %s573 = scalar_select %p570, %s571, %s572
      %p576 = pneg %p570
      %p577 = scmp.eq.s32.totalorder %s37, 1
      %p578 = por %p576, %p577
      %p579 = scmp.ne.s32.totalorder %s571, %s574
      %p580 = scmp.eq.s32.totalorder %s37, 0
      %p581 = por %p579, %p580
      %p582 = scmp.ne.s32.totalorder %s571, %s574
      %p583 = scmp.eq.s32.totalorder %s42, 1
      %p584 = por %p582, %p583
      %p585 = scmp.ne.s32.totalorder %s574, %s575
      %p586 = scmp.eq.s32.totalorder %s42, 0
      %p587 = por %p585, %p586
      %p588 = scmp.ne.s32.totalorder %s574, %s575
      %p589 = scmp.eq.s32.totalorder %s43, 1
      %p590 = por %p588, %p589
      %p592 = scmp.ne.s32.totalorder %s575, %s591
      %p593 = scmp.eq.s32.totalorder %s43, 0
      %p594 = por %p592, %p593
      %p595 = scmp.le.s32.totalorder 1, %s37
      %p596 = scmp.lt.s32.totalorder %s37, 3
      %p597 = pnand %p595, %p596
      %p598 = pneg %p597
      // Predicated region
      $region9: #{_lambda_.1} parent=5 // pred_check
        _
      $region10: #{_lambda_.1} parent=5 // pred_check_branch
        %600 = sbr.rel (%p597) target = $region12
      $region11: #{_lambda_.1} parent=5 // pred_region
        %s601 = ssub.s32 %s37, 1
        // Predicated region
        $region13: #{_lambda_.1} parent=11 // pred_check
          %p602 = pneg %p110
        $region14: #{_lambda_.1} parent=11 // pred_check_branch
          %604 = sbr.rel (%p602) target = $region16
        $region15: #{_lambda_.1} parent=11 // pred_region
          _
        $region16: #{_lambda_.1} parent=11 // pred_fallthru
          _
        // Predicated region
        $region17: #{_lambda_.1} parent=11 // pred_check
          %p605 = pneg %p131
        $region18: #{_lambda_.1} parent=11 // pred_check_branch
          %607 = sbr.rel (%p605) target = $region20
        $region19: #{_lambda_.1} parent=11 // pred_region
          _
        $region20: #{_lambda_.1} parent=11 // pred_fallthru
          _
        // Predicated region
        $region21: #{_lambda_.1} parent=11 // pred_check
          %p608 = pneg %p152
        $region22: #{_lambda_.1} parent=11 // pred_check_branch
          %610 = sbr.rel (%p608) target = $region24
        $region23: #{_lambda_.1} parent=11 // pred_region
          _
        $region24: #{_lambda_.1} parent=11 // pred_fallthru
          _
        // Predicated region
        $region25: #{_lambda_.1} parent=11 // pred_check
          %p611 = pneg %p173
        $region26: #{_lambda_.1} parent=11 // pred_check_branch
          %613 = sbr.rel (%p611) target = $region28
        $region27: #{_lambda_.1} parent=11 // pred_region
          _
        $region28: #{_lambda_.1} parent=11 // pred_fallthru
          _
        // Predicated region
        $region29: #{_lambda_.1} parent=11 // pred_check
          %p614 = pneg %p194
        $region30: #{_lambda_.1} parent=11 // pred_check_branch
          %616 = sbr.rel (%p614) target = $region32
        $region31: #{_lambda_.1} parent=11 // pred_region
          _
        $region32: #{_lambda_.1} parent=11 // pred_fallthru
          _
        // Predicated region
        $region33: #{_lambda_.1} parent=11 // pred_check
          %p617 = pneg %p215
        $region34: #{_lambda_.1} parent=11 // pred_check_branch
          %619 = sbr.rel (%p617) target = $region36
        $region35: #{_lambda_.1} parent=11 // pred_region
          _
        $region36: #{_lambda_.1} parent=11 // pred_fallthru
          _
        // Predicated region
        $region37: #{_lambda_.1} parent=11 // pred_check
          %p620 = pneg %p236
        $region38: #{_lambda_.1} parent=11 // pred_check_branch
          %622 = sbr.rel (%p620) target = $region40
        $region39: #{_lambda_.1} parent=11 // pred_region
          _
        $region40: #{_lambda_.1} parent=11 // pred_fallthru
          _
        // Predicated region
        $region41: #{_lambda_.1} parent=11 // pred_check
          %p623 = pneg %p257
        $region42: #{_lambda_.1} parent=11 // pred_check_branch
          %625 = sbr.rel (%p623) target = $region44
        $region43: #{_lambda_.1} parent=11 // pred_region
          _
        $region44: #{_lambda_.1} parent=11 // pred_fallthru
          _
        // Predicated region
        $region45: #{_lambda_.1} parent=11 // pred_check
          %p626 = pneg %p278
        $region46: #{_lambda_.1} parent=11 // pred_check_branch
          %628 = sbr.rel (%p626) target = $region48
        $region47: #{_lambda_.1} parent=11 // pred_region
          _
        $region48: #{_lambda_.1} parent=11 // pred_fallthru
          _
        // Predicated region
        $region49: #{_lambda_.1} parent=11 // pred_check
          %p629 = pneg %p299
        $region50: #{_lambda_.1} parent=11 // pred_check_branch
          %631 = sbr.rel (%p629) target = $region52
        $region51: #{_lambda_.1} parent=11 // pred_region
          _
        $region52: #{_lambda_.1} parent=11 // pred_fallthru
          _
        // Predicated region
        $region53: #{_lambda_.1} parent=11 // pred_check
          %p632 = pneg %p320
        $region54: #{_lambda_.1} parent=11 // pred_check_branch
          %634 = sbr.rel (%p632) target = $region56
        $region55: #{_lambda_.1} parent=11 // pred_region
          _
        $region56: #{_lambda_.1} parent=11 // pred_fallthru
          _
        // Predicated region
        $region57: #{_lambda_.1} parent=11 // pred_check
          %p635 = pneg %p341
        $region58: #{_lambda_.1} parent=11 // pred_check_branch
          %637 = sbr.rel (%p635) target = $region60
        $region59: #{_lambda_.1} parent=11 // pred_region
          _
        $region60: #{_lambda_.1} parent=11 // pred_fallthru
          _
        // Predicated region
        $region61: #{_lambda_.1} parent=11 // pred_check
          %p638 = pneg %p362
        $region62: #{_lambda_.1} parent=11 // pred_check_branch
          %640 = sbr.rel (%p638) target = $region64
        $region63: #{_lambda_.1} parent=11 // pred_region
          _
        $region64: #{_lambda_.1} parent=11 // pred_fallthru
          _
        // Predicated region
        $region65: #{_lambda_.1} parent=11 // pred_check
          %p641 = pneg %p383
        $region66: #{_lambda_.1} parent=11 // pred_check_branch
          %643 = sbr.rel (%p641) target = $region68
        $region67: #{_lambda_.1} parent=11 // pred_region
          _
        $region68: #{_lambda_.1} parent=11 // pred_fallthru
          _
        // Predicated region
        $region69: #{_lambda_.1} parent=11 // pred_check
          %p644 = pneg %p404
        $region70: #{_lambda_.1} parent=11 // pred_check_branch
          %646 = sbr.rel (%p644) target = $region72
        $region71: #{_lambda_.1} parent=11 // pred_region
          _
        $region72: #{_lambda_.1} parent=11 // pred_fallthru
          _
        // Predicated region
        $region73: #{_lambda_.1} parent=11 // pred_check
          %p647 = pneg %p425
        $region74: #{_lambda_.1} parent=11 // pred_check_branch
          %649 = sbr.rel (%p647) target = $region76
        $region75: #{_lambda_.1} parent=11 // pred_region
          _
        $region76: #{_lambda_.1} parent=11 // pred_fallthru
          _
        // Predicated region
        $region77: #{_lambda_.1} parent=11 // pred_check
          %p650 = pneg %p446
        $region78: #{_lambda_.1} parent=11 // pred_check_branch
          %652 = sbr.rel (%p650) target = $region80
        $region79: #{_lambda_.1} parent=11 // pred_region
          _
        $region80: #{_lambda_.1} parent=11 // pred_fallthru
          _
        // Predicated region
        $region81: #{_lambda_.1} parent=11 // pred_check
          %p653 = pneg %p467
        $region82: #{_lambda_.1} parent=11 // pred_check_branch
          %655 = sbr.rel (%p653) target = $region84
        $region83: #{_lambda_.1} parent=11 // pred_region
          _
        $region84: #{_lambda_.1} parent=11 // pred_fallthru
          _
        // Predicated region
        $region85: #{_lambda_.1} parent=11 // pred_check
          %p656 = pneg %p488
        $region86: #{_lambda_.1} parent=11 // pred_check_branch
          %658 = sbr.rel (%p656) target = $region88
        $region87: #{_lambda_.1} parent=11 // pred_region
          _
        $region88: #{_lambda_.1} parent=11 // pred_fallthru
          _
        // Predicated region
        $region89: #{_lambda_.1} parent=11 // pred_check
          %p659 = pneg %p509
        $region90: #{_lambda_.1} parent=11 // pred_check_branch
          %661 = sbr.rel (%p659) target = $region92
        $region91: #{_lambda_.1} parent=11 // pred_region
          _
        $region92: #{_lambda_.1} parent=11 // pred_fallthru
          _
      $region12: #{_lambda_.1} parent=5 // pred_fallthru
        _
      %p662 = scmp.lt.s32.totalorder %s37, 2
      // Predicated region
      $region93: #{_lambda_.1} parent=5 // pred_check
        %p663 = pneg %p662
      $region94: #{_lambda_.1} parent=5 // pred_check_branch
        %665 = sbr.rel (%p663) target = $region96
      $region95: #{_lambda_.1} parent=5 // pred_region
        // Predicated region
        $region97: #{_lambda_.1} parent=95 // pred_check
          %p666 = pneg %p57
        $region98: #{_lambda_.1} parent=95 // pred_check_branch
          %668 = sbr.rel (%p666) target = $region100
        $region99: #{_lambda_.1} parent=95 // pred_region
          %p669 = scmp.lt.s32.totalorder %s37, 1
          %s670 = scalar_select %p669, %s37, 1
          %s671 = smul.addr %s670, 48
          %s672 = smul.addr %s671, 4
          %s673 = scalar_lea.vmem %s0, %s672
        $region100: #{_lambda_.1} parent=95 // pred_fallthru
          _
        // Predicated region
        $region101: #{_lambda_.1} parent=95 // pred_check
          %p674 = pneg %p83
        $region102: #{_lambda_.1} parent=95 // pred_check_branch
          %676 = sbr.rel (%p674) target = $region104
        $region103: #{_lambda_.1} parent=95 // pred_region
          %p677 = scmp.lt.s32.totalorder %s37, 1
          %s678 = scalar_select %p677, %s37, 1
          %s679 = smul.addr %s678, 4
          %s680 = smul.addr %s679, 4
          %s681 = scalar_lea.vmem %s1, %s680
        $region104: #{_lambda_.1} parent=95 // pred_fallthru
          _
      $region96: #{_lambda_.1} parent=5 // pred_fallthru
        _
      %p682 = scmp.le.s32.totalorder 1, %s37
      %p683 = scmp.lt.s32.totalorder %s37, 3
      %p684 = pnand %p682, %p683
      %p685 = pneg %p684
      // Predicated region
      $region105: #{_lambda_.1} parent=5 // pred_check
        _
      $region106: #{_lambda_.1} parent=5 // pred_check_branch
        %687 = sbr.rel (%p684) target = $region108
      $region107: #{_lambda_.1} parent=5 // pred_region
        %s688 = ssub.s32 %s37, 1
        %p689 = scmp.lt.s32.totalorder %s42, 1
        %s690 = scalar_select %p689, %s42, 1
        %s691 = smul.addr %s690, 48
        %s692 = smul.addr %s691, 4
        %s693 = scalar_lea.vmem %s0, %s692
        %p694 = pneg %p63
        %p695 = pneg %p60
        %p696 = scmp.lt.s32.totalorder %s42, 1
        %s697 = scalar_select %p696, %s42, 1
        %s698 = smul.addr %s697, 4
        %s699 = smul.addr %s698, 4
        %s700 = scalar_lea.vmem %s1, %s699
        %p701 = pneg %p89
        %p702 = pneg %p86
        %p703 = pneg %p110
        %p704 = pneg %p107
        %p705 = pneg %p131
        %p706 = pneg %p128
        %p707 = pneg %p152
        %p708 = pneg %p149
        %p709 = pneg %p173
        %p710 = pneg %p170
        %p711 = pneg %p194
        %p712 = pneg %p191
        %p713 = pneg %p215
        %p714 = pneg %p212
        %p715 = pneg %p236
        %p716 = pneg %p233
        %p717 = pneg %p257
        %p718 = pneg %p254
        %p719 = pneg %p278
        %p720 = pneg %p275
        %p721 = pneg %p299
        %p722 = pneg %p296
        %p723 = pneg %p320
        %p724 = pneg %p317
        %p725 = pneg %p341
        %p726 = pneg %p338
        %p727 = pneg %p362
        %p728 = pneg %p359
        %p729 = pneg %p383
        %p730 = pneg %p380
        %p731 = pneg %p404
        %p732 = pneg %p401
        %p733 = pneg %p425
        %p734 = pneg %p422
        %p735 = pneg %p446
        %p736 = pneg %p443
        %p737 = pneg %p467
        %p738 = pneg %p464
        %p739 = pneg %p488
        %p740 = pneg %p485
        %p741 = pneg %p509
        %p742 = pneg %p506
        %p743 = pneg %p535
        %p744 = pneg %p532
        %s745 = sand.u32 %s522, 1
        %s746 = scalar_lea.sflag [#allocation3], %s745
        %s747 = sand.u32 %s522, 1
        %s748 = scalar_lea.vmem [#allocation2], %s747
        %p749 = pneg %p561
        %p750 = pneg %p558
        %s751 = sand.u32 %s42, 1
        %s752 = scalar_lea.sflag [#allocation5], %s751
        %s753 = sand.u32 %s548, 1
        %s754 = smul.addr %s753, 32
        %s755 = scalar_lea.vmem [#allocation4], %s754
        %p756 = pneg %p587
        %p757 = pneg %p584
        %s758 = sand.u32 %s42, 1
        %s759 = scalar_lea.sflag [#allocation5], %s758
        %s760 = sand.u32 %s574, 1
        %s761 = smul.addr %s760, 32
        %s762 = scalar_lea.vmem [#allocation6], %s761
        %p763 = scmp.lt.s32.totalorder %s42, 1
        %s764 = scalar_select %p763, %s42, 1
        %s765 = smul.addr %s764, 48
        %s766 = smul.addr %s765, 4
        %s767 = scalar_lea.vmem %s0, %s766
        %p768 = scmp.lt.s32.totalorder %s42, 1
        %s769 = scalar_select %p768, %s42, 1
        %s770 = smul.addr %s769, 4
        %s771 = smul.addr %s770, 4
        %s772 = scalar_lea.vmem %s1, %s771
        %v774 = vld [vmem:[%s767] sm:$0xf]
        %v775 = vld [vmem:[%s767 + $0x4] sm:$0xf]
        %v776 = vld [vmem:[%s767 + $0x8] sm:$0xf]
        %v777 = vld [vmem:[%s767 + $0xc] sm:$0xf]
        %v778 = vld [vmem:[%s767 + $0x10] sm:$0xf]
        %v779 = vld [vmem:[%s767 + $0x14] sm:$0xf]
        %v780 = vld [vmem:[%s767 + $0x18] sm:$0xf]
        %v781 = vld [vmem:[%s767 + $0x1c] sm:$0xf]
        %v782 = vld [vmem:[%s767 + $0x20] sm:$0xf]
        %v783 = vld [vmem:[%s767 + $0x24] sm:$0xf]
        %v784 = vld [vmem:[%s767 + $0x28] sm:$0xf]
        %v785 = vld [vmem:[%s767 + $0x2c] sm:$0xf]
        %v786 = vld [vmem:[%s767 + $0x30] sm:$0xf]
        %v787 = vld [vmem:[%s767 + $0x34] sm:$0xf]
        %v788 = vld [vmem:[%s767 + $0x38] sm:$0xf]
        %v789 = vld [vmem:[%s767 + $0x3c] sm:$0xf]
        %v790 = vld [vmem:[%s767 + $0x40] sm:$0xf]
        %v791 = vld [vmem:[%s767 + $0x44] sm:$0xf]
        %v792 = vld [vmem:[%s767 + $0x48] sm:$0xf]
        %v793 = vld [vmem:[%s767 + $0x4c] sm:$0xf]
        %v794 = vld [vmem:[%s767 + $0x50] sm:$0xf]
        %v795 = vld [vmem:[%s767 + $0x54] sm:$0xf]
        %v796 = vld [vmem:[%s767 + $0x58] sm:$0xf]
        %v797 = vld [vmem:[%s767 + $0x5c] sm:$0xf]
        %v798 = vld [vmem:[%s767 + $0x60] sm:$0xf]
        %v799 = vld [vmem:[%s767 + $0x64] sm:$0xf]
        %v800 = vld [vmem:[%s767 + $0x68] sm:$0xf]
        %v801 = vld [vmem:[%s767 + $0x6c] sm:$0xf]
        %v802 = vld [vmem:[%s767 + $0x70] sm:$0xf]
        %v803 = vld [vmem:[%s767 + $0x74] sm:$0xf]
        %v804 = vld [vmem:[%s767 + $0x78] sm:$0xf]
        %v805 = vld [vmem:[%s767 + $0x7c] sm:$0xf]
        %v806 = vld [vmem:[%s767 + $0x80] sm:$0xf]
        %v807 = vld [vmem:[%s767 + $0x84] sm:$0xf]
        %v808 = vld [vmem:[%s767 + $0x88] sm:$0xf]
        %v809 = vld [vmem:[%s767 + $0x8c] sm:$0xf]
        %v810 = vld [vmem:[%s767 + $0x90] sm:$0xf]
        %v811 = vld [vmem:[%s767 + $0x94] sm:$0xf]
        %v812 = vld [vmem:[%s767 + $0x98] sm:$0xf]
        %v813 = vld [vmem:[%s767 + $0x9c] sm:$0xf]
        %v814 = vld [vmem:[%s767 + $0xa0] sm:$0xf]
        %v815 = vld [vmem:[%s767 + $0xa4] sm:$0xf]
        %v816 = vld [vmem:[%s767 + $0xa8] sm:$0xf]
        %v817 = vld [vmem:[%s767 + $0xac] sm:$0xf]
        %v818 = vld [vmem:[%s767 + $0xb0] sm:$0xf]
        %v819 = vld [vmem:[%s767 + $0xb4] sm:$0xf]
        %v820 = vld [vmem:[%s767 + $0xb8] sm:$0xf]
        %v821 = vld [vmem:[%s767 + $0xbc] sm:$0xf]
        %v822 = vld [vmem:[%s2] sm:$0xf]
        %v871 = vunpack.c.l.b16 %v774
        %v872 = vunpack.c.l.b16 %v775
        %v873 = vunpack.c.l.b16 %v776
        %v874 = vunpack.c.l.b16 %v777
        %v875 = vunpack.c.l.b16 %v778
        %v876 = vunpack.c.l.b16 %v779
        %v877 = vunpack.c.l.b16 %v780
        %v878 = vunpack.c.l.b16 %v781
        %v879 = vunpack.c.l.b16 %v782
        %v880 = vunpack.c.l.b16 %v783
        %v881 = vunpack.c.l.b16 %v784
        %v882 = vunpack.c.l.b16 %v785
        %v883 = vunpack.c.l.b16 %v786
        %v884 = vunpack.c.l.b16 %v787
        %v885 = vunpack.c.l.b16 %v788
        %v886 = vunpack.c.l.b16 %v789
        %v887 = vunpack.c.l.b16 %v790
        %v888 = vunpack.c.l.b16 %v791
        %v889 = vunpack.c.l.b16 %v792
        %v890 = vunpack.c.l.b16 %v793
        %v891 = vunpack.c.l.b16 %v794
        %v892 = vunpack.c.l.b16 %v795
        %v893 = vunpack.c.l.b16 %v796
        %v894 = vunpack.c.l.b16 %v797
        %v895 = vunpack.c.l.b16 %v798
        %v896 = vunpack.c.l.b16 %v799
        %v897 = vunpack.c.l.b16 %v800
        %v898 = vunpack.c.l.b16 %v801
        %v899 = vunpack.c.l.b16 %v802
        %v900 = vunpack.c.l.b16 %v803
        %v901 = vunpack.c.l.b16 %v804
        %v902 = vunpack.c.l.b16 %v805
        %v903 = vunpack.c.l.b16 %v806
        %v904 = vunpack.c.l.b16 %v807
        %v905 = vunpack.c.l.b16 %v808
        %v906 = vunpack.c.l.b16 %v809
        %v907 = vunpack.c.l.b16 %v810
        %v908 = vunpack.c.l.b16 %v811
        %v909 = vunpack.c.l.b16 %v812
        %v910 = vunpack.c.l.b16 %v813
        %v911 = vunpack.c.l.b16 %v814
        %v912 = vunpack.c.l.b16 %v815
        %v913 = vunpack.c.l.b16 %v816
        %v914 = vunpack.c.l.b16 %v817
        %v915 = vunpack.c.l.b16 %v818
        %v916 = vunpack.c.l.b16 %v819
        %v917 = vunpack.c.l.b16 %v820
        %v918 = vunpack.c.l.b16 %v821
        %v919 = vpack.c.b16 %v872, %v871
        %v920 = vpack.c.b16 %v874, %v873
        %v921 = vpack.c.b16 %v876, %v875
        %v922 = vpack.c.b16 %v878, %v877
        %v923 = vpack.c.b16 %v880, %v879
        %v924 = vpack.c.b16 %v882, %v881
        %v925 = vpack.c.b16 %v884, %v883
        %v926 = vpack.c.b16 %v886, %v885
        %v927 = vpack.c.b16 %v888, %v887
        %v928 = vpack.c.b16 %v890, %v889
        %v929 = vpack.c.b16 %v892, %v891
        %v930 = vpack.c.b16 %v894, %v893
        %v931 = vpack.c.b16 %v896, %v895
        %v932 = vpack.c.b16 %v898, %v897
        %v933 = vpack.c.b16 %v900, %v899
        %v934 = vpack.c.b16 %v902, %v901
        %v935 = vpack.c.b16 %v904, %v903
        %v936 = vpack.c.b16 %v906, %v905
        %v937 = vpack.c.b16 %v908, %v907
        %v938 = vpack.c.b16 %v910, %v909
        %v939 = vpack.c.b16 %v912, %v911
        %v940 = vpack.c.b16 %v914, %v913
        %v941 = vpack.c.b16 %v916, %v915
        %v942 = vpack.c.b16 %v918, %v917
        %vm943 = vcmask 64512
        %v945 = vsel %vm943, %v919, 0
        %v948 = vsel %vm943, %v920, 0
        %v951 = vsel %vm943, %v921, 0
        %v954 = vsel %vm943, %v922, 0
        %v957 = vsel %vm943, %v923, 0
        %v960 = vsel %vm943, %v924, 0
        %v963 = vsel %vm943, %v925, 0
        %v966 = vsel %vm943, %v926, 0
        %v969 = vsel %vm943, %v927, 0
        %v972 = vsel %vm943, %v928, 0
        %v975 = vsel %vm943, %v929, 0
        %v978 = vsel %vm943, %v930, 0
        %v981 = vsel %vm943, %v931, 0
        %v984 = vsel %vm943, %v932, 0
        %v987 = vsel %vm943, %v933, 0
        %v990 = vsel %vm943, %v934, 0
        %v993 = vsel %vm943, %v935, 0
        %v996 = vsel %vm943, %v936, 0
        %v999 = vsel %vm943, %v937, 0
        %v1002 = vsel %vm943, %v938, 0
        %v1005 = vsel %vm943, %v939, 0
        %v1008 = vsel %vm943, %v940, 0
        %v1011 = vsel %vm943, %v941, 0
        %v1014 = vsel %vm943, %v942, 0
        %vm1016 = vcmask 1043456
        %v1018 = vsel %vm1016, %v822, 0
        %1020 = vmatpush.bf16.msra.mxu0 0
        %1021 = vmatpush.bf16.msra.mxu0 0
        %1022 = vmatpush.bf16.msra.mxu0 0
        %1023 = vmatpush.bf16.msra.mxu0 0
        %1024 = vmatpush.bf16.msra.mxu0 0
        %1025 = vmatpush.bf16.msra.mxu0 0
        %1026 = vmatpush.bf16.msra.mxu0 0
        %1027 = vmatpush.bf16.msra.mxu0 %v1018
        %1028 = vmatmul.bf16.gmra.mxu0 %v945
        %v1029 = vpop.f32.mrf.mxu0
        %v1030 = vadd.f32 0.0, %v1029
        %v1031 = vpop.f32.mrf.mxu0
        %v1032 = vadd.f32 0.0, %v1031
        %1033 = vmatmul.bf16.gmra.mxu0 %v948
        %v1034 = vpop.f32.mrf.mxu0
        %v1035 = vadd.f32 0.0, %v1034
        %v1036 = vpop.f32.mrf.mxu0
        %v1037 = vadd.f32 0.0, %v1036
        %1038 = vmatmul.bf16.gmra.mxu0 %v951
        %v1039 = vpop.f32.mrf.mxu0
        %v1040 = vadd.f32 0.0, %v1039
        %v1041 = vpop.f32.mrf.mxu0
        %v1042 = vadd.f32 0.0, %v1041
        %1043 = vmatmul.bf16.gmra.mxu0 %v954
        %v1044 = vpop.f32.mrf.mxu0
        %v1045 = vadd.f32 0.0, %v1044
        %v1046 = vpop.f32.mrf.mxu0
        %v1047 = vadd.f32 0.0, %v1046
        %1048 = vmatmul.bf16.gmra.mxu0 %v957
        %v1049 = vpop.f32.mrf.mxu0
        %v1050 = vadd.f32 0.0, %v1049
        %v1051 = vpop.f32.mrf.mxu0
        %v1052 = vadd.f32 0.0, %v1051
        %1053 = vmatmul.bf16.gmra.mxu0 %v960
        %v1054 = vpop.f32.mrf.mxu0
        %v1055 = vadd.f32 0.0, %v1054
        %v1056 = vpop.f32.mrf.mxu0
        %v1057 = vadd.f32 0.0, %v1056
        %1058 = vmatmul.bf16.gmra.mxu0 %v963
        %v1059 = vpop.f32.mrf.mxu0
        %v1060 = vadd.f32 0.0, %v1059
        %v1061 = vpop.f32.mrf.mxu0
        %v1062 = vadd.f32 0.0, %v1061
        %1063 = vmatmul.bf16.gmra.mxu0 %v966
        %v1064 = vpop.f32.mrf.mxu0
        %v1065 = vadd.f32 0.0, %v1064
        %v1066 = vpop.f32.mrf.mxu0
        %v1067 = vadd.f32 0.0, %v1066
        %1068 = vmatmul.bf16.gmra.mxu0 %v969
        %v1069 = vpop.f32.mrf.mxu0
        %v1070 = vadd.f32 0.0, %v1069
        %v1071 = vpop.f32.mrf.mxu0
        %v1072 = vadd.f32 0.0, %v1071
        %1073 = vmatmul.bf16.gmra.mxu0 %v972
        %v1074 = vpop.f32.mrf.mxu0
        %v1075 = vadd.f32 0.0, %v1074
        %v1076 = vpop.f32.mrf.mxu0
        %v1077 = vadd.f32 0.0, %v1076
        %1078 = vmatmul.bf16.gmra.mxu0 %v975
        %v1079 = vpop.f32.mrf.mxu0
        %v1080 = vadd.f32 0.0, %v1079
        %v1081 = vpop.f32.mrf.mxu0
        %v1082 = vadd.f32 0.0, %v1081
        %1083 = vmatmul.bf16.gmra.mxu0 %v978
        %v1084 = vpop.f32.mrf.mxu0
        %v1085 = vadd.f32 0.0, %v1084
        %v1086 = vpop.f32.mrf.mxu0
        %v1087 = vadd.f32 0.0, %v1086
        %1088 = vmatmul.bf16.gmra.mxu0 %v981
        %v1089 = vpop.f32.mrf.mxu0
        %v1090 = vadd.f32 0.0, %v1089
        %v1091 = vpop.f32.mrf.mxu0
        %v1092 = vadd.f32 0.0, %v1091
        %1093 = vmatmul.bf16.gmra.mxu0 %v984
        %v1094 = vpop.f32.mrf.mxu0
        %v1095 = vadd.f32 0.0, %v1094
        %v1096 = vpop.f32.mrf.mxu0
        %v1097 = vadd.f32 0.0, %v1096
        %1098 = vmatmul.bf16.gmra.mxu0 %v987
        %v1099 = vpop.f32.mrf.mxu0
        %v1100 = vadd.f32 0.0, %v1099
        %v1101 = vpop.f32.mrf.mxu0
        %v1102 = vadd.f32 0.0, %v1101
        %1103 = vmatmul.bf16.gmra.mxu0 %v990
        %v1104 = vpop.f32.mrf.mxu0
        %v1105 = vadd.f32 0.0, %v1104
        %v1106 = vpop.f32.mrf.mxu0
        %v1107 = vadd.f32 0.0, %v1106
        %1108 = vmatmul.bf16.gmra.mxu0 %v993
        %v1109 = vpop.f32.mrf.mxu0
        %v1110 = vadd.f32 0.0, %v1109
        %v1111 = vpop.f32.mrf.mxu0
        %v1112 = vadd.f32 0.0, %v1111
        %1113 = vmatmul.bf16.gmra.mxu0 %v996
        %v1114 = vpop.f32.mrf.mxu0
        %v1115 = vadd.f32 0.0, %v1114
        %v1116 = vpop.f32.mrf.mxu0
        %v1117 = vadd.f32 0.0, %v1116
        %1118 = vmatmul.bf16.gmra.mxu0 %v999
        %v1119 = vpop.f32.mrf.mxu0
        %v1120 = vadd.f32 0.0, %v1119
        %v1121 = vpop.f32.mrf.mxu0
        %v1122 = vadd.f32 0.0, %v1121
        %1123 = vmatmul.bf16.gmra.mxu0 %v1002
        %v1124 = vpop.f32.mrf.mxu0
        %v1125 = vadd.f32 0.0, %v1124
        %v1126 = vpop.f32.mrf.mxu0
        %v1127 = vadd.f32 0.0, %v1126
        %1128 = vmatmul.bf16.gmra.mxu0 %v1005
        %v1129 = vpop.f32.mrf.mxu0
        %v1130 = vadd.f32 0.0, %v1129
        %v1131 = vpop.f32.mrf.mxu0
        %v1132 = vadd.f32 0.0, %v1131
        %1133 = vmatmul.bf16.gmra.mxu0 %v1008
        %v1134 = vpop.f32.mrf.mxu0
        %v1135 = vadd.f32 0.0, %v1134
        %v1136 = vpop.f32.mrf.mxu0
        %v1137 = vadd.f32 0.0, %v1136
        %1138 = vmatmul.bf16.gmra.mxu0 %v1011
        %v1139 = vpop.f32.mrf.mxu0
        %v1140 = vadd.f32 0.0, %v1139
        %v1141 = vpop.f32.mrf.mxu0
        %v1142 = vadd.f32 0.0, %v1141
        %1143 = vmatmul.bf16.gmra.mxu0 %v1014
        %v1144 = vpop.f32.mrf.mxu0
        %v1145 = vadd.f32 0.0, %v1144
        %v1146 = vpop.f32.mrf.mxu0
        %v1147 = vadd.f32 0.0, %v1146
        %1148 = vdwg.mxu0
        %v1149 = vmax.f32 %v1030, %v1040
        %v1150 = vmax.f32 %v1032, %v1042
        %v1151 = vmax.f32 %v1035, %v1045
        %v1152 = vmax.f32 %v1037, %v1047
        %v1153 = vmax.f32 %v1149, %v1050
        %v1154 = vmax.f32 %v1150, %v1052
        %v1155 = vmax.f32 %v1151, %v1055
        %v1156 = vmax.f32 %v1152, %v1057
        %v1157 = vmax.f32 %v1153, %v1060
        %v1158 = vmax.f32 %v1154, %v1062
        %v1159 = vmax.f32 %v1155, %v1065
        %v1160 = vmax.f32 %v1156, %v1067
        %v1161 = vmax.f32 %v1157, %v1070
        %v1162 = vmax.f32 %v1158, %v1072
        %v1163 = vmax.f32 %v1159, %v1075
        %v1164 = vmax.f32 %v1160, %v1077
        %v1165 = vmax.f32 %v1161, %v1080
        %v1166 = vmax.f32 %v1162, %v1082
        %v1167 = vmax.f32 %v1163, %v1085
        %v1168 = vmax.f32 %v1164, %v1087
        %v1169 = vmax.f32 %v1165, %v1090
        %v1170 = vmax.f32 %v1166, %v1092
        %v1171 = vmax.f32 %v1167, %v1095
        %v1172 = vmax.f32 %v1168, %v1097
        %v1173 = vmax.f32 %v1169, %v1100
        %v1174 = vmax.f32 %v1170, %v1102
        %v1175 = vmax.f32 %v1171, %v1105
        %v1176 = vmax.f32 %v1172, %v1107
        %v1177 = vmax.f32 %v1173, %v1110
        %v1178 = vmax.f32 %v1174, %v1112
        %v1179 = vmax.f32 %v1175, %v1115
        %v1180 = vmax.f32 %v1176, %v1117
        %v1181 = vmax.f32 %v1177, %v1120
        %v1182 = vmax.f32 %v1178, %v1122
        %v1183 = vmax.f32 %v1179, %v1125
        %v1184 = vmax.f32 %v1180, %v1127
        %v1185 = vmax.f32 %v1181, %v1130
        %v1186 = vmax.f32 %v1182, %v1132
        %v1187 = vmax.f32 %v1183, %v1135
        %v1188 = vmax.f32 %v1184, %v1137
        %v1189 = vmax.f32 %v1185, %v1140
        %v1190 = vmax.f32 %v1186, %v1142
        %v1191 = vmax.f32 %v1187, %v1145
        %v1192 = vmax.f32 %v1188, %v1147
        %v1193 = vld [vmem:[%s772] sm:$0xf]
        %v1194 = vld [vmem:[%s772 + $0x4] sm:$0xf]
        %v1195 = vld [vmem:[%s772 + $0x8] sm:$0xf]
        %v1196 = vld [vmem:[%s772 + $0xc] sm:$0xf]
        %v1197 = vld [vmem:[%s3] sm:$0x3]
        %v1198 = vld [vmem:[%s4] sm:$0x1]
        %v1200 = vperm.slane %v1198, 0
        %v1206 = vunpack.c.l.b16 %v1193
        %v1207 = vunpack.c.l.b16 %v1194
        %v1208 = vunpack.c.l.b16 %v1195
        %v1209 = vunpack.c.l.b16 %v1196
        %v1210 = vpack.c.b16 %v1207, %v1206
        %v1211 = vpack.c.b16 %v1209, %v1208
        %vm1212 = vcmask 31744
        %v1214 = vsel %vm1212, %v1210, 0
        %v1217 = vsel %vm1212, %v1211, 0
        %vm1219 = vcmask 1041408
        %v1221 = vsel %vm1219, %v1197, 0
        %1223 = vmatpush.bf16.msra.mxu0 0
        %1224 = vmatpush.bf16.msra.mxu0 0
        %1225 = vmatpush.bf16.msra.mxu0 0
        %1226 = vmatpush.bf16.msra.mxu0 0
        %1227 = vmatpush.bf16.msra.mxu0 0
        %1228 = vmatpush.bf16.msra.mxu0 0
        %1229 = vmatpush.bf16.msra.mxu0 0
        %1230 = vmatpush.bf16.msra.mxu0 %v1221
        %1231 = vmatmul.bf16.gmra.mxu0 %v1214
        %v1232 = vpop.f32.mrf.mxu0
        %v1233 = vadd.f32 %v1200, %v1232
        %v1234 = vpop.f32.mrf.mxu0
        %v1235 = vadd.f32 %v1200, %v1234
        %1236 = vmatmul.bf16.gmra.mxu0 %v1217
        %v1237 = vpop.f32.mrf.mxu0
        %v1238 = vadd.f32 %v1200, %v1237
        %v1239 = vpop.f32.mrf.mxu0
        %v1240 = vadd.f32 %v1200, %v1239
        %1241 = vdwg.mxu0
        %vm1242 = vcmask 261120
        %1243 = vst.msk [vmem:[%s755] sm:$0xff] %vm1242, %v1233
        %1244 = vst.msk [vmem:[%s755 + $0x8] sm:$0xff] %vm1242, %v1235
        %1245 = vst.msk [vmem:[%s755 + $0x10] sm:$0xff] %vm1242, %v1238
        %1246 = vst.msk [vmem:[%s755 + $0x18] sm:$0xff] %vm1242, %v1240
        %1247 = vst.msk [vmem:[%s762] sm:$0xff] %vm1242, %v1189
        %1248 = vst.msk [vmem:[%s762 + $0x8] sm:$0xff] %vm1242, %v1190
        %1249 = vst.msk [vmem:[%s762 + $0x10] sm:$0xff] %vm1242, %v1191
        %1250 = vst.msk [vmem:[%s762 + $0x18] sm:$0xff] %vm1242, %v1192
        %v1251 = vadd.f32 %v1233, %v1189
        %v1252 = vadd.f32 %v1235, %v1190
        %v1253 = vadd.f32 %v1238, %v1191
        %v1254 = vadd.f32 %v1240, %v1192
        %v1255 = vmax.f32 %v1251, 0.0
        %v1256 = vmax.f32 %v1252, 0.0
        %v1257 = vmax.f32 %v1253, 0.0
        %v1258 = vmax.f32 %v1254, 0.0
        %v1259 = vld [vmem:[%s5] sm:$0x1]
        %v1260 = vld [vmem:[%s6] sm:$0x1]
        %v1261 = vsel %vm1242, %v1255, 0.0
        %1262 = vadd.xlane.f32.xlu0 %v1261
        %v1263 = vpop.xlane.xlu0 %1262
        %v1264 = vsel %vm1242, %v1256, 0.0
        %1265 = vadd.xlane.f32.xlu0 %v1264
        %v1266 = vpop.xlane.xlu0 %1265
        %v1267 = vsel %vm1242, %v1257, 0.0
        %1268 = vadd.xlane.f32.xlu0 %v1267
        %v1269 = vpop.xlane.xlu0 %1268
        %v1270 = vsel %vm1242, %v1258, 0.0
        %1271 = vadd.xlane.f32.xlu0 %v1270
        %v1272 = vpop.xlane.xlu0 %1271
        %v1273 = vrcp.pop 32.0
        %v1274 = vmul.f32 32.0, %v1273
        %v1275 = vsub.f32 1.0, %v1274
        %v1276 = vmul.f32 %v1273, %v1275
        %v1277 = vadd.f32 %v1273, %v1276
        %vm1278 = vweird.f32 %v1273
        %v1279 = vsel %vm1278, %v1273, %v1277
        %v1280 = vmul.f32 %v1263, %v1279
        %v1281 = vmul.f32 %v1266, %v1279
        %v1282 = vmul.f32 %v1269, %v1279
        %v1283 = vmul.f32 %v1272, %v1279
        %v1284 = vsub.f32 %v1255, %v1280
        %v1285 = vsub.f32 %v1256, %v1281
        %v1286 = vsub.f32 %v1257, %v1282
        %v1287 = vsub.f32 %v1258, %v1283
        %v1288 = vmul.f32 %v1284, %v1284
        %v1289 = vmul.f32 %v1285, %v1285
        %v1290 = vmul.f32 %v1286, %v1286
        %v1291 = vmul.f32 %v1287, %v1287
        %v1292 = vsel %vm1242, %v1288, 0.0
        %1293 = vadd.xlane.f32.xlu0 %v1292
        %v1294 = vpop.xlane.xlu0 %1293
        %v1295 = vsel %vm1242, %v1289, 0.0
        %1296 = vadd.xlane.f32.xlu0 %v1295
        %v1297 = vpop.xlane.xlu0 %1296
        %v1298 = vsel %vm1242, %v1290, 0.0
        %1299 = vadd.xlane.f32.xlu0 %v1298
        %v1300 = vpop.xlane.xlu0 %1299
        %v1301 = vsel %vm1242, %v1291, 0.0
        %1302 = vadd.xlane.f32.xlu0 %v1301
        %v1303 = vpop.xlane.xlu0 %1302
        %v1304 = vmul.f32 %v1294, %v1279
        %v1305 = vmul.f32 %v1297, %v1279
        %v1306 = vmul.f32 %v1300, %v1279
        %v1307 = vmul.f32 %v1303, %v1279
        %v1308 = vadd.f32 %v1304, 1e-05
        %v1309 = vadd.f32 %v1305, 1e-05
        %v1310 = vadd.f32 %v1306, 1e-05
        %v1311 = vadd.f32 %v1307, 1e-05
        %v1312 = vrsqrt.pop %v1308
        %v1313 = vmul.f32 %v1312, %v1308
        %v1314 = vmul.f32 %v1313, %v1312
        %v1315 = vmul.f32 0.5, %v1314
        %v1316 = vsub.f32 1.5, %v1315
        %v1317 = vmul.f32 %v1312, %v1316
        %vm1318 = vweird.f32 %v1308
        %vm1319 = vweird.f32 %v1312
        %vm1320 = vmor %vm1318, %vm1319
        %v1321 = vsel %vm1320, %v1312, %v1317
        %v1322 = vrsqrt.pop %v1309
        %v1323 = vmul.f32 %v1322, %v1309
        %v1324 = vmul.f32 %v1323, %v1322
        %v1325 = vmul.f32 0.5, %v1324
        %v1326 = vsub.f32 1.5, %v1325
        %v1327 = vmul.f32 %v1322, %v1326
        %vm1328 = vweird.f32 %v1309
        %vm1329 = vweird.f32 %v1322
        %vm1330 = vmor %vm1328, %vm1329
        %v1331 = vsel %vm1330, %v1322, %v1327
        %v1332 = vrsqrt.pop %v1310
        %v1333 = vmul.f32 %v1332, %v1310
        %v1334 = vmul.f32 %v1333, %v1332
        %v1335 = vmul.f32 0.5, %v1334
        %v1336 = vsub.f32 1.5, %v1335
        %v1337 = vmul.f32 %v1332, %v1336
        %vm1338 = vweird.f32 %v1310
        %vm1339 = vweird.f32 %v1332
        %vm1340 = vmor %vm1338, %vm1339
        %v1341 = vsel %vm1340, %v1332, %v1337
        %v1342 = vrsqrt.pop %v1311
        %v1343 = vmul.f32 %v1342, %v1311
        %v1344 = vmul.f32 %v1343, %v1342
        %v1345 = vmul.f32 0.5, %v1344
        %v1346 = vsub.f32 1.5, %v1345
        %v1347 = vmul.f32 %v1342, %v1346
        %vm1348 = vweird.f32 %v1311
        %vm1349 = vweird.f32 %v1342
        %vm1350 = vmor %vm1348, %vm1349
        %v1351 = vsel %vm1350, %v1342, %v1347
        %v1352 = vmul.f32 %v1284, %v1321
        %v1353 = vmul.f32 %v1285, %v1331
        %v1354 = vmul.f32 %v1286, %v1341
        %v1355 = vmul.f32 %v1287, %v1351
        %v1357 = vperm.slane %v1259, 0
        %v1359 = vmul.f32 %v1352, %v1357
        %v1360 = vmul.f32 %v1353, %v1357
        %v1361 = vmul.f32 %v1354, %v1357
        %v1362 = vmul.f32 %v1355, %v1357
        %v1364 = vperm.slane %v1260, 0
        %v1366 = vadd.f32 %v1359, %v1364
        %v1367 = vadd.f32 %v1360, %v1364
        %v1368 = vadd.f32 %v1361, %v1364
        %v1369 = vadd.f32 %v1362, %v1364
        %v1370 = vpack.c.bf16 %v1367, %v1366
        %v1371 = vpack.c.bf16 %v1369, %v1368
        %v1372 = vld [vmem:[%s7] sm:$0xf]
        %v1373 = vld [vmem:[%s7 + $0x4] sm:$0xf]
        %v1374 = vld [vmem:[%s7 + $0x8] sm:$0xf]
        %v1375 = vld [vmem:[%s7 + $0xc] sm:$0xf]
        %v1380 = vunpack.c.l.b16 %v1372
        %v1381 = vunpack.c.l.b16 %v1373
        %v1382 = vunpack.c.l.b16 %v1374
        %v1383 = vunpack.c.l.b16 %v1375
        %v1384 = vpack.c.b16 %v1381, %v1380
        %v1385 = vpack.c.b16 %v1383, %v1382
        %v1389 = vsel %vm1242, %v1370, 0
        %v1392 = vsel %vm1242, %v1371, 0
        %1394 = vmatpush.bf16.msra.mxu0 0
        %1395 = vmatpush.bf16.msra.mxu0 0
        %1396 = vmatpush.bf16.msra.mxu0 0
        %1397 = vmatpush.bf16.msra.mxu0 0
        %1398 = vmatpush.bf16.msra.mxu0 0
        %1399 = vmatpush.bf16.msra.mxu0 0
        %1400 = vmatpush.bf16.msra.mxu0 %v1385
        %1401 = vmatpush.bf16.msra.mxu0 %v1384
        %1402 = vmatmul.bf16.gmra.mxu0 %v1389
        %v1403 = vpop.f32.mrf.mxu0
        %v1404 = vadd.f32 0.0, %v1403
        %v1405 = vpop.f32.mrf.mxu0
        %v1406 = vadd.f32 0.0, %v1405
        %1407 = vmatmul.bf16.gmra.mxu0 %v1392
        %v1408 = vpop.f32.mrf.mxu0
        %v1409 = vadd.f32 0.0, %v1408
        %v1410 = vpop.f32.mrf.mxu0
        %v1411 = vadd.f32 0.0, %v1410
        %1412 = vdwg.mxu0
        %v1413 = vpack.c.bf16 %v1406, %v1404
        %v1414 = vpack.c.bf16 %v1411, %v1409
        %1417 = vrot.lane.b32.xlu0 %v1413, 96
        %v1418 = vpop.permute.xlu0 %1417
        %1419 = vrot.lane.b32.xlu0 %v1414, 96
        %v1420 = vpop.permute.xlu0 %1419
        %vm1421 = vcmask 130048
        %v1423 = vsel %vm1421, %v1413, 0
        %v1426 = vsel %vm1421, %v1414, 0
        %v1429 = vsel %vm1421, %v1418, 0
        %v1432 = vsel %vm1421, %v1420, 0
        %1434 = vmatpush.bf16.xpose.msra.mxu0 0
        %1435 = vmatpush.bf16.xpose.msra.mxu0 0
        %1436 = vmatpush.bf16.xpose.msra.mxu0 0
        %1437 = vmatpush.bf16.xpose.msra.mxu0 0
        %1438 = vmatpush.bf16.xpose.msra.mxu0 0
        %1439 = vmatpush.bf16.xpose.msra.mxu0 0
        %1440 = vmatpush.bf16.xpose.msra.mxu0 %v1432
        %1441 = vmatpush.bf16.xpose.msra.mxu0 %v1429
        %1442 = vmatmul.bf16.gmra.mxu0 %v1423
        %v1443 = vpop.f32.mrf.mxu0
        %v1444 = vadd.f32 0.0, %v1443
        %v1445 = vpop.f32.mrf.mxu0
        %v1446 = vadd.f32 0.0, %v1445
        %1447 = vmatmul.bf16.gmra.mxu0 %v1426
        %v1448 = vpop.f32.mrf.mxu0
        %v1449 = vadd.f32 0.0, %v1448
        %v1450 = vpop.f32.mrf.mxu0
        %v1451 = vadd.f32 0.0, %v1450
        %1452 = vdwg.mxu0
        %v1453 = vmul.f32 %v1444, 0.25
        %v1454 = vmul.f32 %v1446, 0.25
        %v1455 = vmul.f32 %v1449, 0.25
        %v1456 = vmul.f32 %v1451, 0.25
        %v1457 = vsel %vm1242, %v1453, -inf
        %1458 = vmax.xlane.f32.xlu0 %v1457
        %v1459 = vpop.xlane.xlu0 %1458
        %v1460 = vsel %vm1242, %v1454, -inf
        %1461 = vmax.xlane.f32.xlu0 %v1460
        %v1462 = vpop.xlane.xlu0 %1461
        %v1463 = vsel %vm1242, %v1455, -inf
        %1464 = vmax.xlane.f32.xlu0 %v1463
        %v1465 = vpop.xlane.xlu0 %1464
        %v1466 = vsel %vm1242, %v1456, -inf
        %1467 = vmax.xlane.f32.xlu0 %v1466
        %v1468 = vpop.xlane.xlu0 %1467
        %v1469 = vsub.f32 %v1453, %v1459
        %v1470 = vsub.f32 %v1454, %v1462
        %v1471 = vsub.f32 %v1455, %v1465
        %v1472 = vsub.f32 %v1456, %v1468
        %v1473 = vmul.f32 %v1469, 1.442695
        %v1474 = vpow.pop %v1473
        %v1475 = vmul.f32 %v1470, 1.442695
        %v1476 = vpow.pop %v1475
        %v1477 = vmul.f32 %v1471, 1.442695
        %v1478 = vpow.pop %v1477
        %v1479 = vmul.f32 %v1472, 1.442695
        %v1480 = vpow.pop %v1479
        %v1481 = vsel %vm1242, %v1474, 0.0
        %1482 = vadd.xlane.f32.xlu0 %v1481
        %v1483 = vpop.xlane.xlu0 %1482
        %v1484 = vsel %vm1242, %v1476, 0.0
        %1485 = vadd.xlane.f32.xlu0 %v1484
        %v1486 = vpop.xlane.xlu0 %1485
        %v1487 = vsel %vm1242, %v1478, 0.0
        %1488 = vadd.xlane.f32.xlu0 %v1487
        %v1489 = vpop.xlane.xlu0 %1488
        %v1490 = vsel %vm1242, %v1480, 0.0
        %1491 = vadd.xlane.f32.xlu0 %v1490
        %v1492 = vpop.xlane.xlu0 %1491
        %v1493 = vrcp.pop %v1483
        %v1494 = vrcp.pop %v1486
        %v1495 = vrcp.pop %v1489
        %v1496 = vrcp.pop %v1492
        %v1497 = vmul.f32 %v1474, %v1493
        %v1498 = vmul.f32 %v1476, %v1494
        %v1499 = vmul.f32 %v1478, %v1495
        %v1500 = vmul.f32 %v1480, %v1496
        %v1501 = vpack.c.bf16 %v1498, %v1497
        %v1502 = vpack.c.bf16 %v1500, %v1499
        %1503 = vrot.lane.b32.xlu0 %v1413, 64
        %v1504 = vpop.permute.xlu0 %1503
        %1505 = vrot.lane.b32.xlu0 %v1414, 64
        %v1506 = vpop.permute.xlu0 %1505
        %v1510 = vsel %vm1242, %v1501, 0
        %v1513 = vsel %vm1242, %v1502, 0
        %1515 = vmatpush.bf16.msra.mxu0 0
        %1516 = vmatpush.bf16.msra.mxu0 0
        %1517 = vmatpush.bf16.msra.mxu0 0
        %1518 = vmatpush.bf16.msra.mxu0 0
        %1519 = vmatpush.bf16.msra.mxu0 0
        %1520 = vmatpush.bf16.msra.mxu0 0
        %1521 = vmatpush.bf16.msra.mxu0 %v1506
        %1522 = vmatpush.bf16.msra.mxu0 %v1504
        %1523 = vmatmul.bf16.gmra.mxu0 %v1510
        %v1524 = vpop.f32.mrf.mxu0
        %v1525 = vadd.f32 0.0, %v1524
        %v1526 = vpop.f32.mrf.mxu0
        %v1527 = vadd.f32 0.0, %v1526
        %1528 = vmatmul.bf16.gmra.mxu0 %v1513
        %v1529 = vpop.f32.mrf.mxu0
        %v1530 = vadd.f32 0.0, %v1529
        %v1531 = vpop.f32.mrf.mxu0
        %v1532 = vadd.f32 0.0, %v1531
        %1533 = vdwg.mxu0
        %1534 = vrot.lane.b32.xlu0 %v1413, 112
        %v1535 = vpop.permute.xlu0 %1534
        %1536 = vrot.lane.b32.xlu0 %v1414, 112
        %v1537 = vpop.permute.xlu0 %1536
        %1538 = vrot.lane.b32.xlu0 %v1413, 80
        %v1539 = vpop.permute.xlu0 %1538
        %1540 = vrot.lane.b32.xlu0 %v1414, 80
        %v1541 = vpop.permute.xlu0 %1540
        %v1543 = vsel %vm1421, %v1535, 0
        %v1546 = vsel %vm1421, %v1537, 0
        %v1549 = vsel %vm1421, %v1539, 0
        %v1552 = vsel %vm1421, %v1541, 0
        %1554 = vmatpush.bf16.xpose.msra.mxu0 0
        %1555 = vmatpush.bf16.xpose.msra.mxu0 0
        %1556 = vmatpush.bf16.xpose.msra.mxu0 0
        %1557 = vmatpush.bf16.xpose.msra.mxu0 0
        %1558 = vmatpush.bf16.xpose.msra.mxu0 0
        %1559 = vmatpush.bf16.xpose.msra.mxu0 0
        %1560 = vmatpush.bf16.xpose.msra.mxu0 %v1552
        %1561 = vmatpush.bf16.xpose.msra.mxu0 %v1549
        %1562 = vmatmul.bf16.gmra.mxu0 %v1543
        %v1563 = vpop.f32.mrf.mxu0
        %v1564 = vadd.f32 0.0, %v1563
        %v1565 = vpop.f32.mrf.mxu0
        %v1566 = vadd.f32 0.0, %v1565
        %1567 = vmatmul.bf16.gmra.mxu0 %v1546
        %v1568 = vpop.f32.mrf.mxu0
        %v1569 = vadd.f32 0.0, %v1568
        %v1570 = vpop.f32.mrf.mxu0
        %v1571 = vadd.f32 0.0, %v1570
        %1572 = vdwg.mxu0
        %v1573 = vmul.f32 %v1564, 0.25
        %v1574 = vmul.f32 %v1566, 0.25
        %v1575 = vmul.f32 %v1569, 0.25
        %v1576 = vmul.f32 %v1571, 0.25
        %v1577 = vsel %vm1242, %v1573, -inf
        %1578 = vmax.xlane.f32.xlu0 %v1577
        %v1579 = vpop.xlane.xlu0 %1578
        %v1580 = vsel %vm1242, %v1574, -inf
        %1581 = vmax.xlane.f32.xlu0 %v1580
        %v1582 = vpop.xlane.xlu0 %1581
        %v1583 = vsel %vm1242, %v1575, -inf
        %1584 = vmax.xlane.f32.xlu0 %v1583
        %v1585 = vpop.xlane.xlu0 %1584
        %v1586 = vsel %vm1242, %v1576, -inf
        %1587 = vmax.xlane.f32.xlu0 %v1586
        %v1588 = vpop.xlane.xlu0 %1587
        %v1589 = vsub.f32 %v1573, %v1579
        %v1590 = vsub.f32 %v1574, %v1582
        %v1591 = vsub.f32 %v1575, %v1585
        %v1592 = vsub.f32 %v1576, %v1588
        %v1593 = vmul.f32 %v1589, 1.442695
        %v1594 = vpow.pop %v1593
        %v1595 = vmul.f32 %v1590, 1.442695
        %v1596 = vpow.pop %v1595
        %v1597 = vmul.f32 %v1591, 1.442695
        %v1598 = vpow.pop %v1597
        %v1599 = vmul.f32 %v1592, 1.442695
        %v1600 = vpow.pop %v1599
        %v1601 = vsel %vm1242, %v1594, 0.0
        %1602 = vadd.xlane.f32.xlu0 %v1601
        %v1603 = vpop.xlane.xlu0 %1602
        %v1604 = vsel %vm1242, %v1596, 0.0
        %1605 = vadd.xlane.f32.xlu0 %v1604
        %v1606 = vpop.xlane.xlu0 %1605
        %v1607 = vsel %vm1242, %v1598, 0.0
        %1608 = vadd.xlane.f32.xlu0 %v1607
        %v1609 = vpop.xlane.xlu0 %1608
        %v1610 = vsel %vm1242, %v1600, 0.0
        %1611 = vadd.xlane.f32.xlu0 %v1610
        %v1612 = vpop.xlane.xlu0 %1611
        %v1613 = vrcp.pop %v1603
        %v1614 = vrcp.pop %v1606
        %v1615 = vrcp.pop %v1609
        %v1616 = vrcp.pop %v1612
        %v1617 = vmul.f32 %v1594, %v1613
        %v1618 = vmul.f32 %v1596, %v1614
        %v1619 = vmul.f32 %v1598, %v1615
        %v1620 = vmul.f32 %v1600, %v1616
        %v1621 = vpack.c.bf16 %v1618, %v1617
        %v1622 = vpack.c.bf16 %v1620, %v1619
        %1623 = vrot.lane.b32.xlu0 %v1413, 48
        %v1624 = vpop.permute.xlu0 %1623
        %1625 = vrot.lane.b32.xlu0 %v1414, 48
        %v1626 = vpop.permute.xlu0 %1625
        %v1630 = vsel %vm1242, %v1621, 0
        %v1633 = vsel %vm1242, %v1622, 0
        %1635 = vmatpush.bf16.msra.mxu0 0
        %1636 = vmatpush.bf16.msra.mxu0 0
        %1637 = vmatpush.bf16.msra.mxu0 0
        %1638 = vmatpush.bf16.msra.mxu0 0
        %1639 = vmatpush.bf16.msra.mxu0 0
        %1640 = vmatpush.bf16.msra.mxu0 0
        %1641 = vmatpush.bf16.msra.mxu0 %v1626
        %1642 = vmatpush.bf16.msra.mxu0 %v1624
        %1643 = vmatmul.bf16.gmra.mxu0 %v1630
        %v1644 = vpop.f32.mrf.mxu0
        %v1645 = vadd.f32 0.0, %v1644
        %v1646 = vpop.f32.mrf.mxu0
        %v1647 = vadd.f32 0.0, %v1646
        %1648 = vmatmul.bf16.gmra.mxu0 %v1633
        %v1649 = vpop.f32.mrf.mxu0
        %v1650 = vadd.f32 0.0, %v1649
        %v1651 = vpop.f32.mrf.mxu0
        %v1652 = vadd.f32 0.0, %v1651
        %1653 = vdwg.mxu0
        %1658 = vrot.lane.b32.xlu0 %v1645, 16
        %v1659 = vpop.permute.xlu0 %1658
        %1660 = vrot.lane.b32.xlu0 %v1647, 16
        %v1661 = vpop.permute.xlu0 %1660
        %1662 = vrot.lane.b32.xlu0 %v1650, 16
        %v1663 = vpop.permute.xlu0 %1662
        %1664 = vrot.lane.b32.xlu0 %v1652, 16
        %v1665 = vpop.permute.xlu0 %1664
        %v1670 = vsel %vm1421, %v1525, %v1659
        %v1671 = vsel %vm1421, %v1527, %v1661
        %v1672 = vsel %vm1421, %v1530, %v1663
        %v1673 = vsel %vm1421, %v1532, %v1665
        %v1674 = vpack.c.bf16 %v1671, %v1670
        %v1675 = vpack.c.bf16 %v1673, %v1672
        %v1676 = vld [vmem:[%s8] sm:$0xf]
        %v1677 = vld [vmem:[%s8 + $0x4] sm:$0xf]
        %v1678 = vld [vmem:[%s8 + $0x8] sm:$0xf]
        %v1679 = vld [vmem:[%s8 + $0xc] sm:$0xf]
        %v1680 = vld [vmem:[%s9] sm:$0x1]
        %v1682 = vperm.slane %v1680, 0
        %v1688 = vunpack.c.l.b16 %v1676
        %v1689 = vunpack.c.l.b16 %v1677
        %v1690 = vunpack.c.l.b16 %v1678
        %v1691 = vunpack.c.l.b16 %v1679
        %v1692 = vpack.c.b16 %v1689, %v1688
        %v1693 = vpack.c.b16 %v1691, %v1690
        %v1697 = vsel %vm1242, %v1674, 0
        %v1700 = vsel %vm1242, %v1675, 0
        %1702 = vmatpush.bf16.msra.mxu0 0
        %1703 = vmatpush.bf16.msra.mxu0 0
        %1704 = vmatpush.bf16.msra.mxu0 0
        %1705 = vmatpush.bf16.msra.mxu0 0
        %1706 = vmatpush.bf16.msra.mxu0 0
        %1707 = vmatpush.bf16.msra.mxu0 0
        %1708 = vmatpush.bf16.msra.mxu0 %v1693
        %1709 = vmatpush.bf16.msra.mxu0 %v1692
        %1710 = vmatmul.bf16.gmra.mxu0 %v1697
        %v1711 = vpop.f32.mrf.mxu0
        %v1712 = vadd.f32 %v1682, %v1711
        %v1713 = vpop.f32.mrf.mxu0
        %v1714 = vadd.f32 %v1682, %v1713
        %1715 = vmatmul.bf16.gmra.mxu0 %v1700
        %v1716 = vpop.f32.mrf.mxu0
        %v1717 = vadd.f32 %v1682, %v1716
        %v1718 = vpop.f32.mrf.mxu0
        %v1719 = vadd.f32 %v1682, %v1718
        %1720 = vdwg.mxu0
        %v1721 = vadd.f32 %v1712, %v1255
        %v1722 = vadd.f32 %v1714, %v1256
        %v1723 = vadd.f32 %v1717, %v1257
        %v1724 = vadd.f32 %v1719, %v1258
        %v1725 = vld [vmem:[%s10] sm:$0x1]
        %v1726 = vld [vmem:[%s11] sm:$0x1]
        %v1727 = vsel %vm1242, %v1721, 0.0
        %1728 = vadd.xlane.f32.xlu0 %v1727
        %v1729 = vpop.xlane.xlu0 %1728
        %v1730 = vsel %vm1242, %v1722, 0.0
        %1731 = vadd.xlane.f32.xlu0 %v1730
        %v1732 = vpop.xlane.xlu0 %1731
        %v1733 = vsel %vm1242, %v1723, 0.0
        %1734 = vadd.xlane.f32.xlu0 %v1733
        %v1735 = vpop.xlane.xlu0 %1734
        %v1736 = vsel %vm1242, %v1724, 0.0
        %1737 = vadd.xlane.f32.xlu0 %v1736
        %v1738 = vpop.xlane.xlu0 %1737
        %v1739 = vmul.f32 %v1729, %v1279
        %v1740 = vmul.f32 %v1732, %v1279
        %v1741 = vmul.f32 %v1735, %v1279
        %v1742 = vmul.f32 %v1738, %v1279
        %v1743 = vsub.f32 %v1721, %v1739
        %v1744 = vsub.f32 %v1722, %v1740
        %v1745 = vsub.f32 %v1723, %v1741
        %v1746 = vsub.f32 %v1724, %v1742
        %v1747 = vmul.f32 %v1743, %v1743
        %v1748 = vmul.f32 %v1744, %v1744
        %v1749 = vmul.f32 %v1745, %v1745
        %v1750 = vmul.f32 %v1746, %v1746
        %v1751 = vsel %vm1242, %v1747, 0.0
        %1752 = vadd.xlane.f32.xlu0 %v1751
        %v1753 = vpop.xlane.xlu0 %1752
        %v1754 = vsel %vm1242, %v1748, 0.0
        %1755 = vadd.xlane.f32.xlu0 %v1754
        %v1756 = vpop.xlane.xlu0 %1755
        %v1757 = vsel %vm1242, %v1749, 0.0
        %1758 = vadd.xlane.f32.xlu0 %v1757
        %v1759 = vpop.xlane.xlu0 %1758
        %v1760 = vsel %vm1242, %v1750, 0.0
        %1761 = vadd.xlane.f32.xlu0 %v1760
        %v1762 = vpop.xlane.xlu0 %1761
        %v1763 = vmul.f32 %v1753, %v1279
        %v1764 = vmul.f32 %v1756, %v1279
        %v1765 = vmul.f32 %v1759, %v1279
        %v1766 = vmul.f32 %v1762, %v1279
        %v1767 = vadd.f32 %v1763, 1e-05
        %v1768 = vadd.f32 %v1764, 1e-05
        %v1769 = vadd.f32 %v1765, 1e-05
        %v1770 = vadd.f32 %v1766, 1e-05
        %v1771 = vrsqrt.pop %v1767
        %v1772 = vmul.f32 %v1771, %v1767
        %v1773 = vmul.f32 %v1772, %v1771
        %v1774 = vmul.f32 0.5, %v1773
        %v1775 = vsub.f32 1.5, %v1774
        %v1776 = vmul.f32 %v1771, %v1775
        %vm1777 = vweird.f32 %v1767
        %vm1778 = vweird.f32 %v1771
        %vm1779 = vmor %vm1777, %vm1778
        %v1780 = vsel %vm1779, %v1771, %v1776
        %v1781 = vrsqrt.pop %v1768
        %v1782 = vmul.f32 %v1781, %v1768
        %v1783 = vmul.f32 %v1782, %v1781
        %v1784 = vmul.f32 0.5, %v1783
        %v1785 = vsub.f32 1.5, %v1784
        %v1786 = vmul.f32 %v1781, %v1785
        %vm1787 = vweird.f32 %v1768
        %vm1788 = vweird.f32 %v1781
        %vm1789 = vmor %vm1787, %vm1788
        %v1790 = vsel %vm1789, %v1781, %v1786
        %v1791 = vrsqrt.pop %v1769
        %v1792 = vmul.f32 %v1791, %v1769
        %v1793 = vmul.f32 %v1792, %v1791
        %v1794 = vmul.f32 0.5, %v1793
        %v1795 = vsub.f32 1.5, %v1794
        %v1796 = vmul.f32 %v1791, %v1795
        %vm1797 = vweird.f32 %v1769
        %vm1798 = vweird.f32 %v1791
        %vm1799 = vmor %vm1797, %vm1798
        %v1800 = vsel %vm1799, %v1791, %v1796
        %v1801 = vrsqrt.pop %v1770
        %v1802 = vmul.f32 %v1801, %v1770
        %v1803 = vmul.f32 %v1802, %v1801
        %v1804 = vmul.f32 0.5, %v1803
        %v1805 = vsub.f32 1.5, %v1804
        %v1806 = vmul.f32 %v1801, %v1805
        %vm1807 = vweird.f32 %v1770
        %vm1808 = vweird.f32 %v1801
        %vm1809 = vmor %vm1807, %vm1808
        %v1810 = vsel %vm1809, %v1801, %v1806
        %v1811 = vmul.f32 %v1743, %v1780
        %v1812 = vmul.f32 %v1744, %v1790
        %v1813 = vmul.f32 %v1745, %v1800
        %v1814 = vmul.f32 %v1746, %v1810
        %v1816 = vperm.slane %v1725, 0
        %v1818 = vmul.f32 %v1811, %v1816
        %v1819 = vmul.f32 %v1812, %v1816
        %v1820 = vmul.f32 %v1813, %v1816
        %v1821 = vmul.f32 %v1814, %v1816
        %v1823 = vperm.slane %v1726, 0
        %v1825 = vadd.f32 %v1818, %v1823
        %v1826 = vadd.f32 %v1819, %v1823
        %v1827 = vadd.f32 %v1820, %v1823
        %v1828 = vadd.f32 %v1821, %v1823
        %v1829 = vpack.c.bf16 %v1826, %v1825
        %v1830 = vpack.c.bf16 %v1828, %v1827
        %v1831 = vld [vmem:[%s12] sm:$0xf]
        %v1832 = vld [vmem:[%s12 + $0x4] sm:$0xf]
        %v1833 = vld [vmem:[%s12 + $0x8] sm:$0xf]
        %v1834 = vld [vmem:[%s12 + $0xc] sm:$0xf]
        %v1835 = vld [vmem:[%s13] sm:$0x1]
        %v1837 = vperm.slane %v1835, 0
        %v1843 = vunpack.c.l.b16 %v1831
        %v1844 = vunpack.c.l.b16 %v1832
        %v1845 = vunpack.c.l.b16 %v1833
        %v1846 = vunpack.c.l.b16 %v1834
        %v1847 = vpack.c.b16 %v1844, %v1843
        %v1848 = vpack.c.b16 %v1846, %v1845
        %v1852 = vsel %vm1242, %v1829, 0
        %v1855 = vsel %vm1242, %v1830, 0
        %1857 = vmatpush.bf16.msra.mxu0 0
        %1858 = vmatpush.bf16.msra.mxu0 0
        %1859 = vmatpush.bf16.msra.mxu0 0
        %1860 = vmatpush.bf16.msra.mxu0 0
        %1861 = vmatpush.bf16.msra.mxu0 0
        %1862 = vmatpush.bf16.msra.mxu0 0
        %1863 = vmatpush.bf16.msra.mxu0 %v1848
        %1864 = vmatpush.bf16.msra.mxu0 %v1847
        %1865 = vmatmul.bf16.gmra.mxu0 %v1852
        %v1866 = vpop.f32.mrf.mxu0
        %v1867 = vadd.f32 %v1837, %v1866
        %v1868 = vpop.f32.mrf.mxu0
        %v1869 = vadd.f32 %v1837, %v1868
        %1870 = vmatmul.bf16.gmra.mxu0 %v1855
        %v1871 = vpop.f32.mrf.mxu0
        %v1872 = vadd.f32 %v1837, %v1871
        %v1873 = vpop.f32.mrf.mxu0
        %v1874 = vadd.f32 %v1837, %v1873
        %1875 = vdwg.mxu0
        %v1876 = vmul.f32 %v1867, 0.5
        %v1877 = vmul.f32 %v1869, 0.5
        %v1878 = vmul.f32 %v1872, 0.5
        %v1879 = vmul.f32 %v1874, 0.5
        %v1880 = vmul.f32 %v1867, 0.70710677
        %v1881 = vmul.f32 %v1869, 0.70710677
        %v1882 = vmul.f32 %v1872, 0.70710677
        %v1883 = vmul.f32 %v1874, 0.70710677
        %v1884 = vmax.f32 %v1880, -4.0
        %v1885 = vmax.f32 %v1881, -4.0
        %v1886 = vmax.f32 %v1882, -4.0
        %v1887 = vmax.f32 %v1883, -4.0
        %v1888 = vmin.f32 %v1884, 4.0
        %v1889 = vmin.f32 %v1885, 4.0
        %v1890 = vmin.f32 %v1886, 4.0
        %v1891 = vmin.f32 %v1887, 4.0
        %v1892 = vmul.f32 %v1888, %v1888
        %v1893 = vmul.f32 %v1889, %v1889
        %v1894 = vmul.f32 %v1890, %v1890
        %v1895 = vmul.f32 %v1891, %v1891
        %v1896 = vmul.f32 %v1892, -2.7261424e-10
        %v1897 = vmul.f32 %v1893, -2.7261424e-10
        %v1898 = vmul.f32 %v1894, -2.7261424e-10
        %v1899 = vmul.f32 %v1895, -2.7261424e-10
        %v1900 = vadd.f32 %v1896, 2.7706815e-08
        %v1901 = vadd.f32 %v1897, 2.7706815e-08
        %v1902 = vadd.f32 %v1898, 2.7706815e-08
        %v1903 = vadd.f32 %v1899, 2.7706815e-08
        %v1904 = vmul.f32 %v1900, %v1892
        %v1905 = vmul.f32 %v1901, %v1893
        %v1906 = vmul.f32 %v1902, %v1894
        %v1907 = vmul.f32 %v1903, %v1895
        %v1908 = vadd.f32 %v1904, -2.101024e-06
        %v1909 = vadd.f32 %v1905, -2.101024e-06
        %v1910 = vadd.f32 %v1906, -2.101024e-06
        %v1911 = vadd.f32 %v1907, -2.101024e-06
        %v1912 = vmul.f32 %v1908, %v1892
        %v1913 = vmul.f32 %v1909, %v1893
        %v1914 = vmul.f32 %v1910, %v1894
        %v1915 = vmul.f32 %v1911, %v1895
        %v1916 = vadd.f32 %v1912, -5.6925062e-05
        %v1917 = vadd.f32 %v1913, -5.6925062e-05
        %v1918 = vadd.f32 %v1914, -5.6925062e-05
        %v1919 = vadd.f32 %v1915, -5.6925062e-05
        %v1920 = vmul.f32 %v1916, %v1892
        %v1921 = vmul.f32 %v1917, %v1893
        %v1922 = vmul.f32 %v1918, %v1894
        %v1923 = vmul.f32 %v1919, %v1895
        %v1924 = vadd.f32 %v1920, -0.00073499064
        %v1925 = vadd.f32 %v1921, -0.00073499064
        %v1926 = vadd.f32 %v1922, -0.00073499064
        %v1927 = vadd.f32 %v1923, -0.00073499064
        %v1928 = vmul.f32 %v1924, %v1892
        %v1929 = vmul.f32 %v1925, %v1893
        %v1930 = vmul.f32 %v1926, %v1894
        %v1931 = vmul.f32 %v1927, %v1895
        %v1932 = vadd.f32 %v1928, -0.0029546
        %v1933 = vadd.f32 %v1929, -0.0029546
        %v1934 = vadd.f32 %v1930, -0.0029546
        %v1935 = vadd.f32 %v1931, -0.0029546
        %v1936 = vmul.f32 %v1932, %v1892
        %v1937 = vmul.f32 %v1933, %v1893
        %v1938 = vmul.f32 %v1934, %v1894
        %v1939 = vmul.f32 %v1935, %v1895
        %v1940 = vadd.f32 %v1936, -0.016096033
        %v1941 = vadd.f32 %v1937, -0.016096033
        %v1942 = vadd.f32 %v1938, -0.016096033
        %v1943 = vadd.f32 %v1939, -0.016096033
        %v1944 = vmul.f32 %v1940, %v1888
        %v1945 = vmul.f32 %v1941, %v1889
        %v1946 = vmul.f32 %v1942, %v1890
        %v1947 = vmul.f32 %v1943, %v1891
        %v1948 = vmul.f32 %v1892, -1.45660715e-05
        %v1949 = vmul.f32 %v1893, -1.45660715e-05
        %v1950 = vmul.f32 %v1894, -1.45660715e-05
        %v1951 = vmul.f32 %v1895, -1.45660715e-05
        %v1952 = vadd.f32 %v1948, -0.00021337405
        %v1953 = vadd.f32 %v1949, -0.00021337405
        %v1954 = vadd.f32 %v1950, -0.00021337405
        %v1955 = vadd.f32 %v1951, -0.00021337405
        %v1956 = vmul.f32 %v1952, %v1892
        %v1957 = vmul.f32 %v1953, %v1893
        %v1958 = vmul.f32 %v1954, %v1894
        %v1959 = vmul.f32 %v1955, %v1895
        %v1960 = vadd.f32 %v1956, -0.001682827
        %v1961 = vadd.f32 %v1957, -0.001682827
        %v1962 = vadd.f32 %v1958, -0.001682827
        %v1963 = vadd.f32 %v1959, -0.001682827
        %v1964 = vmul.f32 %v1960, %v1892
        %v1965 = vmul.f32 %v1961, %v1893
        %v1966 = vmul.f32 %v1962, %v1894
        %v1967 = vmul.f32 %v1963, %v1895
        %v1968 = vadd.f32 %v1964, -0.0073733293
        %v1969 = vadd.f32 %v1965, -0.0073733293
        %v1970 = vadd.f32 %v1966, -0.0073733293
        %v1971 = vadd.f32 %v1967, -0.0073733293
        %v1972 = vmul.f32 %v1968, %v1892
        %v1973 = vmul.f32 %v1969, %v1893
        %v1974 = vmul.f32 %v1970, %v1894
        %v1975 = vmul.f32 %v1971, %v1895
        %v1976 = vadd.f32 %v1972, -0.014264739
        %v1977 = vadd.f32 %v1973, -0.014264739
        %v1978 = vadd.f32 %v1974, -0.014264739
        %v1979 = vadd.f32 %v1975, -0.014264739
        %v1980 = vrcp.pop %v1976
        %v1981 = vmul.f32 %v1976, %v1980
        %v1982 = vsub.f32 1.0, %v1981
        %v1983 = vmul.f32 %v1980, %v1982
        %v1984 = vadd.f32 %v1980, %v1983
        %vm1985 = vweird.f32 %v1976
        %vm1986 = vweird.f32 %v1980
        %vm1987 = vmor %vm1985, %vm1986
        %v1988 = vsel %vm1987, %v1980, %v1984
        %v1989 = vand.u32 2147483647, %v1976
        %vm1990 = vcmp.eq.f32.partialorder %v1989, 8.507059e+37
        %v1991 = vand.u32 %v1976, 2147483648
        %v1992 = vor.u32 1.1754944e-38, %v1991
        %v1993 = vsel %vm1990, %v1992, %v1988
        %v1994 = vmul.f32 %v1944, %v1993
        %v1995 = vrcp.pop %v1977
        %v1996 = vmul.f32 %v1977, %v1995
        %v1997 = vsub.f32 1.0, %v1996
        %v1998 = vmul.f32 %v1995, %v1997
        %v1999 = vadd.f32 %v1995, %v1998
        %vm2000 = vweird.f32 %v1977
        %vm2001 = vweird.f32 %v1995
        %vm2002 = vmor %vm2000, %vm2001
        %v2003 = vsel %vm2002, %v1995, %v1999
        %v2004 = vand.u32 2147483647, %v1977
        %vm2005 = vcmp.eq.f32.partialorder %v2004, 8.507059e+37
        %v2006 = vand.u32 %v1977, 2147483648
        %v2007 = vor.u32 1.1754944e-38, %v2006
        %v2008 = vsel %vm2005, %v2007, %v2003
        %v2009 = vmul.f32 %v1945, %v2008
        %v2010 = vrcp.pop %v1978
        %v2011 = vmul.f32 %v1978, %v2010
        %v2012 = vsub.f32 1.0, %v2011
        %v2013 = vmul.f32 %v2010, %v2012
        %v2014 = vadd.f32 %v2010, %v2013
        %vm2015 = vweird.f32 %v1978
        %vm2016 = vweird.f32 %v2010
        %vm2017 = vmor %vm2015, %vm2016
        %v2018 = vsel %vm2017, %v2010, %v2014
        %v2019 = vand.u32 2147483647, %v1978
        %vm2020 = vcmp.eq.f32.partialorder %v2019, 8.507059e+37
        %v2021 = vand.u32 %v1978, 2147483648
        %v2022 = vor.u32 1.1754944e-38, %v2021
        %v2023 = vsel %vm2020, %v2022, %v2018
        %v2024 = vmul.f32 %v1946, %v2023
        %v2025 = vrcp.pop %v1979
        %v2026 = vmul.f32 %v1979, %v2025
        %v2027 = vsub.f32 1.0, %v2026
        %v2028 = vmul.f32 %v2025, %v2027
        %v2029 = vadd.f32 %v2025, %v2028
        %vm2030 = vweird.f32 %v1979
        %vm2031 = vweird.f32 %v2025
        %vm2032 = vmor %vm2030, %vm2031
        %v2033 = vsel %vm2032, %v2025, %v2029
        %v2034 = vand.u32 2147483647, %v1979
        %vm2035 = vcmp.eq.f32.partialorder %v2034, 8.507059e+37
        %v2036 = vand.u32 %v1979, 2147483648
        %v2037 = vor.u32 1.1754944e-38, %v2036
        %v2038 = vsel %vm2035, %v2037, %v2033
        %v2039 = vmul.f32 %v1947, %v2038
        %v2040 = vadd.f32 %v1994, 1.0
        %v2041 = vadd.f32 %v2009, 1.0
        %v2042 = vadd.f32 %v2024, 1.0
        %v2043 = vadd.f32 %v2039, 1.0
        %v2044 = vmul.f32 %v1876, %v2040
        %v2045 = vmul.f32 %v1877, %v2041
        %v2046 = vmul.f32 %v1878, %v2042
        %v2047 = vmul.f32 %v1879, %v2043
        %v2048 = vpack.c.bf16 %v2045, %v2044
        %v2049 = vpack.c.bf16 %v2047, %v2046
        %v2050 = vld [vmem:[%s14] sm:$0xf]
        %v2051 = vld [vmem:[%s14 + $0x4] sm:$0xf]
        %v2052 = vld [vmem:[%s14 + $0x8] sm:$0xf]
        %v2053 = vld [vmem:[%s14 + $0xc] sm:$0xf]
        %v2054 = vld [vmem:[%s14 + $0x10] sm:$0xf]
        %v2055 = vld [vmem:[%s14 + $0x14] sm:$0xf]
        %v2056 = vld [vmem:[%s14 + $0x18] sm:$0xf]
        %v2057 = vld [vmem:[%s14 + $0x1c] sm:$0xf]
        %v2058 = vld [vmem:[%s15] sm:$0x1]
        %v2060 = vperm.slane %v2058, 0
        %v2070 = vunpack.c.l.b16 %v2050
        %v2071 = vunpack.c.l.b16 %v2051
        %v2072 = vunpack.c.l.b16 %v2052
        %v2073 = vunpack.c.l.b16 %v2053
        %v2074 = vunpack.c.l.b16 %v2054
        %v2075 = vunpack.c.l.b16 %v2055
        %v2076 = vunpack.c.l.b16 %v2056
        %v2077 = vunpack.c.l.b16 %v2057
        %v2078 = vpack.c.b16 %v2071, %v2070
        %v2079 = vpack.c.b16 %v2073, %v2072
        %v2080 = vpack.c.b16 %v2075, %v2074
        %v2081 = vpack.c.b16 %v2077, %v2076
        %vm2086 = vcmask 523264
        %v2088 = vsel %vm2086, %v2048, 0
        %v2091 = vsel %vm2086, %v2049, 0
        %2093 = vmatpush.bf16.msra.mxu0 0
        %2094 = vmatpush.bf16.msra.mxu0 0
        %2095 = vmatpush.bf16.msra.mxu0 0
        %2096 = vmatpush.bf16.msra.mxu0 0
        %2097 = vmatpush.bf16.msra.mxu0 %v2081
        %2098 = vmatpush.bf16.msra.mxu0 %v2080
        %2099 = vmatpush.bf16.msra.mxu0 %v2079
        %2100 = vmatpush.bf16.msra.mxu0 %v2078
        %2101 = vmatmul.bf16.gmra.mxu0 %v2088
        %v2102 = vpop.f32.mrf.mxu0
        %v2103 = vadd.f32 %v2060, %v2102
        %v2104 = vpop.f32.mrf.mxu0
        %v2105 = vadd.f32 %v2060, %v2104
        %2106 = vmatmul.bf16.gmra.mxu0 %v2091
        %v2107 = vpop.f32.mrf.mxu0
        %v2108 = vadd.f32 %v2060, %v2107
        %v2109 = vpop.f32.mrf.mxu0
        %v2110 = vadd.f32 %v2060, %v2109
        %2111 = vdwg.mxu0
        %v2112 = vadd.f32 %v2103, %v1721
        %v2113 = vadd.f32 %v2105, %v1722
        %v2114 = vadd.f32 %v2108, %v1723
        %v2115 = vadd.f32 %v2110, %v1724
        %s2116 = scalar_lea.vmem %s5, 1
        %v2117 = vld [vmem:[%s2116] sm:$0x1]
        %s2118 = scalar_lea.vmem %s6, 1
        %v2119 = vld [vmem:[%s2118] sm:$0x1]
        %v2120 = vsel %vm1242, %v2112, 0.0
        %2121 = vadd.xlane.f32.xlu0 %v2120
        %v2122 = vpop.xlane.xlu0 %2121
        %v2123 = vsel %vm1242, %v2113, 0.0
        %2124 = vadd.xlane.f32.xlu0 %v2123
        %v2125 = vpop.xlane.xlu0 %2124
        %v2126 = vsel %vm1242, %v2114, 0.0
        %2127 = vadd.xlane.f32.xlu0 %v2126
        %v2128 = vpop.xlane.xlu0 %2127
        %v2129 = vsel %vm1242, %v2115, 0.0
        %2130 = vadd.xlane.f32.xlu0 %v2129
        %v2131 = vpop.xlane.xlu0 %2130
        %v2132 = vmul.f32 %v2122, %v1279
        %v2133 = vmul.f32 %v2125, %v1279
        %v2134 = vmul.f32 %v2128, %v1279
        %v2135 = vmul.f32 %v2131, %v1279
        %v2136 = vsub.f32 %v2112, %v2132
        %v2137 = vsub.f32 %v2113, %v2133
        %v2138 = vsub.f32 %v2114, %v2134
        %v2139 = vsub.f32 %v2115, %v2135
        %v2140 = vmul.f32 %v2136, %v2136
        %v2141 = vmul.f32 %v2137, %v2137
        %v2142 = vmul.f32 %v2138, %v2138
        %v2143 = vmul.f32 %v2139, %v2139
        %v2144 = vsel %vm1242, %v2140, 0.0
        %2145 = vadd.xlane.f32.xlu0 %v2144
        %v2146 = vpop.xlane.xlu0 %2145
        %v2147 = vsel %vm1242, %v2141, 0.0
        %2148 = vadd.xlane.f32.xlu0 %v2147
        %v2149 = vpop.xlane.xlu0 %2148
        %v2150 = vsel %vm1242, %v2142, 0.0
        %2151 = vadd.xlane.f32.xlu0 %v2150
        %v2152 = vpop.xlane.xlu0 %2151
        %v2153 = vsel %vm1242, %v2143, 0.0
        %2154 = vadd.xlane.f32.xlu0 %v2153
        %v2155 = vpop.xlane.xlu0 %2154
        %v2156 = vmul.f32 %v2146, %v1279
        %v2157 = vmul.f32 %v2149, %v1279
        %v2158 = vmul.f32 %v2152, %v1279
        %v2159 = vmul.f32 %v2155, %v1279
        %v2160 = vadd.f32 %v2156, 1e-05
        %v2161 = vadd.f32 %v2157, 1e-05
        %v2162 = vadd.f32 %v2158, 1e-05
        %v2163 = vadd.f32 %v2159, 1e-05
        %v2164 = vrsqrt.pop %v2160
        %v2165 = vmul.f32 %v2164, %v2160
        %v2166 = vmul.f32 %v2165, %v2164
        %v2167 = vmul.f32 0.5, %v2166
        %v2168 = vsub.f32 1.5, %v2167
        %v2169 = vmul.f32 %v2164, %v2168
        %vm2170 = vweird.f32 %v2160
        %vm2171 = vweird.f32 %v2164
        %vm2172 = vmor %vm2170, %vm2171
        %v2173 = vsel %vm2172, %v2164, %v2169
        %v2174 = vrsqrt.pop %v2161
        %v2175 = vmul.f32 %v2174, %v2161
        %v2176 = vmul.f32 %v2175, %v2174
        %v2177 = vmul.f32 0.5, %v2176
        %v2178 = vsub.f32 1.5, %v2177
        %v2179 = vmul.f32 %v2174, %v2178
        %vm2180 = vweird.f32 %v2161
        %vm2181 = vweird.f32 %v2174
        %vm2182 = vmor %vm2180, %vm2181
        %v2183 = vsel %vm2182, %v2174, %v2179
        %v2184 = vrsqrt.pop %v2162
        %v2185 = vmul.f32 %v2184, %v2162
        %v2186 = vmul.f32 %v2185, %v2184
        %v2187 = vmul.f32 0.5, %v2186
        %v2188 = vsub.f32 1.5, %v2187
        %v2189 = vmul.f32 %v2184, %v2188
        %vm2190 = vweird.f32 %v2162
        %vm2191 = vweird.f32 %v2184
        %vm2192 = vmor %vm2190, %vm2191
        %v2193 = vsel %vm2192, %v2184, %v2189
        %v2194 = vrsqrt.pop %v2163
        %v2195 = vmul.f32 %v2194, %v2163
        %v2196 = vmul.f32 %v2195, %v2194
        %v2197 = vmul.f32 0.5, %v2196
        %v2198 = vsub.f32 1.5, %v2197
        %v2199 = vmul.f32 %v2194, %v2198
        %vm2200 = vweird.f32 %v2163
        %vm2201 = vweird.f32 %v2194
        %vm2202 = vmor %vm2200, %vm2201
        %v2203 = vsel %vm2202, %v2194, %v2199
        %v2204 = vmul.f32 %v2136, %v2173
        %v2205 = vmul.f32 %v2137, %v2183
        %v2206 = vmul.f32 %v2138, %v2193
        %v2207 = vmul.f32 %v2139, %v2203
        %v2209 = vperm.slane %v2117, 0
        %v2211 = vmul.f32 %v2204, %v2209
        %v2212 = vmul.f32 %v2205, %v2209
        %v2213 = vmul.f32 %v2206, %v2209
        %v2214 = vmul.f32 %v2207, %v2209
        %v2216 = vperm.slane %v2119, 0
        %v2218 = vadd.f32 %v2211, %v2216
        %v2219 = vadd.f32 %v2212, %v2216
        %v2220 = vadd.f32 %v2213, %v2216
        %v2221 = vadd.f32 %v2214, %v2216
        %v2222 = vpack.c.bf16 %v2219, %v2218
        %v2223 = vpack.c.bf16 %v2221, %v2220
        %s2224 = scalar_lea.vmem %s7, 16
        %v2225 = vld [vmem:[%s2224] sm:$0xf]
        %v2226 = vld [vmem:[%s2224 + $0x4] sm:$0xf]
        %v2227 = vld [vmem:[%s2224 + $0x8] sm:$0xf]
        %v2228 = vld [vmem:[%s2224 + $0xc] sm:$0xf]
        %v2233 = vunpack.c.l.b16 %v2225
        %v2234 = vunpack.c.l.b16 %v2226
        %v2235 = vunpack.c.l.b16 %v2227
        %v2236 = vunpack.c.l.b16 %v2228
        %v2237 = vpack.c.b16 %v2234, %v2233
        %v2238 = vpack.c.b16 %v2236, %v2235
        %v2242 = vsel %vm1242, %v2222, 0
        %v2245 = vsel %vm1242, %v2223, 0
        %2247 = vmatpush.bf16.msra.mxu0 0
        %2248 = vmatpush.bf16.msra.mxu0 0
        %2249 = vmatpush.bf16.msra.mxu0 0
        %2250 = vmatpush.bf16.msra.mxu0 0
        %2251 = vmatpush.bf16.msra.mxu0 0
        %2252 = vmatpush.bf16.msra.mxu0 0
        %2253 = vmatpush.bf16.msra.mxu0 %v2238
        %2254 = vmatpush.bf16.msra.mxu0 %v2237
        %2255 = vmatmul.bf16.gmra.mxu0 %v2242
        %v2256 = vpop.f32.mrf.mxu0
        %v2257 = vadd.f32 0.0, %v2256
        %v2258 = vpop.f32.mrf.mxu0
        %v2259 = vadd.f32 0.0, %v2258
        %2260 = vmatmul.bf16.gmra.mxu0 %v2245
        %v2261 = vpop.f32.mrf.mxu0
        %v2262 = vadd.f32 0.0, %v2261
        %v2263 = vpop.f32.mrf.mxu0
        %v2264 = vadd.f32 0.0, %v2263
        %2265 = vdwg.mxu0
        %v2266 = vpack.c.bf16 %v2259, %v2257
        %v2267 = vpack.c.bf16 %v2264, %v2262
        %2270 = vrot.lane.b32.xlu0 %v2266, 96
        %v2271 = vpop.permute.xlu0 %2270
        %2272 = vrot.lane.b32.xlu0 %v2267, 96
        %v2273 = vpop.permute.xlu0 %2272
        %v2275 = vsel %vm1421, %v2266, 0
        %v2278 = vsel %vm1421, %v2267, 0
        %v2281 = vsel %vm1421, %v2271, 0
        %v2284 = vsel %vm1421, %v2273, 0
        %2286 = vmatpush.bf16.xpose.msra.mxu0 0
        %2287 = vmatpush.bf16.xpose.msra.mxu0 0
        %2288 = vmatpush.bf16.xpose.msra.mxu0 0
        %2289 = vmatpush.bf16.xpose.msra.mxu0 0
        %2290 = vmatpush.bf16.xpose.msra.mxu0 0
        %2291 = vmatpush.bf16.xpose.msra.mxu0 0
        %2292 = vmatpush.bf16.xpose.msra.mxu0 %v2284
        %2293 = vmatpush.bf16.xpose.msra.mxu0 %v2281
        %2294 = vmatmul.bf16.gmra.mxu0 %v2275
        %v2295 = vpop.f32.mrf.mxu0
        %v2296 = vadd.f32 0.0, %v2295
        %v2297 = vpop.f32.mrf.mxu0
        %v2298 = vadd.f32 0.0, %v2297
        %2299 = vmatmul.bf16.gmra.mxu0 %v2278
        %v2300 = vpop.f32.mrf.mxu0
        %v2301 = vadd.f32 0.0, %v2300
        %v2302 = vpop.f32.mrf.mxu0
        %v2303 = vadd.f32 0.0, %v2302
        %2304 = vdwg.mxu0
        %v2305 = vmul.f32 %v2296, 0.25
        %v2306 = vmul.f32 %v2298, 0.25
        %v2307 = vmul.f32 %v2301, 0.25
        %v2308 = vmul.f32 %v2303, 0.25
        %v2309 = vsel %vm1242, %v2305, -inf
        %2310 = vmax.xlane.f32.xlu0 %v2309
        %v2311 = vpop.xlane.xlu0 %2310
        %v2312 = vsel %vm1242, %v2306, -inf
        %2313 = vmax.xlane.f32.xlu0 %v2312
        %v2314 = vpop.xlane.xlu0 %2313
        %v2315 = vsel %vm1242, %v2307, -inf
        %2316 = vmax.xlane.f32.xlu0 %v2315
        %v2317 = vpop.xlane.xlu0 %2316
        %v2318 = vsel %vm1242, %v2308, -inf
        %2319 = vmax.xlane.f32.xlu0 %v2318
        %v2320 = vpop.xlane.xlu0 %2319
        %v2321 = vsub.f32 %v2305, %v2311
        %v2322 = vsub.f32 %v2306, %v2314
        %v2323 = vsub.f32 %v2307, %v2317
        %v2324 = vsub.f32 %v2308, %v2320
        %v2325 = vmul.f32 %v2321, 1.442695
        %v2326 = vpow.pop %v2325
        %v2327 = vmul.f32 %v2322, 1.442695
        %v2328 = vpow.pop %v2327
        %v2329 = vmul.f32 %v2323, 1.442695
        %v2330 = vpow.pop %v2329
        %v2331 = vmul.f32 %v2324, 1.442695
        %v2332 = vpow.pop %v2331
        %v2333 = vsel %vm1242, %v2326, 0.0
        %2334 = vadd.xlane.f32.xlu0 %v2333
        %v2335 = vpop.xlane.xlu0 %2334
        %v2336 = vsel %vm1242, %v2328, 0.0
        %2337 = vadd.xlane.f32.xlu0 %v2336
        %v2338 = vpop.xlane.xlu0 %2337
        %v2339 = vsel %vm1242, %v2330, 0.0
        %2340 = vadd.xlane.f32.xlu0 %v2339
        %v2341 = vpop.xlane.xlu0 %2340
        %v2342 = vsel %vm1242, %v2332, 0.0
        %2343 = vadd.xlane.f32.xlu0 %v2342
        %v2344 = vpop.xlane.xlu0 %2343
        %v2345 = vrcp.pop %v2335
        %v2346 = vrcp.pop %v2338
        %v2347 = vrcp.pop %v2341
        %v2348 = vrcp.pop %v2344
        %v2349 = vmul.f32 %v2326, %v2345
        %v2350 = vmul.f32 %v2328, %v2346
        %v2351 = vmul.f32 %v2330, %v2347
        %v2352 = vmul.f32 %v2332, %v2348
        %v2353 = vpack.c.bf16 %v2350, %v2349
        %v2354 = vpack.c.bf16 %v2352, %v2351
        %2355 = vrot.lane.b32.xlu0 %v2266, 64
        %v2356 = vpop.permute.xlu0 %2355
        %2357 = vrot.lane.b32.xlu0 %v2267, 64
        %v2358 = vpop.permute.xlu0 %2357
        %v2362 = vsel %vm1242, %v2353, 0
        %v2365 = vsel %vm1242, %v2354, 0
        %2367 = vmatpush.bf16.msra.mxu0 0
        %2368 = vmatpush.bf16.msra.mxu0 0
        %2369 = vmatpush.bf16.msra.mxu0 0
        %2370 = vmatpush.bf16.msra.mxu0 0
        %2371 = vmatpush.bf16.msra.mxu0 0
        %2372 = vmatpush.bf16.msra.mxu0 0
        %2373 = vmatpush.bf16.msra.mxu0 %v2358
        %2374 = vmatpush.bf16.msra.mxu0 %v2356
        %2375 = vmatmul.bf16.gmra.mxu0 %v2362
        %v2376 = vpop.f32.mrf.mxu0
        %v2377 = vadd.f32 0.0, %v2376
        %v2378 = vpop.f32.mrf.mxu0
        %v2379 = vadd.f32 0.0, %v2378
        %2380 = vmatmul.bf16.gmra.mxu0 %v2365
        %v2381 = vpop.f32.mrf.mxu0
        %v2382 = vadd.f32 0.0, %v2381
        %v2383 = vpop.f32.mrf.mxu0
        %v2384 = vadd.f32 0.0, %v2383
        %2385 = vdwg.mxu0
        %2386 = vrot.lane.b32.xlu0 %v2266, 112
        %v2387 = vpop.permute.xlu0 %2386
        %2388 = vrot.lane.b32.xlu0 %v2267, 112
        %v2389 = vpop.permute.xlu0 %2388
        %2390 = vrot.lane.b32.xlu0 %v2266, 80
        %v2391 = vpop.permute.xlu0 %2390
        %2392 = vrot.lane.b32.xlu0 %v2267, 80
        %v2393 = vpop.permute.xlu0 %2392
        %v2395 = vsel %vm1421, %v2387, 0
        %v2398 = vsel %vm1421, %v2389, 0
        %v2401 = vsel %vm1421, %v2391, 0
        %v2404 = vsel %vm1421, %v2393, 0
        %2406 = vmatpush.bf16.xpose.msra.mxu0 0
        %2407 = vmatpush.bf16.xpose.msra.mxu0 0
        %2408 = vmatpush.bf16.xpose.msra.mxu0 0
        %2409 = vmatpush.bf16.xpose.msra.mxu0 0
        %2410 = vmatpush.bf16.xpose.msra.mxu0 0
        %2411 = vmatpush.bf16.xpose.msra.mxu0 0
        %2412 = vmatpush.bf16.xpose.msra.mxu0 %v2404
        %2413 = vmatpush.bf16.xpose.msra.mxu0 %v2401
        %2414 = vmatmul.bf16.gmra.mxu0 %v2395
        %v2415 = vpop.f32.mrf.mxu0
        %v2416 = vadd.f32 0.0, %v2415
        %v2417 = vpop.f32.mrf.mxu0
        %v2418 = vadd.f32 0.0, %v2417
        %2419 = vmatmul.bf16.gmra.mxu0 %v2398
        %v2420 = vpop.f32.mrf.mxu0
        %v2421 = vadd.f32 0.0, %v2420
        %v2422 = vpop.f32.mrf.mxu0
        %v2423 = vadd.f32 0.0, %v2422
        %2424 = vdwg.mxu0
        %v2425 = vmul.f32 %v2416, 0.25
        %v2426 = vmul.f32 %v2418, 0.25
        %v2427 = vmul.f32 %v2421, 0.25
        %v2428 = vmul.f32 %v2423, 0.25
        %v2429 = vsel %vm1242, %v2425, -inf
        %2430 = vmax.xlane.f32.xlu0 %v2429
        %v2431 = vpop.xlane.xlu0 %2430
        %v2432 = vsel %vm1242, %v2426, -inf
        %2433 = vmax.xlane.f32.xlu0 %v2432
        %v2434 = vpop.xlane.xlu0 %2433
        %v2435 = vsel %vm1242, %v2427, -inf
        %2436 = vmax.xlane.f32.xlu0 %v2435
        %v2437 = vpop.xlane.xlu0 %2436
        %v2438 = vsel %vm1242, %v2428, -inf
        %2439 = vmax.xlane.f32.xlu0 %v2438
        %v2440 = vpop.xlane.xlu0 %2439
        %v2441 = vsub.f32 %v2425, %v2431
        %v2442 = vsub.f32 %v2426, %v2434
        %v2443 = vsub.f32 %v2427, %v2437
        %v2444 = vsub.f32 %v2428, %v2440
        %v2445 = vmul.f32 %v2441, 1.442695
        %v2446 = vpow.pop %v2445
        %v2447 = vmul.f32 %v2442, 1.442695
        %v2448 = vpow.pop %v2447
        %v2449 = vmul.f32 %v2443, 1.442695
        %v2450 = vpow.pop %v2449
        %v2451 = vmul.f32 %v2444, 1.442695
        %v2452 = vpow.pop %v2451
        %v2453 = vsel %vm1242, %v2446, 0.0
        %2454 = vadd.xlane.f32.xlu0 %v2453
        %v2455 = vpop.xlane.xlu0 %2454
        %v2456 = vsel %vm1242, %v2448, 0.0
        %2457 = vadd.xlane.f32.xlu0 %v2456
        %v2458 = vpop.xlane.xlu0 %2457
        %v2459 = vsel %vm1242, %v2450, 0.0
        %2460 = vadd.xlane.f32.xlu0 %v2459
        %v2461 = vpop.xlane.xlu0 %2460
        %v2462 = vsel %vm1242, %v2452, 0.0
        %2463 = vadd.xlane.f32.xlu0 %v2462
        %v2464 = vpop.xlane.xlu0 %2463
        %v2465 = vrcp.pop %v2455
        %v2466 = vrcp.pop %v2458
        %v2467 = vrcp.pop %v2461
        %v2468 = vrcp.pop %v2464
        %v2469 = vmul.f32 %v2446, %v2465
        %v2470 = vmul.f32 %v2448, %v2466
        %v2471 = vmul.f32 %v2450, %v2467
        %v2472 = vmul.f32 %v2452, %v2468
        %v2473 = vpack.c.bf16 %v2470, %v2469
        %v2474 = vpack.c.bf16 %v2472, %v2471
        %2475 = vrot.lane.b32.xlu0 %v2266, 48
        %v2476 = vpop.permute.xlu0 %2475
        %2477 = vrot.lane.b32.xlu0 %v2267, 48
        %v2478 = vpop.permute.xlu0 %2477
        %v2482 = vsel %vm1242, %v2473, 0
        %v2485 = vsel %vm1242, %v2474, 0
        %2487 = vmatpush.bf16.msra.mxu0 0
        %2488 = vmatpush.bf16.msra.mxu0 0
        %2489 = vmatpush.bf16.msra.mxu0 0
        %2490 = vmatpush.bf16.msra.mxu0 0
        %2491 = vmatpush.bf16.msra.mxu0 0
        %2492 = vmatpush.bf16.msra.mxu0 0
        %2493 = vmatpush.bf16.msra.mxu0 %v2478
        %2494 = vmatpush.bf16.msra.mxu0 %v2476
        %2495 = vmatmul.bf16.gmra.mxu0 %v2482
        %v2496 = vpop.f32.mrf.mxu0
        %v2497 = vadd.f32 0.0, %v2496
        %v2498 = vpop.f32.mrf.mxu0
        %v2499 = vadd.f32 0.0, %v2498
        %2500 = vmatmul.bf16.gmra.mxu0 %v2485
        %v2501 = vpop.f32.mrf.mxu0
        %v2502 = vadd.f32 0.0, %v2501
        %v2503 = vpop.f32.mrf.mxu0
        %v2504 = vadd.f32 0.0, %v2503
        %2505 = vdwg.mxu0
        %2510 = vrot.lane.b32.xlu0 %v2497, 16
        %v2511 = vpop.permute.xlu0 %2510
        %2512 = vrot.lane.b32.xlu0 %v2499, 16
        %v2513 = vpop.permute.xlu0 %2512
        %2514 = vrot.lane.b32.xlu0 %v2502, 16
        %v2515 = vpop.permute.xlu0 %2514
        %2516 = vrot.lane.b32.xlu0 %v2504, 16
        %v2517 = vpop.permute.xlu0 %2516
        %v2522 = vsel %vm1421, %v2377, %v2511
        %v2523 = vsel %vm1421, %v2379, %v2513
        %v2524 = vsel %vm1421, %v2382, %v2515
        %v2525 = vsel %vm1421, %v2384, %v2517
        %v2526 = vpack.c.bf16 %v2523, %v2522
        %v2527 = vpack.c.bf16 %v2525, %v2524
        %s2528 = scalar_lea.vmem %s8, 16
        %v2529 = vld [vmem:[%s2528] sm:$0xf]
        %v2530 = vld [vmem:[%s2528 + $0x4] sm:$0xf]
        %v2531 = vld [vmem:[%s2528 + $0x8] sm:$0xf]
        %v2532 = vld [vmem:[%s2528 + $0xc] sm:$0xf]
        %s2533 = scalar_lea.vmem %s9, 1
        %v2534 = vld [vmem:[%s2533] sm:$0x1]
        %v2536 = vperm.slane %v2534, 0
        %v2542 = vunpack.c.l.b16 %v2529
        %v2543 = vunpack.c.l.b16 %v2530
        %v2544 = vunpack.c.l.b16 %v2531
        %v2545 = vunpack.c.l.b16 %v2532
        %v2546 = vpack.c.b16 %v2543, %v2542
        %v2547 = vpack.c.b16 %v2545, %v2544
        %v2551 = vsel %vm1242, %v2526, 0
        %v2554 = vsel %vm1242, %v2527, 0
        %2556 = vmatpush.bf16.msra.mxu0 0
        %2557 = vmatpush.bf16.msra.mxu0 0
        %2558 = vmatpush.bf16.msra.mxu0 0
        %2559 = vmatpush.bf16.msra.mxu0 0
        %2560 = vmatpush.bf16.msra.mxu0 0
        %2561 = vmatpush.bf16.msra.mxu0 0
        %2562 = vmatpush.bf16.msra.mxu0 %v2547
        %2563 = vmatpush.bf16.msra.mxu0 %v2546
        %2564 = vmatmul.bf16.gmra.mxu0 %v2551
        %v2565 = vpop.f32.mrf.mxu0
        %v2566 = vadd.f32 %v2536, %v2565
        %v2567 = vpop.f32.mrf.mxu0
        %v2568 = vadd.f32 %v2536, %v2567
        %2569 = vmatmul.bf16.gmra.mxu0 %v2554
        %v2570 = vpop.f32.mrf.mxu0
        %v2571 = vadd.f32 %v2536, %v2570
        %v2572 = vpop.f32.mrf.mxu0
        %v2573 = vadd.f32 %v2536, %v2572
        %2574 = vdwg.mxu0
        %v2575 = vadd.f32 %v2566, %v2112
        %v2576 = vadd.f32 %v2568, %v2113
        %v2577 = vadd.f32 %v2571, %v2114
        %v2578 = vadd.f32 %v2573, %v2115
        %s2579 = scalar_lea.vmem %s10, 1
        %v2580 = vld [vmem:[%s2579] sm:$0x1]
        %s2581 = scalar_lea.vmem %s11, 1
        %v2582 = vld [vmem:[%s2581] sm:$0x1]
        %v2583 = vsel %vm1242, %v2575, 0.0
        %2584 = vadd.xlane.f32.xlu0 %v2583
        %v2585 = vpop.xlane.xlu0 %2584
        %v2586 = vsel %vm1242, %v2576, 0.0
        %2587 = vadd.xlane.f32.xlu0 %v2586
        %v2588 = vpop.xlane.xlu0 %2587
        %v2589 = vsel %vm1242, %v2577, 0.0
        %2590 = vadd.xlane.f32.xlu0 %v2589
        %v2591 = vpop.xlane.xlu0 %2590
        %v2592 = vsel %vm1242, %v2578, 0.0
        %2593 = vadd.xlane.f32.xlu0 %v2592
        %v2594 = vpop.xlane.xlu0 %2593
        %v2595 = vmul.f32 %v2585, %v1279
        %v2596 = vmul.f32 %v2588, %v1279
        %v2597 = vmul.f32 %v2591, %v1279
        %v2598 = vmul.f32 %v2594, %v1279
        %v2599 = vsub.f32 %v2575, %v2595
        %v2600 = vsub.f32 %v2576, %v2596
        %v2601 = vsub.f32 %v2577, %v2597
        %v2602 = vsub.f32 %v2578, %v2598
        %v2603 = vmul.f32 %v2599, %v2599
        %v2604 = vmul.f32 %v2600, %v2600
        %v2605 = vmul.f32 %v2601, %v2601
        %v2606 = vmul.f32 %v2602, %v2602
        %v2607 = vsel %vm1242, %v2603, 0.0
        %2608 = vadd.xlane.f32.xlu0 %v2607
        %v2609 = vpop.xlane.xlu0 %2608
        %v2610 = vsel %vm1242, %v2604, 0.0
        %2611 = vadd.xlane.f32.xlu0 %v2610
        %v2612 = vpop.xlane.xlu0 %2611
        %v2613 = vsel %vm1242, %v2605, 0.0
        %2614 = vadd.xlane.f32.xlu0 %v2613
        %v2615 = vpop.xlane.xlu0 %2614
        %v2616 = vsel %vm1242, %v2606, 0.0
        %2617 = vadd.xlane.f32.xlu0 %v2616
        %v2618 = vpop.xlane.xlu0 %2617
        %v2619 = vmul.f32 %v2609, %v1279
        %v2620 = vmul.f32 %v2612, %v1279
        %v2621 = vmul.f32 %v2615, %v1279
        %v2622 = vmul.f32 %v2618, %v1279
        %v2623 = vadd.f32 %v2619, 1e-05
        %v2624 = vadd.f32 %v2620, 1e-05
        %v2625 = vadd.f32 %v2621, 1e-05
        %v2626 = vadd.f32 %v2622, 1e-05
        %v2627 = vrsqrt.pop %v2623
        %v2628 = vmul.f32 %v2627, %v2623
        %v2629 = vmul.f32 %v2628, %v2627
        %v2630 = vmul.f32 0.5, %v2629
        %v2631 = vsub.f32 1.5, %v2630
        %v2632 = vmul.f32 %v2627, %v2631
        %vm2633 = vweird.f32 %v2623
        %vm2634 = vweird.f32 %v2627
        %vm2635 = vmor %vm2633, %vm2634
        %v2636 = vsel %vm2635, %v2627, %v2632
        %v2637 = vrsqrt.pop %v2624
        %v2638 = vmul.f32 %v2637, %v2624
        %v2639 = vmul.f32 %v2638, %v2637
        %v2640 = vmul.f32 0.5, %v2639
        %v2641 = vsub.f32 1.5, %v2640
        %v2642 = vmul.f32 %v2637, %v2641
        %vm2643 = vweird.f32 %v2624
        %vm2644 = vweird.f32 %v2637
        %vm2645 = vmor %vm2643, %vm2644
        %v2646 = vsel %vm2645, %v2637, %v2642
        %v2647 = vrsqrt.pop %v2625
        %v2648 = vmul.f32 %v2647, %v2625
        %v2649 = vmul.f32 %v2648, %v2647
        %v2650 = vmul.f32 0.5, %v2649
        %v2651 = vsub.f32 1.5, %v2650
        %v2652 = vmul.f32 %v2647, %v2651
        %vm2653 = vweird.f32 %v2625
        %vm2654 = vweird.f32 %v2647
        %vm2655 = vmor %vm2653, %vm2654
        %v2656 = vsel %vm2655, %v2647, %v2652
        %v2657 = vrsqrt.pop %v2626
        %v2658 = vmul.f32 %v2657, %v2626
        %v2659 = vmul.f32 %v2658, %v2657
        %v2660 = vmul.f32 0.5, %v2659
        %v2661 = vsub.f32 1.5, %v2660
        %v2662 = vmul.f32 %v2657, %v2661
        %vm2663 = vweird.f32 %v2626
        %vm2664 = vweird.f32 %v2657
        %vm2665 = vmor %vm2663, %vm2664
        %v2666 = vsel %vm2665, %v2657, %v2662
        %v2667 = vmul.f32 %v2599, %v2636
        %v2668 = vmul.f32 %v2600, %v2646
        %v2669 = vmul.f32 %v2601, %v2656
        %v2670 = vmul.f32 %v2602, %v2666
        %v2672 = vperm.slane %v2580, 0
        %v2674 = vmul.f32 %v2667, %v2672
        %v2675 = vmul.f32 %v2668, %v2672
        %v2676 = vmul.f32 %v2669, %v2672
        %v2677 = vmul.f32 %v2670, %v2672
        %v2679 = vperm.slane %v2582, 0
        %v2681 = vadd.f32 %v2674, %v2679
        %v2682 = vadd.f32 %v2675, %v2679
        %v2683 = vadd.f32 %v2676, %v2679
        %v2684 = vadd.f32 %v2677, %v2679
        %v2685 = vpack.c.bf16 %v2682, %v2681
        %v2686 = vpack.c.bf16 %v2684, %v2683
        %s2687 = scalar_lea.vmem %s12, 16
        %v2688 = vld [vmem:[%s2687] sm:$0xf]
        %v2689 = vld [vmem:[%s2687 + $0x4] sm:$0xf]
        %v2690 = vld [vmem:[%s2687 + $0x8] sm:$0xf]
        %v2691 = vld [vmem:[%s2687 + $0xc] sm:$0xf]
        %s2692 = scalar_lea.vmem %s13, 1
        %v2693 = vld [vmem:[%s2692] sm:$0x1]
        %v2695 = vperm.slane %v2693, 0
        %v2701 = vunpack.c.l.b16 %v2688
        %v2702 = vunpack.c.l.b16 %v2689
        %v2703 = vunpack.c.l.b16 %v2690
        %v2704 = vunpack.c.l.b16 %v2691
        %v2705 = vpack.c.b16 %v2702, %v2701
        %v2706 = vpack.c.b16 %v2704, %v2703
        %v2710 = vsel %vm1242, %v2685, 0
        %v2713 = vsel %vm1242, %v2686, 0
        %2715 = vmatpush.bf16.msra.mxu0 0
        %2716 = vmatpush.bf16.msra.mxu0 0
        %2717 = vmatpush.bf16.msra.mxu0 0
        %2718 = vmatpush.bf16.msra.mxu0 0
        %2719 = vmatpush.bf16.msra.mxu0 0
        %2720 = vmatpush.bf16.msra.mxu0 0
        %2721 = vmatpush.bf16.msra.mxu0 %v2706
        %2722 = vmatpush.bf16.msra.mxu0 %v2705
        %2723 = vmatmul.bf16.gmra.mxu0 %v2710
        %v2724 = vpop.f32.mrf.mxu0
        %v2725 = vadd.f32 %v2695, %v2724
        %v2726 = vpop.f32.mrf.mxu0
        %v2727 = vadd.f32 %v2695, %v2726
        %2728 = vmatmul.bf16.gmra.mxu0 %v2713
        %v2729 = vpop.f32.mrf.mxu0
        %v2730 = vadd.f32 %v2695, %v2729
        %v2731 = vpop.f32.mrf.mxu0
        %v2732 = vadd.f32 %v2695, %v2731
        %2733 = vdwg.mxu0
        %v2734 = vmul.f32 %v2725, 0.5
        %v2735 = vmul.f32 %v2727, 0.5
        %v2736 = vmul.f32 %v2730, 0.5
        %v2737 = vmul.f32 %v2732, 0.5
        %v2738 = vmul.f32 %v2725, 0.70710677
        %v2739 = vmul.f32 %v2727, 0.70710677
        %v2740 = vmul.f32 %v2730, 0.70710677
        %v2741 = vmul.f32 %v2732, 0.70710677
        %v2742 = vmax.f32 %v2738, -4.0
        %v2743 = vmax.f32 %v2739, -4.0
        %v2744 = vmax.f32 %v2740, -4.0
        %v2745 = vmax.f32 %v2741, -4.0
        %v2746 = vmin.f32 %v2742, 4.0
        %v2747 = vmin.f32 %v2743, 4.0
        %v2748 = vmin.f32 %v2744, 4.0
        %v2749 = vmin.f32 %v2745, 4.0
        %v2750 = vmul.f32 %v2746, %v2746
        %v2751 = vmul.f32 %v2747, %v2747
        %v2752 = vmul.f32 %v2748, %v2748
        %v2753 = vmul.f32 %v2749, %v2749
        %v2754 = vmul.f32 %v2750, -2.7261424e-10
        %v2755 = vmul.f32 %v2751, -2.7261424e-10
        %v2756 = vmul.f32 %v2752, -2.7261424e-10
        %v2757 = vmul.f32 %v2753, -2.7261424e-10
        %v2758 = vadd.f32 %v2754, 2.7706815e-08
        %v2759 = vadd.f32 %v2755, 2.7706815e-08
        %v2760 = vadd.f32 %v2756, 2.7706815e-08
        %v2761 = vadd.f32 %v2757, 2.7706815e-08
        %v2762 = vmul.f32 %v2758, %v2750
        %v2763 = vmul.f32 %v2759, %v2751
        %v2764 = vmul.f32 %v2760, %v2752
        %v2765 = vmul.f32 %v2761, %v2753
        %v2766 = vadd.f32 %v2762, -2.101024e-06
        %v2767 = vadd.f32 %v2763, -2.101024e-06
        %v2768 = vadd.f32 %v2764, -2.101024e-06
        %v2769 = vadd.f32 %v2765, -2.101024e-06
        %v2770 = vmul.f32 %v2766, %v2750
        %v2771 = vmul.f32 %v2767, %v2751
        %v2772 = vmul.f32 %v2768, %v2752
        %v2773 = vmul.f32 %v2769, %v2753
        %v2774 = vadd.f32 %v2770, -5.6925062e-05
        %v2775 = vadd.f32 %v2771, -5.6925062e-05
        %v2776 = vadd.f32 %v2772, -5.6925062e-05
        %v2777 = vadd.f32 %v2773, -5.6925062e-05
        %v2778 = vmul.f32 %v2774, %v2750
        %v2779 = vmul.f32 %v2775, %v2751
        %v2780 = vmul.f32 %v2776, %v2752
        %v2781 = vmul.f32 %v2777, %v2753
        %v2782 = vadd.f32 %v2778, -0.00073499064
        %v2783 = vadd.f32 %v2779, -0.00073499064
        %v2784 = vadd.f32 %v2780, -0.00073499064
        %v2785 = vadd.f32 %v2781, -0.00073499064
        %v2786 = vmul.f32 %v2782, %v2750
        %v2787 = vmul.f32 %v2783, %v2751
        %v2788 = vmul.f32 %v2784, %v2752
        %v2789 = vmul.f32 %v2785, %v2753
        %v2790 = vadd.f32 %v2786, -0.0029546
        %v2791 = vadd.f32 %v2787, -0.0029546
        %v2792 = vadd.f32 %v2788, -0.0029546
        %v2793 = vadd.f32 %v2789, -0.0029546
        %v2794 = vmul.f32 %v2790, %v2750
        %v2795 = vmul.f32 %v2791, %v2751
        %v2796 = vmul.f32 %v2792, %v2752
        %v2797 = vmul.f32 %v2793, %v2753
        %v2798 = vadd.f32 %v2794, -0.016096033
        %v2799 = vadd.f32 %v2795, -0.016096033
        %v2800 = vadd.f32 %v2796, -0.016096033
        %v2801 = vadd.f32 %v2797, -0.016096033
        %v2802 = vmul.f32 %v2798, %v2746
        %v2803 = vmul.f32 %v2799, %v2747
        %v2804 = vmul.f32 %v2800, %v2748
        %v2805 = vmul.f32 %v2801, %v2749
        %v2806 = vmul.f32 %v2750, -1.45660715e-05
        %v2807 = vmul.f32 %v2751, -1.45660715e-05
        %v2808 = vmul.f32 %v2752, -1.45660715e-05
        %v2809 = vmul.f32 %v2753, -1.45660715e-05
        %v2810 = vadd.f32 %v2806, -0.00021337405
        %v2811 = vadd.f32 %v2807, -0.00021337405
        %v2812 = vadd.f32 %v2808, -0.00021337405
        %v2813 = vadd.f32 %v2809, -0.00021337405
        %v2814 = vmul.f32 %v2810, %v2750
        %v2815 = vmul.f32 %v2811, %v2751
        %v2816 = vmul.f32 %v2812, %v2752
        %v2817 = vmul.f32 %v2813, %v2753
        %v2818 = vadd.f32 %v2814, -0.001682827
        %v2819 = vadd.f32 %v2815, -0.001682827
        %v2820 = vadd.f32 %v2816, -0.001682827
        %v2821 = vadd.f32 %v2817, -0.001682827
        %v2822 = vmul.f32 %v2818, %v2750
        %v2823 = vmul.f32 %v2819, %v2751
        %v2824 = vmul.f32 %v2820, %v2752
        %v2825 = vmul.f32 %v2821, %v2753
        %v2826 = vadd.f32 %v2822, -0.0073733293
        %v2827 = vadd.f32 %v2823, -0.0073733293
        %v2828 = vadd.f32 %v2824, -0.0073733293
        %v2829 = vadd.f32 %v2825, -0.0073733293
        %v2830 = vmul.f32 %v2826, %v2750
        %v2831 = vmul.f32 %v2827, %v2751
        %v2832 = vmul.f32 %v2828, %v2752
        %v2833 = vmul.f32 %v2829, %v2753
        %v2834 = vadd.f32 %v2830, -0.014264739
        %v2835 = vadd.f32 %v2831, -0.014264739
        %v2836 = vadd.f32 %v2832, -0.014264739
        %v2837 = vadd.f32 %v2833, -0.014264739
        %v2838 = vrcp.pop %v2834
        %v2839 = vmul.f32 %v2834, %v2838
        %v2840 = vsub.f32 1.0, %v2839
        %v2841 = vmul.f32 %v2838, %v2840
        %v2842 = vadd.f32 %v2838, %v2841
        %vm2843 = vweird.f32 %v2834
        %vm2844 = vweird.f32 %v2838
        %vm2845 = vmor %vm2843, %vm2844
        %v2846 = vsel %vm2845, %v2838, %v2842
        %v2847 = vand.u32 2147483647, %v2834
        %vm2848 = vcmp.eq.f32.partialorder %v2847, 8.507059e+37
        %v2849 = vand.u32 %v2834, 2147483648
        %v2850 = vor.u32 1.1754944e-38, %v2849
        %v2851 = vsel %vm2848, %v2850, %v2846
        %v2852 = vmul.f32 %v2802, %v2851
        %v2853 = vrcp.pop %v2835
        %v2854 = vmul.f32 %v2835, %v2853
        %v2855 = vsub.f32 1.0, %v2854
        %v2856 = vmul.f32 %v2853, %v2855
        %v2857 = vadd.f32 %v2853, %v2856
        %vm2858 = vweird.f32 %v2835
        %vm2859 = vweird.f32 %v2853
        %vm2860 = vmor %vm2858, %vm2859
        %v2861 = vsel %vm2860, %v2853, %v2857
        %v2862 = vand.u32 2147483647, %v2835
        %vm2863 = vcmp.eq.f32.partialorder %v2862, 8.507059e+37
        %v2864 = vand.u32 %v2835, 2147483648
        %v2865 = vor.u32 1.1754944e-38, %v2864
        %v2866 = vsel %vm2863, %v2865, %v2861
        %v2867 = vmul.f32 %v2803, %v2866
        %v2868 = vrcp.pop %v2836
        %v2869 = vmul.f32 %v2836, %v2868
        %v2870 = vsub.f32 1.0, %v2869
        %v2871 = vmul.f32 %v2868, %v2870
        %v2872 = vadd.f32 %v2868, %v2871
        %vm2873 = vweird.f32 %v2836
        %vm2874 = vweird.f32 %v2868
        %vm2875 = vmor %vm2873, %vm2874
        %v2876 = vsel %vm2875, %v2868, %v2872
        %v2877 = vand.u32 2147483647, %v2836
        %vm2878 = vcmp.eq.f32.partialorder %v2877, 8.507059e+37
        %v2879 = vand.u32 %v2836, 2147483648
        %v2880 = vor.u32 1.1754944e-38, %v2879
        %v2881 = vsel %vm2878, %v2880, %v2876
        %v2882 = vmul.f32 %v2804, %v2881
        %v2883 = vrcp.pop %v2837
        %v2884 = vmul.f32 %v2837, %v2883
        %v2885 = vsub.f32 1.0, %v2884
        %v2886 = vmul.f32 %v2883, %v2885
        %v2887 = vadd.f32 %v2883, %v2886
        %vm2888 = vweird.f32 %v2837
        %vm2889 = vweird.f32 %v2883
        %vm2890 = vmor %vm2888, %vm2889
        %v2891 = vsel %vm2890, %v2883, %v2887
        %v2892 = vand.u32 2147483647, %v2837
        %vm2893 = vcmp.eq.f32.partialorder %v2892, 8.507059e+37
        %v2894 = vand.u32 %v2837, 2147483648
        %v2895 = vor.u32 1.1754944e-38, %v2894
        %v2896 = vsel %vm2893, %v2895, %v2891
        %v2897 = vmul.f32 %v2805, %v2896
        %v2898 = vadd.f32 %v2852, 1.0
        %v2899 = vadd.f32 %v2867, 1.0
        %v2900 = vadd.f32 %v2882, 1.0
        %v2901 = vadd.f32 %v2897, 1.0
        %v2902 = vmul.f32 %v2734, %v2898
        %v2903 = vmul.f32 %v2735, %v2899
        %v2904 = vmul.f32 %v2736, %v2900
        %v2905 = vmul.f32 %v2737, %v2901
        %v2906 = vpack.c.bf16 %v2903, %v2902
        %v2907 = vpack.c.bf16 %v2905, %v2904
        %s2908 = scalar_lea.vmem %s14, 32
        %v2909 = vld [vmem:[%s2908] sm:$0xf]
        %v2910 = vld [vmem:[%s2908 + $0x4] sm:$0xf]
        %v2911 = vld [vmem:[%s2908 + $0x8] sm:$0xf]
        %v2912 = vld [vmem:[%s2908 + $0xc] sm:$0xf]
        %v2913 = vld [vmem:[%s2908 + $0x10] sm:$0xf]
        %v2914 = vld [vmem:[%s2908 + $0x14] sm:$0xf]
        %v2915 = vld [vmem:[%s2908 + $0x18] sm:$0xf]
        %v2916 = vld [vmem:[%s2908 + $0x1c] sm:$0xf]
        %s2917 = scalar_lea.vmem %s15, 1
        %v2918 = vld [vmem:[%s2917] sm:$0x1]
        %v2920 = vperm.slane %v2918, 0
        %v2930 = vunpack.c.l.b16 %v2909
        %v2931 = vunpack.c.l.b16 %v2910
        %v2932 = vunpack.c.l.b16 %v2911
        %v2933 = vunpack.c.l.b16 %v2912
        %v2934 = vunpack.c.l.b16 %v2913
        %v2935 = vunpack.c.l.b16 %v2914
        %v2936 = vunpack.c.l.b16 %v2915
        %v2937 = vunpack.c.l.b16 %v2916
        %v2938 = vpack.c.b16 %v2931, %v2930
        %v2939 = vpack.c.b16 %v2933, %v2932
        %v2940 = vpack.c.b16 %v2935, %v2934
        %v2941 = vpack.c.b16 %v2937, %v2936
        %v2947 = vsel %vm2086, %v2906, 0
        %v2950 = vsel %vm2086, %v2907, 0
        %2952 = vmatpush.bf16.msra.mxu0 0
        %2953 = vmatpush.bf16.msra.mxu0 0
        %2954 = vmatpush.bf16.msra.mxu0 0
        %2955 = vmatpush.bf16.msra.mxu0 0
        %2956 = vmatpush.bf16.msra.mxu0 %v2941
        %2957 = vmatpush.bf16.msra.mxu0 %v2940
        %2958 = vmatpush.bf16.msra.mxu0 %v2939
        %2959 = vmatpush.bf16.msra.mxu0 %v2938
        %2960 = vmatmul.bf16.gmra.mxu0 %v2947
        %v2961 = vpop.f32.mrf.mxu0
        %v2962 = vadd.f32 %v2920, %v2961
        %v2963 = vpop.f32.mrf.mxu0
        %v2964 = vadd.f32 %v2920, %v2963
        %2965 = vmatmul.bf16.gmra.mxu0 %v2950
        %v2966 = vpop.f32.mrf.mxu0
        %v2967 = vadd.f32 %v2920, %v2966
        %v2968 = vpop.f32.mrf.mxu0
        %v2969 = vadd.f32 %v2920, %v2968
        %2970 = vdwg.mxu0
        %v2971 = vadd.f32 %v2962, %v2575
        %v2972 = vadd.f32 %v2964, %v2576
        %v2973 = vadd.f32 %v2967, %v2577
        %v2974 = vadd.f32 %v2969, %v2578
        %v2975 = vsel %vm1242, %v2971, -inf
        %v2976 = vsel %vm1242, %v2972, -inf
        %v2977 = vsel %vm1242, %v2973, -inf
        %v2978 = vsel %vm1242, %v2974, -inf
        %v2979 = vmax.f32 %v2975, %v2976
        %v2980 = vmax.f32 %v2977, %v2978
        %v2981 = vmax.f32 %v2979, %v2980
        %v2982 = vrot.slane %v2981, 4
        %v2983 = vmax.f32 %v2981, %v2982
        %v2984 = vrot.slane %v2983, 2
        %v2985 = vmax.f32 %v2983, %v2984
        %v2986 = vrot.slane %v2985, 1
        %v2987 = vmax.f32 %v2985, %v2986
        %v2988 = vld [vmem:[%s16] sm:$0x1]
        %v2989 = vld [vmem:[%s17] sm:$0x1]
        %v2990 = vsel %vm1242, %v2987, 0.0
        %2991 = vadd.xlane.f32.xlu0 %v2990
        %v2992 = vpop.xlane.xlu0 %2991
        %v2993 = vmul.f32 %v2992, %v1279
        %v2994 = vsub.f32 %v2987, %v2993
        %v2995 = vmul.f32 %v2994, %v2994
        %v2996 = vsel %vm1242, %v2995, 0.0
        %2997 = vadd.xlane.f32.xlu0 %v2996
        %v2998 = vpop.xlane.xlu0 %2997
        %v2999 = vmul.f32 %v2998, %v1279
        %v3000 = vadd.f32 %v2999, 1e-05
        %v3001 = vrsqrt.pop %v3000
        %v3002 = vmul.f32 %v3001, %v3000
        %v3003 = vmul.f32 %v3002, %v3001
        %v3004 = vmul.f32 0.5, %v3003
        %v3005 = vsub.f32 1.5, %v3004
        %v3006 = vmul.f32 %v3001, %v3005
        %vm3007 = vweird.f32 %v3000
        %vm3008 = vweird.f32 %v3001
        %vm3009 = vmor %vm3007, %vm3008
        %v3010 = vsel %vm3009, %v3001, %v3006
        %v3011 = vmul.f32 %v2994, %v3010
        %v3012 = vmul.f32 %v3011, %v2988
        %v3013 = vadd.f32 %v3012, %v2989
        %v3014 = vpack.c.bf16 %v3013, %v3013
        %v3015 = vld [vmem:[%s18] sm:$0xf]
        %v3016 = vld [vmem:[%s18 + $0x4] sm:$0xf]
        %v3017 = vld [vmem:[%s18 + $0x8] sm:$0xf]
        %v3018 = vld [vmem:[%s18 + $0xc] sm:$0xf]
        %v3019 = vld [vmem:[%s19] sm:$0x1]
        %v3024 = vunpack.c.l.b16 %v3015
        %v3025 = vunpack.c.l.b16 %v3016
        %v3026 = vunpack.c.l.b16 %v3017
        %v3027 = vunpack.c.l.b16 %v3018
        %v3028 = vpack.c.b16 %v3025, %v3024
        %v3029 = vpack.c.b16 %v3027, %v3026
        %v3033 = vsel %vm1242, %v3014, 0
        %3035 = vmatpush.bf16.msra.mxu0 0
        %3036 = vmatpush.bf16.msra.mxu0 0
        %3037 = vmatpush.bf16.msra.mxu0 0
        %3038 = vmatpush.bf16.msra.mxu0 0
        %3039 = vmatpush.bf16.msra.mxu0 0
        %3040 = vmatpush.bf16.msra.mxu0 0
        %3041 = vmatpush.bf16.msra.mxu0 %v3029
        %3042 = vmatpush.bf16.msra.mxu0 %v3028
        %3043 = vmatmul.bf16.gmra.mxu0 %v3033
        %v3044 = vpop.f32.mrf.mxu0
        %v3045 = vadd.f32 %v3019, %v3044
        %v3046 = vpop.f32.mrf.mxu0
        %3047 = vdwg.mxu0
        %v3048 = vmul.f32 %v3045, 0.5
        %v3049 = vmul.f32 %v3045, 0.70710677
        %v3050 = vmax.f32 %v3049, -4.0
        %v3051 = vmin.f32 %v3050, 4.0
        %v3052 = vmul.f32 %v3051, %v3051
        %v3053 = vmul.f32 %v3052, -2.7261424e-10
        %v3054 = vadd.f32 %v3053, 2.7706815e-08
        %v3055 = vmul.f32 %v3054, %v3052
        %v3056 = vadd.f32 %v3055, -2.101024e-06
        %v3057 = vmul.f32 %v3056, %v3052
        %v3058 = vadd.f32 %v3057, -5.6925062e-05
        %v3059 = vmul.f32 %v3058, %v3052
        %v3060 = vadd.f32 %v3059, -0.00073499064
        %v3061 = vmul.f32 %v3060, %v3052
        %v3062 = vadd.f32 %v3061, -0.0029546
        %v3063 = vmul.f32 %v3062, %v3052
        %v3064 = vadd.f32 %v3063, -0.016096033
        %v3065 = vmul.f32 %v3064, %v3051
        %v3066 = vmul.f32 %v3052, -1.45660715e-05
        %v3067 = vadd.f32 %v3066, -0.00021337405
        %v3068 = vmul.f32 %v3067, %v3052
        %v3069 = vadd.f32 %v3068, -0.001682827
        %v3070 = vmul.f32 %v3069, %v3052
        %v3071 = vadd.f32 %v3070, -0.0073733293
        %v3072 = vmul.f32 %v3071, %v3052
        %v3073 = vadd.f32 %v3072, -0.014264739
        %v3074 = vrcp.pop %v3073
        %v3075 = vmul.f32 %v3073, %v3074
        %v3076 = vsub.f32 1.0, %v3075
        %v3077 = vmul.f32 %v3074, %v3076
        %v3078 = vadd.f32 %v3074, %v3077
        %vm3079 = vweird.f32 %v3073
        %vm3080 = vweird.f32 %v3074
        %vm3081 = vmor %vm3079, %vm3080
        %v3082 = vsel %vm3081, %v3074, %v3078
        %v3083 = vand.u32 2147483647, %v3073
        %vm3084 = vcmp.eq.f32.partialorder %v3083, 8.507059e+37
        %v3085 = vand.u32 %v3073, 2147483648
        %v3086 = vor.u32 1.1754944e-38, %v3085
        %v3087 = vsel %vm3084, %v3086, %v3082
        %v3088 = vmul.f32 %v3065, %v3087
        %v3089 = vadd.f32 %v3088, 1.0
        %v3090 = vmul.f32 %v3048, %v3089
        %v3091 = vpack.c.bf16 %v3090, %v3090
        %v3092 = vld [vmem:[%s20] sm:$0xf]
        %v3093 = vld [vmem:[%s20 + $0x4] sm:$0xf]
        %v3094 = vld [vmem:[%s20 + $0x8] sm:$0xf]
        %v3095 = vld [vmem:[%s20 + $0xc] sm:$0xf]
        %v3096 = vld [vmem:[%s20 + $0x10] sm:$0xf]
        %v3097 = vld [vmem:[%s20 + $0x14] sm:$0xf]
        %v3098 = vld [vmem:[%s20 + $0x18] sm:$0xf]
        %v3099 = vld [vmem:[%s20 + $0x1c] sm:$0xf]
        %v3100 = vld [vmem:[%s21] sm:$0x1]
        %v3109 = vunpack.c.l.b16 %v3092
        %v3110 = vunpack.c.l.b16 %v3093
        %v3111 = vunpack.c.l.b16 %v3094
        %v3112 = vunpack.c.l.b16 %v3095
        %v3113 = vunpack.c.l.b16 %v3096
        %v3114 = vunpack.c.l.b16 %v3097
        %v3115 = vunpack.c.l.b16 %v3098
        %v3116 = vunpack.c.l.b16 %v3099
        %v3117 = vpack.c.b16 %v3110, %v3109
        %v3118 = vpack.c.b16 %v3112, %v3111
        %v3119 = vpack.c.b16 %v3114, %v3113
        %v3120 = vpack.c.b16 %v3116, %v3115
        %v3126 = vsel %vm2086, %v3091, 0
        %3128 = vmatpush.bf16.msra.mxu0 0
        %3129 = vmatpush.bf16.msra.mxu0 0
        %3130 = vmatpush.bf16.msra.mxu0 0
        %3131 = vmatpush.bf16.msra.mxu0 0
        %3132 = vmatpush.bf16.msra.mxu0 %v3120
        %3133 = vmatpush.bf16.msra.mxu0 %v3119
        %3134 = vmatpush.bf16.msra.mxu0 %v3118
        %3135 = vmatpush.bf16.msra.mxu0 %v3117
        %3136 = vmatmul.bf16.gmra.mxu0 %v3126
        %v3137 = vpop.f32.mrf.mxu0
        %v3138 = vadd.f32 %v3100, %v3137
        %v3139 = vpop.f32.mrf.mxu0
        %3140 = vdwg.mxu0
        %3141 = vst [vmem:[%s748] sm:$0x1] %v3138
        %s3142 = sand.u32 %s522, 1
        %s3143 = scalar_lea.sflag [#allocation3], %s3142
        %s3144 = sand.u32 %s522, 1
        %s3145 = scalar_lea.vmem [#allocation2], %s3144
        %s3146 = sand.u32 %s42, 1
        %s3147 = scalar_lea.sflag [#allocation5], %s3146
        %s3148 = sand.u32 %s548, 1
        %s3149 = smul.addr %s3148, 32
        %s3150 = scalar_lea.vmem [#allocation4], %s3149
        %s3151 = sand.u32 %s42, 1
        %s3152 = scalar_lea.sflag [#allocation5], %s3151
        %s3153 = sand.u32 %s574, 1
        %s3154 = smul.addr %s3153, 32
        %s3155 = scalar_lea.vmem [#allocation6], %s3154
        // Predicated region
        $region109: #{_lambda_.1} parent=107 // pred_check
          %p3156 = pneg %p532
        $region110: #{_lambda_.1} parent=107 // pred_check_branch
          %3158 = sbr.rel (%p3156) target = $region112
        $region111: #{_lambda_.1} parent=107 // pred_region
          %3160 = vsyncadd %s3143, 0
          %s3161 = scalar_lea.hbm %s22, %s42
          %s3163 = sshll.u32 %s3145, 4
          %s3164 = int_to_ptr.vmem [resolvable:$true] %s3163
          %s3165 = sshll.u32 %s3161, 4
          %s3166 = int_to_ptr.hbm [resolvable:$true] %s3165
          %3168 = dma.vmem_to_hbm [thread:$0]  %s3164, 16, %s3166, %s3143
        $region112: #{_lambda_.1} parent=107 // pred_fallthru
          _
        // Predicated region
        $region113: #{_lambda_.1} parent=107 // pred_check
          %p3169 = pneg %p558
        $region114: #{_lambda_.1} parent=107 // pred_check_branch
          %3171 = sbr.rel (%p3169) target = $region116
        $region115: #{_lambda_.1} parent=107 // pred_region
          %3173 = vsyncadd %s3147, 0
          %s3174 = smul.addr %s42, 4
          %s3175 = smul.addr %s3174, 8
          %s3176 = scalar_lea.hbm %s23, %s3175
          %s3177 = sshll.u32 %s3150, 4
          %s3178 = int_to_ptr.vmem [resolvable:$true] %s3177
          %s3179 = sshll.u32 %s3176, 4
          %s3180 = int_to_ptr.hbm [resolvable:$true] %s3179
          %3185 = dma.vmem_to_hbm [thread:$0]  %s3178, 512, %s3180, %s3147, 128, 128, 8
        $region116: #{_lambda_.1} parent=107 // pred_fallthru
          _
        // Predicated region
        $region117: #{_lambda_.1} parent=107 // pred_check
          %p3186 = pneg %p584
        $region118: #{_lambda_.1} parent=107 // pred_check_branch
          %3188 = sbr.rel (%p3186) target = $region120
        $region119: #{_lambda_.1} parent=107 // pred_region
          %3190 = vsyncadd %s3152, 0
          %s3191 = smul.addr %s42, 4
          %s3192 = smul.addr %s3191, 8
          %s3193 = scalar_lea.hbm %s24, %s3192
          %s3194 = sshll.u32 %s3155, 4
          %s3195 = int_to_ptr.vmem [resolvable:$true] %s3194
          %s3196 = sshll.u32 %s3193, 4
          %s3197 = int_to_ptr.hbm [resolvable:$true] %s3196
          %3202 = dma.vmem_to_hbm [thread:$0]  %s3195, 512, %s3197, %s3152, 128, 128, 8
        $region120: #{_lambda_.1} parent=107 // pred_fallthru
          _
      $region108: #{_lambda_.1} parent=5 // pred_fallthru
        _
      %p3203 = scmp.le.s32.totalorder 2, %s37
      // Predicated region
      $region121: #{_lambda_.1} parent=5 // pred_check
        %p3204 = pneg %p3203
      $region122: #{_lambda_.1} parent=5 // pred_check_branch
        %3206 = sbr.rel (%p3204) target = $region124
      $region123: #{_lambda_.1} parent=5 // pred_region
        %s3207 = ssub.s32 %s37, 2
        // Predicated region
        $region125: #{_lambda_.1} parent=123 // pred_check
          %p3208 = pneg %p538
        $region126: #{_lambda_.1} parent=123 // pred_check_branch
          %3210 = sbr.rel (%p3208) target = $region128
        $region127: #{_lambda_.1} parent=123 // pred_region
          %s3211 = sand.u32 %s523, 1
          %s3212 = scalar_lea.sflag [#allocation3], %s3211
          %s3213 = sand.u32 %s523, 1
          %s3214 = scalar_lea.vmem [#allocation2], %s3213
          %3216 = dma.done %s3212, 16
        $region128: #{_lambda_.1} parent=123 // pred_fallthru
          _
        // Predicated region
        $region129: #{_lambda_.1} parent=123 // pred_check
          %p3217 = pneg %p564
        $region130: #{_lambda_.1} parent=123 // pred_check_branch
          %3219 = sbr.rel (%p3217) target = $region132
        $region131: #{_lambda_.1} parent=123 // pred_region
          %s3220 = sand.u32 %s43, 1
          %s3221 = scalar_lea.sflag [#allocation5], %s3220
          %s3222 = sand.u32 %s549, 1
          %s3223 = smul.addr %s3222, 32
          %s3224 = scalar_lea.vmem [#allocation4], %s3223
          %3226 = dma.done %s3221, 512
        $region132: #{_lambda_.1} parent=123 // pred_fallthru
          _
        // Predicated region
        $region133: #{_lambda_.1} parent=123 // pred_check
          %p3227 = pneg %p590
        $region134: #{_lambda_.1} parent=123 // pred_check_branch
          %3229 = sbr.rel (%p3227) target = $region136
        $region135: #{_lambda_.1} parent=123 // pred_region
          %s3230 = sand.u32 %s43, 1
          %s3231 = scalar_lea.sflag [#allocation5], %s3230
          %s3232 = sand.u32 %s575, 1
          %s3233 = smul.addr %s3232, 32
          %s3234 = scalar_lea.vmem [#allocation6], %s3233
          %3236 = dma.done %s3231, 512
        $region136: #{_lambda_.1} parent=123 // pred_fallthru
          _
      $region124: #{_lambda_.1} parent=5 // pred_fallthru
        _
    $region6: #{_lambda_.1} parent=1 // loop_footer
      %s41 = sadd.s32 1, %s37
    $region7: #{_lambda_.1} parent=1 // loop_footer_branch
      %36 = sbr.rel target = $region3
    $region8: #{_lambda_.1} parent=1 // loop_exit
      _
    %3237 = vsyncpa [#allocation3], 1
    %s3238 = scalar_lea.sflag [#allocation3], 1
    %3239 = vsyncpa %s3238, 1
    %3240 = vsyncpa [#allocation5], 1
    %s3241 = scalar_lea.sflag [#allocation5], 1
    %3242 = vsyncpa %s3241, 1

</llo_original>
